<compile_context>
chip_gen: v7x
topology: tpu7x:2x2x1
jax: 0.10.0
libtpu: 0.0.40
codegen_flags: <defaults>
</compile_context>

<pallas_src>
import functools

import jax
import jax.numpy as jnp
from jax import lax
from jax.experimental import pallas as pl
from jax.experimental.pallas import tpu as pltpu

NUM_CLASSES = 8
IN_CHANNELS = 10
EPS = 1e-5
BLOCK_CHANNELS = [(IN_CHANNELS, 64), (64, 128), (128, 256), (256, 128)]
SHRINK_PER_BLOCK = 3                                   # conv(k=3, valid): -2, maxpool(2, s=1): -1
TOTAL_SHRINK = SHRINK_PER_BLOCK * len(BLOCK_CHANNELS)  # 12


def _conv_block(xb, w_ref, shift_ref):
    """Conv1d(k=3, stride=1, valid) + folded(bias+BN) + ReLU + MaxPool1d(2, 1), bf16.

    xb:        (Cin, n)      bf16 activations (channels x flattened batch*length)
    w_ref:     (Cout, 3*Cin) bf16 -- taps stacked along K, BN scale pre-folded
    shift_ref: (Cout, 1)     bf16 -- (conv_bias - running_mean) * scale + beta
    returns    (Cout, n - 3) bf16
    """
    n = xb.shape[1]
    nc = n - 2                                          # conv 'valid' output length
    # Build the 3 shifted tap windows directly in bf16 (no f32 copies) and stack them along
    # sublanes so the whole conv is one K = 3*Cin MXU matmul with f32 accumulation.
    xs = jnp.concatenate([xb[:, 0:nc], xb[:, 1:nc + 1], xb[:, 2:nc + 2]], axis=0)
    y = jnp.dot(w_ref[...], xs, preferred_element_type=jnp.float32)     # (Cout, nc) f32 accum
    # Cast the accumulator once, then do shift/ReLU/MaxPool in bf16 (halves VALU + VMEM).
    y = jnp.maximum(y.astype(jnp.bfloat16) + shift_ref[...], 0.0)
    # MaxPool1d(kernel=2, stride=1).
    # TODO(synk): could use pltpu.roll to keep widths lane-constant; overlapping slices kept
    # here to preserve the validated shrink-by-3 bookkeeping.
    return jnp.maximum(y[:, :nc - 1], y[:, 1:nc])


def _vmem_limit_bytes(bt, L):
    """Rough per-step live-set estimate with 2x headroom, clamped to sane bounds."""
    n = bt * L
    live = (3 * 256 * n * 2      # widest stacked conv operand xs (bf16)
            + 256 * n * 4        # f32 MXU accumulator
            + 256 * n * 2        # bf16 activation
            + 2 * 16 * n * 2     # double-buffered bf16 input block
            + n * bt * 2)        # in-kernel bf16 mean mask
    est = 2 * live + (2 << 20)   # weights (~0.5 MiB) + compiler temporaries
    # TODO(synk): on v7x (64 MiB physical VMEM) choose bt so this stays <= ~56 MiB.
    return int(min(max(est, 32 << 20), 120 << 20))


@functools.partial(jax.jit, static_argnames=("bt",))
def audio_cnn_pool(x, folded_params, *, bt=8):
    """x: (B, 10, L) float32 -> (B, NUM_CLASSES) float32 (BatchNorm in eval mode)."""
    B, cin, L = x.shape
    assert cin == IN_CHANNELS and L > TOTAL_SHRINK
    assert B % bt == 0, "batch must be divisible by the per-step batch tile"
    N = bt * L                                          # lane width per grid step
    assert N % 128 == 0, "bt*L must be a multiple of 128 for lane-aligned input blocks"
    Lv = L - TOTAL_SHRINK                               # valid output length per sample
    cin_p = folded_params["blocks"][0][0].shape[1] // 3  # padded input channels (10 -> 16)

    # Layout plumbing (fused into this jit): channels on sublanes, batch flattened into
    # lanes, single bf16 cast so every in-kernel window build stays bf16.
    x_p = jnp.pad(x, ((0, 0), (0, cin_p - cin), (0, 0)))
    x_cl = jnp.transpose(x_p, (1, 0, 2)).reshape(cin_p, B * L).astype(jnp.bfloat16)

    # Fold 1/Lv into the f32 classifier weight so the in-kernel mean mask is exact 0/1 bf16.
    w_lin = folded_params["w_lin"] * jnp.float32(1.0 / Lv)     # (8, 128) f32
    b_lin = folded_params["b_lin"]                             # (8, 1)   f32

    def kernel(x_ref, w0, t0, w1, t1, w2, t2, w3, t3, wl_ref, bl_ref, out_ref):
        h = x_ref[...]                                  # (cin_p, N) bf16
        h = _conv_block(h, w0, t0)                      # (64,  N - 3)
        h = _conv_block(h, w1, t1)                      # (128, N - 6)
        h = _conv_block(h, w2, t2)                      # (256, N - 9)
        h = _conv_block(h, w3, t3)                      # (128, N - 12)
        # Per-sample temporal sum over valid columns: 0/1 bf16 mask generated from iota
        # (column c valid for sample s iff s*L <= c < s*L + Lv); cross-sample conv/pool
        # bleed and invalid tails get weight 0.  1/Lv already folded into wl_ref.
        nv = N - TOTAL_SHRINK
        cols = lax.broadcasted_iota(jnp.int32, (nv, bt), 0)
        samp = lax.broadcasted_iota(jnp.int32, (nv, bt), 1)
        pos = cols - samp * L
        mask = jnp.where((pos >= 0) & (pos < Lv), 1.0, 0.0).astype(jnp.bfloat16)
        sums = jnp.dot(h, mask, preferred_element_type=jnp.float32)          # (128, bt)
        logits = jnp.dot(wl_ref[...], sums,
                         preferred_element_type=jnp.float32) + bl_ref[...]   # (8, bt)
        out_ref[...] = logits                           # (classes, bt) -- no in-kernel transpose

    def const_spec(arr):
        return pl.BlockSpec(arr.shape, lambda i: (0, 0))

    flat = [x_cl]
    in_specs = [pl.BlockSpec((cin_p, N), lambda i: (0, i))]
    for (w, t) in folded_params["blocks"]:
        flat += [w, t]
        in_specs += [const_spec(w), const_spec(t)]
    flat += [w_lin, b_lin]
    in_specs += [const_spec(w_lin), const_spec(b_lin)]

    out = pl.pallas_call(
        kernel,
        out_shape=jax.ShapeDtypeStruct((B // bt, NUM_CLASSES, bt), jnp.float32),
        grid_spec=pltpu.PrefetchScalarGridSpec(
            num_scalar_prefetch=0,
            grid=(B // bt,),
            in_specs=in_specs,
            # Leading step dim squeezed; last dim == bt so the store is lane-dense for
            # production bt (>=128) and always satisfies the block-shape constraints.
            out_specs=pl.BlockSpec((None, NUM_CLASSES, bt), lambda i: (i, 0, 0)),
        ),
        compiler_params=pltpu.CompilerParams(
            dimension_semantics=("parallel",),
            vmem_limit_bytes=_vmem_limit_bytes(bt, L)),
    )(*flat)
    # (B//bt, classes, bt) -> (B, classes): tiny relayout, fused into this jit.
    return jnp.transpose(out, (0, 2, 1)).reshape(B, NUM_CLASSES)


def init_raw_params(key):
    """Deterministic synthetic parameters matching the PyTorch module shapes."""
    keys = jax.random.split(key, 32)
    ki = 0
    blocks = []
    for cin, cout in BLOCK_CHANNELS:
        w = jax.random.normal(keys[ki], (cout, cin, 3), jnp.float32) / jnp.sqrt(cin * 3.0); ki += 1
        b = 0.05 * jax.random.normal(keys[ki], (cout,), jnp.float32); ki += 1
        gamma = 1.0 + 0.1 * jax.random.normal(keys[ki], (cout,), jnp.float32); ki += 1
        beta = 0.05 * jax.random.normal(keys[ki], (cout,), jnp.float32); ki += 1
        rmean = 0.1 * jax.random.normal(keys[ki], (cout,), jnp.float32); ki += 1
        rvar = 1.0 + 0.2 * jnp.abs(jax.random.normal(keys[ki], (cout,), jnp.float32)); ki += 1
        blocks.append((w, b, gamma, beta, rmean, rvar))
    w_lin = jax.random.normal(keys[ki], (NUM_CLASSES, 128), jnp.float32) / jnp.sqrt(128.0); ki += 1
    b_lin = 0.05 * jax.random.normal(keys[ki], (NUM_CLASSES,), jnp.float32); ki += 1
    return {"blocks": blocks, "w_lin": w_lin, "b_lin": b_lin}


def fold_params(raw):
    """Fold conv bias + BN (eval) into weights/shift; stack taps along K; cast to bf16."""
    blocks = []
    first = True
    for (w, b, gamma, beta, rmean, rvar) in raw["blocks"]:
        scale = gamma / jnp.sqrt(rvar + EPS)                  # (Cout,)
        shift = (b - rmean) * scale + beta                    # (Cout,)
        wf = w * scale[:, None, None]                         # BN scale folded into conv weight
        if first:
            cout, cin, _k = wf.shape
            cin_p = -(-cin // 8) * 8                          # 10 -> 16: sublane-aligned tap stacking
            if cin_p != cin:
                wf = jnp.pad(wf, ((0, 0), (0, cin_p - cin), (0, 0)))
            first = False
        # (Cout, 3*Cin): tap-major blocks of Cin, matching the in-kernel window stacking order.
        w_stk = jnp.concatenate([wf[:, :, 0], wf[:, :, 1], wf[:, :, 2]], axis=1)
        blocks.append((w_stk.astype(jnp.bfloat16), shift[:, None].astype(jnp.bfloat16)))
    return {"blocks": blocks,
            "w_lin": raw["w_lin"].astype(jnp.float32),           # (8, 128)
            "b_lin": raw["b_lin"][:, None].astype(jnp.float32)}  # (8, 1)


def reference_forward(x, raw):
    """Pure-JAX reference mirroring the PyTorch forward (BN in eval mode)."""
    h = x
    for (w, b, gamma, beta, rmean, rvar) in raw["blocks"]:
        h = lax.conv_general_dilated(h, w, window_strides=(1,), padding="VALID",
                                     dimension_numbers=("NCH", "OIH", "NCH"))
        h = h + b[None, :, None]
        h = (h - rmean[None, :, None]) / jnp.sqrt(rvar[None, :, None] + EPS)
        h = h * gamma[None, :, None] + beta[None, :, None]
        h = jnp.maximum(h, 0.0)
        h = jnp.maximum(h[:, :, :-1], h[:, :, 1:])            # MaxPool1d(2, stride=1)
    m = h.mean(axis=-1)                                       # (B, 128)
    return m @ raw["w_lin"].T + raw["b_lin"][None, :]


if __name__ == "__main__":
    key = jax.random.PRNGKey(0)
    k_param, k_x = jax.random.split(key)
    # Small demo: bt=8 -> 512-lane slab per grid step, grid = 2 keeps both v7x TCs busy.
    B, L, bt = 16, 64, 8
    x = jax.random.normal(k_x, (B, IN_CHANNELS, L), jnp.float32)

    raw = init_raw_params(k_param)
    folded = fold_params(raw)

    out = jax.block_until_ready(audio_cnn_pool(x, folded, bt=bt))
    ref = jax.block_until_ready(reference_forward(x, raw))

    assert out.shape == (B, NUM_CLASSES)
    # bf16 MXU operands + bf16 elementwise (f32 accumulation) across 4 stacked conv blocks.
    assert jnp.allclose(out, ref, atol=7.5e-2, rtol=7.5e-2), (out, ref)

    print("KERNEL_OK")
</pallas_src>

<mosaic_0001>
module attributes {stable_mosaic.version = 11 : i64} {
  func.func @kernel(%arg0: i32, %arg1: memref<16x512xbf16, #tpu.memory_space<vmem>>, %arg2: memref<64x48xbf16, #tpu.memory_space<vmem>>, %arg3: memref<64x1xbf16, #tpu.memory_space<vmem>>, %arg4: memref<128x192xbf16, #tpu.memory_space<vmem>>, %arg5: memref<128x1xbf16, #tpu.memory_space<vmem>>, %arg6: memref<256x384xbf16, #tpu.memory_space<vmem>>, %arg7: memref<256x1xbf16, #tpu.memory_space<vmem>>, %arg8: memref<128x768xbf16, #tpu.memory_space<vmem>>, %arg9: memref<128x1xbf16, #tpu.memory_space<vmem>>, %arg10: memref<8x128xf32, #tpu.memory_space<vmem>>, %arg11: memref<8x1xf32, #tpu.memory_space<vmem>>, %arg12: memref<1x8x8xf32, #tpu.memory_space<vmem>>) attributes {dimension_semantics = [#tpu.dimension_semantics<parallel>], iteration_bounds = array<i64: 2>, scalar_prefetch = 0 : i64, scratch_operands = 0 : i64, tpu.core_type = #tpu.core_type<tc>, window_params = [{transform_indices = @transform_0, window_bounds = array<i64: 16, 512>}, {pipeline_mode = #tpu.pipeline_mode<synchronous>, transform_indices = @transform_1, window_bounds = array<i64: 64, 48>}, {pipeline_mode = #tpu.pipeline_mode<synchronous>, transform_indices = @transform_2, window_bounds = array<i64: 64, 1>}, {pipeline_mode = #tpu.pipeline_mode<synchronous>, transform_indices = @transform_3, window_bounds = array<i64: 128, 192>}, {pipeline_mode = #tpu.pipeline_mode<synchronous>, transform_indices = @transform_4, window_bounds = array<i64: 128, 1>}, {pipeline_mode = #tpu.pipeline_mode<synchronous>, transform_indices = @transform_5, window_bounds = array<i64: 256, 384>}, {pipeline_mode = #tpu.pipeline_mode<synchronous>, transform_indices = @transform_6, window_bounds = array<i64: 256, 1>}, {pipeline_mode = #tpu.pipeline_mode<synchronous>, transform_indices = @transform_7, window_bounds = array<i64: 128, 768>}, {pipeline_mode = #tpu.pipeline_mode<synchronous>, transform_indices = @transform_8, window_bounds = array<i64: 128, 1>}, {pipeline_mode = #tpu.pipeline_mode<synchronous>, transform_indices = @transform_9, window_bounds = array<i64: 8, 128>}, {pipeline_mode = #tpu.pipeline_mode<synchronous>, transform_indices = @transform_10, window_bounds = array<i64: 8, 1>}, {transform_indices = @transform_11, window_bounds = array<i64: 1, 8, 8>}]} {
    %c0 = arith.constant 0 : index
    %c0_0 = arith.constant 0 : index
    %0 = vector.load %arg1[%c0, %c0_0] : memref<16x512xbf16, #tpu.memory_space<vmem>>, vector<16x512xbf16>
    %1 = vector.extract_strided_slice %0 {offsets = [0, 0], sizes = [16, 510], strides = [1, 1]} : vector<16x512xbf16> to vector<16x510xbf16>
    %2 = vector.extract_strided_slice %0 {offsets = [0, 1], sizes = [16, 510], strides = [1, 1]} : vector<16x512xbf16> to vector<16x510xbf16>
    %3 = vector.extract_strided_slice %0 {offsets = [0, 2], sizes = [16, 510], strides = [1, 1]} : vector<16x512xbf16> to vector<16x510xbf16>
    %4 = tpu.concatenate %1, %2, %3 in 0 : vector<16x510xbf16>, vector<16x510xbf16>, vector<16x510xbf16> -> vector<48x510xbf16>
    %c0_1 = arith.constant 0 : index
    %c0_2 = arith.constant 0 : index
    %5 = vector.load %arg2[%c0_1, %c0_2] : memref<64x48xbf16, #tpu.memory_space<vmem>>, vector<64x48xbf16>
    %cst = arith.constant dense<0.000000e+00> : vector<64x510xf32>
    %6 = tpu.matmul %5, %4, %cst {dimension_numbers = #tpu.dot_dimension_numbers<[1], [0], [0], [1], [0, 0, 1, 1], [], []>} : vector<64x48xbf16>, vector<48x510xbf16>, vector<64x510xf32> -> vector<64x510xf32>
    %7 = arith.truncf %6 : vector<64x510xf32> to vector<64x510xbf16>
    %c0_3 = arith.constant 0 : index
    %c0_4 = arith.constant 0 : index
    %8 = vector.load %arg3[%c0_3, %c0_4] : memref<64x1xbf16, #tpu.memory_space<vmem>>, vector<64x1xbf16>
    %9 = vector.broadcast %8 : vector<64x1xbf16> to vector<64x510xbf16>
    %10 = arith.addf %7, %9 : vector<64x510xbf16>
    %cst_5 = arith.constant 0.000000e+00 : bf16
    %11 = vector.broadcast %cst_5 : bf16 to vector<64x510xbf16>
    %12 = arith.maximumf %10, %11 : vector<64x510xbf16>
    %13 = vector.extract_strided_slice %12 {offsets = [0, 0], sizes = [64, 509], strides = [1, 1]} : vector<64x510xbf16> to vector<64x509xbf16>
    %14 = vector.extract_strided_slice %12 {offsets = [0, 1], sizes = [64, 509], strides = [1, 1]} : vector<64x510xbf16> to vector<64x509xbf16>
    %15 = arith.maximumf %13, %14 : vector<64x509xbf16>
    %16 = vector.extract_strided_slice %15 {offsets = [0, 0], sizes = [64, 507], strides = [1, 1]} : vector<64x509xbf16> to vector<64x507xbf16>
    %17 = vector.extract_strided_slice %15 {offsets = [0, 1], sizes = [64, 507], strides = [1, 1]} : vector<64x509xbf16> to vector<64x507xbf16>
    %18 = vector.extract_strided_slice %15 {offsets = [0, 2], sizes = [64, 507], strides = [1, 1]} : vector<64x509xbf16> to vector<64x507xbf16>
    %19 = tpu.concatenate %16, %17, %18 in 0 : vector<64x507xbf16>, vector<64x507xbf16>, vector<64x507xbf16> -> vector<192x507xbf16>
    %c0_6 = arith.constant 0 : index
    %c0_7 = arith.constant 0 : index
    %20 = vector.load %arg4[%c0_6, %c0_7] : memref<128x192xbf16, #tpu.memory_space<vmem>>, vector<128x192xbf16>
    %cst_8 = arith.constant dense<0.000000e+00> : vector<128x507xf32>
    %21 = tpu.matmul %20, %19, %cst_8 {dimension_numbers = #tpu.dot_dimension_numbers<[1], [0], [0], [1], [0, 0, 1, 1], [], []>} : vector<128x192xbf16>, vector<192x507xbf16>, vector<128x507xf32> -> vector<128x507xf32>
    %22 = arith.truncf %21 : vector<128x507xf32> to vector<128x507xbf16>
    %c0_9 = arith.constant 0 : index
    %c0_10 = arith.constant 0 : index
    %23 = vector.load %arg5[%c0_9, %c0_10] : memref<128x1xbf16, #tpu.memory_space<vmem>>, vector<128x1xbf16>
    %24 = vector.broadcast %23 : vector<128x1xbf16> to vector<128x507xbf16>
    %25 = arith.addf %22, %24 : vector<128x507xbf16>
    %cst_11 = arith.constant 0.000000e+00 : bf16
    %26 = vector.broadcast %cst_11 : bf16 to vector<128x507xbf16>
    %27 = arith.maximumf %25, %26 : vector<128x507xbf16>
    %28 = vector.extract_strided_slice %27 {offsets = [0, 0], sizes = [128, 506], strides = [1, 1]} : vector<128x507xbf16> to vector<128x506xbf16>
    %29 = vector.extract_strided_slice %27 {offsets = [0, 1], sizes = [128, 506], strides = [1, 1]} : vector<128x507xbf16> to vector<128x506xbf16>
    %30 = arith.maximumf %28, %29 : vector<128x506xbf16>
    %31 = vector.extract_strided_slice %30 {offsets = [0, 0], sizes = [128, 504], strides = [1, 1]} : vector<128x506xbf16> to vector<128x504xbf16>
    %32 = vector.extract_strided_slice %30 {offsets = [0, 1], sizes = [128, 504], strides = [1, 1]} : vector<128x506xbf16> to vector<128x504xbf16>
    %33 = vector.extract_strided_slice %30 {offsets = [0, 2], sizes = [128, 504], strides = [1, 1]} : vector<128x506xbf16> to vector<128x504xbf16>
    %34 = tpu.concatenate %31, %32, %33 in 0 : vector<128x504xbf16>, vector<128x504xbf16>, vector<128x504xbf16> -> vector<384x504xbf16>
    %c0_12 = arith.constant 0 : index
    %c0_13 = arith.constant 0 : index
    %35 = vector.load %arg6[%c0_12, %c0_13] : memref<256x384xbf16, #tpu.memory_space<vmem>>, vector<256x384xbf16>
    %cst_14 = arith.constant dense<0.000000e+00> : vector<256x504xf32>
    %36 = tpu.matmul %35, %34, %cst_14 {dimension_numbers = #tpu.dot_dimension_numbers<[1], [0], [0], [1], [0, 0, 1, 1], [], []>} : vector<256x384xbf16>, vector<384x504xbf16>, vector<256x504xf32> -> vector<256x504xf32>
    %37 = arith.truncf %36 : vector<256x504xf32> to vector<256x504xbf16>
    %c0_15 = arith.constant 0 : index
    %c0_16 = arith.constant 0 : index
    %38 = vector.load %arg7[%c0_15, %c0_16] : memref<256x1xbf16, #tpu.memory_space<vmem>>, vector<256x1xbf16>
    %39 = vector.broadcast %38 : vector<256x1xbf16> to vector<256x504xbf16>
    %40 = arith.addf %37, %39 : vector<256x504xbf16>
    %cst_17 = arith.constant 0.000000e+00 : bf16
    %41 = vector.broadcast %cst_17 : bf16 to vector<256x504xbf16>
    %42 = arith.maximumf %40, %41 : vector<256x504xbf16>
    %43 = vector.extract_strided_slice %42 {offsets = [0, 0], sizes = [256, 503], strides = [1, 1]} : vector<256x504xbf16> to vector<256x503xbf16>
    %44 = vector.extract_strided_slice %42 {offsets = [0, 1], sizes = [256, 503], strides = [1, 1]} : vector<256x504xbf16> to vector<256x503xbf16>
    %45 = arith.maximumf %43, %44 : vector<256x503xbf16>
    %46 = vector.extract_strided_slice %45 {offsets = [0, 0], sizes = [256, 501], strides = [1, 1]} : vector<256x503xbf16> to vector<256x501xbf16>
    %47 = vector.extract_strided_slice %45 {offsets = [0, 1], sizes = [256, 501], strides = [1, 1]} : vector<256x503xbf16> to vector<256x501xbf16>
    %48 = vector.extract_strided_slice %45 {offsets = [0, 2], sizes = [256, 501], strides = [1, 1]} : vector<256x503xbf16> to vector<256x501xbf16>
    %49 = tpu.concatenate %46, %47, %48 in 0 : vector<256x501xbf16>, vector<256x501xbf16>, vector<256x501xbf16> -> vector<768x501xbf16>
    %c0_18 = arith.constant 0 : index
    %c0_19 = arith.constant 0 : index
    %50 = vector.load %arg8[%c0_18, %c0_19] : memref<128x768xbf16, #tpu.memory_space<vmem>>, vector<128x768xbf16>
    %cst_20 = arith.constant dense<0.000000e+00> : vector<128x501xf32>
    %51 = tpu.matmul %50, %49, %cst_20 {dimension_numbers = #tpu.dot_dimension_numbers<[1], [0], [0], [1], [0, 0, 1, 1], [], []>} : vector<128x768xbf16>, vector<768x501xbf16>, vector<128x501xf32> -> vector<128x501xf32>
    %52 = arith.truncf %51 : vector<128x501xf32> to vector<128x501xbf16>
    %c0_21 = arith.constant 0 : index
    %c0_22 = arith.constant 0 : index
    %53 = vector.load %arg9[%c0_21, %c0_22] : memref<128x1xbf16, #tpu.memory_space<vmem>>, vector<128x1xbf16>
    %54 = vector.broadcast %53 : vector<128x1xbf16> to vector<128x501xbf16>
    %55 = arith.addf %52, %54 : vector<128x501xbf16>
    %cst_23 = arith.constant 0.000000e+00 : bf16
    %56 = vector.broadcast %cst_23 : bf16 to vector<128x501xbf16>
    %57 = arith.maximumf %55, %56 : vector<128x501xbf16>
    %58 = vector.extract_strided_slice %57 {offsets = [0, 0], sizes = [128, 500], strides = [1, 1]} : vector<128x501xbf16> to vector<128x500xbf16>
    %59 = vector.extract_strided_slice %57 {offsets = [0, 1], sizes = [128, 500], strides = [1, 1]} : vector<128x501xbf16> to vector<128x500xbf16>
    %60 = arith.maximumf %58, %59 : vector<128x500xbf16>
    %61 = tpu.iota {dimensions = array<i32: 0>} : vector<500x8xi32>
    %62 = tpu.iota {dimensions = array<i32: 1>} : vector<500x8xi32>
    %c64_i32 = arith.constant 64 : i32
    %63 = vector.broadcast %c64_i32 : i32 to vector<500x8xi32>
    %64 = arith.muli %62, %63 : vector<500x8xi32>
    %65 = arith.subi %61, %64 : vector<500x8xi32>
    %c0_i32 = arith.constant 0 : i32
    %66 = vector.broadcast %c0_i32 : i32 to vector<500x8xi32>
    %67 = arith.cmpi sge, %65, %66 : vector<500x8xi32>
    %c52_i32 = arith.constant 52 : i32
    %68 = vector.broadcast %c52_i32 : i32 to vector<500x8xi32>
    %69 = arith.cmpi slt, %65, %68 : vector<500x8xi32>
    %70 = arith.andi %67, %69 : vector<500x8xi1>
    %cst_24 = arith.constant 1.000000e+00 : f32
    %cst_25 = arith.constant 0.000000e+00 : f32
    %71 = vector.broadcast %cst_24 : f32 to vector<500x8xf32>
    %72 = vector.broadcast %cst_25 : f32 to vector<500x8xf32>
    %73 = arith.select %70, %71, %72 : vector<500x8xi1>, vector<500x8xf32>
    %74 = arith.truncf %73 : vector<500x8xf32> to vector<500x8xbf16>
    %cst_26 = arith.constant dense<0.000000e+00> : vector<128x8xf32>
    %75 = tpu.matmul %60, %74, %cst_26 {dimension_numbers = #tpu.dot_dimension_numbers<[1], [0], [0], [1], [0, 0, 1, 1], [], []>} : vector<128x500xbf16>, vector<500x8xbf16>, vector<128x8xf32> -> vector<128x8xf32>
    %c0_27 = arith.constant 0 : index
    %c0_28 = arith.constant 0 : index
    %76 = vector.load %arg10[%c0_27, %c0_28] : memref<8x128xf32, #tpu.memory_space<vmem>>, vector<8x128xf32>
    %cst_29 = arith.constant dense<0.000000e+00> : vector<8x8xf32>
    %77 = tpu.matmul %76, %75, %cst_29 {dimension_numbers = #tpu.dot_dimension_numbers<[1], [0], [0], [1], [0, 0, 1, 1], [], []>} : vector<8x128xf32>, vector<128x8xf32>, vector<8x8xf32> -> vector<8x8xf32>
    %c0_30 = arith.constant 0 : index
    %c0_31 = arith.constant 0 : index
    %78 = vector.load %arg11[%c0_30, %c0_31] : memref<8x1xf32, #tpu.memory_space<vmem>>, vector<8x1xf32>
    %79 = vector.broadcast %78 : vector<8x1xf32> to vector<8x8xf32>
    %80 = arith.addf %77, %79 : vector<8x8xf32>
    %c0_32 = arith.constant 0 : index
    %c0_33 = arith.constant 0 : index
    %c0_34 = arith.constant 0 : index
    %81 = vector.load %arg12[%c0_32, %c0_33, %c0_34] : memref<1x8x8xf32, #tpu.memory_space<vmem>>, vector<1x8x8xf32>
    %82 = vector.shape_cast %81 : vector<1x8x8xf32> to vector<8x8xf32>
    %83 = vector.shape_cast %80 : vector<8x8xf32> to vector<1x8x8xf32>
    tpu.vector_store %arg12[%c0_32, %c0_33, %c0_34], %83 {strides = array<i32>} : memref<1x8x8xf32, #tpu.memory_space<vmem>>, vector<1x8x8xf32>,
    return
  }
  func.func @transform_0(%arg0: i32) -> (i32, i32) {
    %c0_i32 = arith.constant 0 : i32
    %c0_i32_0 = arith.constant 0 : i32
    return %c0_i32, %arg0 : i32, i32
  }
  func.func @transform_1(%arg0: i32) -> (i32, i32) {
    %c0_i32 = arith.constant 0 : i32
    %c0_i32_0 = arith.constant 0 : i32
    %c0_i32_1 = arith.constant 0 : i32
    return %c0_i32, %c0_i32_0 : i32, i32
  }
  func.func @transform_2(%arg0: i32) -> (i32, i32) {
    %c0_i32 = arith.constant 0 : i32
    %c0_i32_0 = arith.constant 0 : i32
    %c0_i32_1 = arith.constant 0 : i32
    return %c0_i32, %c0_i32_0 : i32, i32
  }
  func.func @transform_3(%arg0: i32) -> (i32, i32) {
    %c0_i32 = arith.constant 0 : i32
    %c0_i32_0 = arith.constant 0 : i32
    %c0_i32_1 = arith.constant 0 : i32
    return %c0_i32, %c0_i32_0 : i32, i32
  }
  func.func @transform_4(%arg0: i32) -> (i32, i32) {
    %c0_i32 = arith.constant 0 : i32
    %c0_i32_0 = arith.constant 0 : i32
    %c0_i32_1 = arith.constant 0 : i32
    return %c0_i32, %c0_i32_0 : i32, i32
  }
  func.func @transform_5(%arg0: i32) -> (i32, i32) {
    %c0_i32 = arith.constant 0 : i32
    %c0_i32_0 = arith.constant 0 : i32
    %c0_i32_1 = arith.constant 0 : i32
    return %c0_i32, %c0_i32_0 : i32, i32
  }
  func.func @transform_6(%arg0: i32) -> (i32, i32) {
    %c0_i32 = arith.constant 0 : i32
    %c0_i32_0 = arith.constant 0 : i32
    %c0_i32_1 = arith.constant 0 : i32
    return %c0_i32, %c0_i32_0 : i32, i32
  }
  func.func @transform_7(%arg0: i32) -> (i32, i32) {
    %c0_i32 = arith.constant 0 : i32
    %c0_i32_0 = arith.constant 0 : i32
    %c0_i32_1 = arith.constant 0 : i32
    return %c0_i32, %c0_i32_0 : i32, i32
  }
  func.func @transform_8(%arg0: i32) -> (i32, i32) {
    %c0_i32 = arith.constant 0 : i32
    %c0_i32_0 = arith.constant 0 : i32
    %c0_i32_1 = arith.constant 0 : i32
    return %c0_i32, %c0_i32_0 : i32, i32
  }
  func.func @transform_9(%arg0: i32) -> (i32, i32) {
    %c0_i32 = arith.constant 0 : i32
    %c0_i32_0 = arith.constant 0 : i32
    %c0_i32_1 = arith.constant 0 : i32
    return %c0_i32, %c0_i32_0 : i32, i32
  }
  func.func @transform_10(%arg0: i32) -> (i32, i32) {
    %c0_i32 = arith.constant 0 : i32
    %c0_i32_0 = arith.constant 0 : i32
    %c0_i32_1 = arith.constant 0 : i32
    return %c0_i32, %c0_i32_0 : i32, i32
  }
  func.func @transform_11(%arg0: i32) -> (i32, i32, i32) {
    %c0_i32 = arith.constant 0 : i32
    %c0_i32_0 = arith.constant 0 : i32
    %c0_i32_1 = arith.constant 0 : i32
    return %arg0, %c0_i32, %c0_i32_0 : i32, i32, i32
  }
}

</mosaic_0001>

<llo_original>
// kernel: audio_cnn_pool.1
$region0: #{audio_cnn_pool.1}
  #allocation0 [shape = 'u32[]', space=smem, size = 0x4, offset = 0x4, fixed_abs, tag = 'smem constant byte address 0x4 - core index']
  #allocation1 [shape = 'u32[144,128]{1,0:T(1,128)}', space=vmem, size = 0x12000, scoped, tag = 'internal scratch']
  %s0 = inlined_call_operand.vmem [shape: bf16[16,1024], index: 0, kind: input, shape index: {}]
  %s1 = inlined_call_operand.vmem [shape: bf16[64,48], index: 1, kind: input, shape index: {}]
  %s2 = inlined_call_operand.vmem [shape: bf16[64,1], index: 2, kind: input, shape index: {}]
  %s3 = inlined_call_operand.vmem [shape: bf16[128,192], index: 3, kind: input, shape index: {}]
  %s4 = inlined_call_operand.vmem [shape: bf16[128,1], index: 4, kind: input, shape index: {}]
  %s5 = inlined_call_operand.vmem [shape: bf16[256,384], index: 5, kind: input, shape index: {}]
  %s6 = inlined_call_operand.vmem [shape: bf16[256,1], index: 6, kind: input, shape index: {}]
  %s7 = inlined_call_operand.vmem [shape: bf16[128,768], index: 7, kind: input, shape index: {}]
  %s8 = inlined_call_operand.vmem [shape: bf16[128,1], index: 8, kind: input, shape index: {}]
  %s9 = inlined_call_operand.vmem [shape: f32[8,128], index: 9, kind: input, shape index: {}]
  %s10 = inlined_call_operand.vmem [shape: f32[8,1], index: 10, kind: input, shape index: {}]
  %s11 = inlined_call_operand.vmem [shape: f32[2,8,8], index: 11, kind: output, shape index: {}]
  %s12 = sld [smem:[#allocation0]]
  $region100: #{audio_cnn_pool.1} parent=0
    _
  %s14 = ssub.s32 1, %s12
  %s15 = scalar_select 0, %s14, %s12
  $region1: #{audio_cnn_pool.1} parent=0
    #allocation2 [shape = 'u8[32768]{0}', space=vmem, size = 0x8000, scoped, tag = 'input window, operand 0']
    loop: start=0, step=1, limit=4
    $region2: #{audio_cnn_pool.1} parent=1 // loop_pre_header
      _
    $region3: #{audio_cnn_pool.1} parent=1 // loop_header
      %s17 = sphi 0, %s21
      %p18 = scmp.ge.s32.totalorder %s17, 4
      %s27 = sphi 0, %s29
      %s30 = sphi 0, %s27
      %s31 = sphi 0, %s30
      %s47 = sphi 0, %s31
      %s51 = sphi 0, %s51
      %s53 = sphi 0, %s51
      %s54 = sphi 0, %s53
      %s68 = sphi 0, %s54
      %s72 = sphi 0, %s72
      %s74 = sphi 0, %s72
      %s75 = sphi 0, %s74
      %s89 = sphi 0, %s75
      %s93 = sphi 0, %s93
      %s95 = sphi 0, %s93
      %s96 = sphi 0, %s95
      %s110 = sphi 0, %s96
      %s114 = sphi 0, %s114
      %s116 = sphi 0, %s114
      %s117 = sphi 0, %s116
      %s131 = sphi 0, %s117
      %s135 = sphi 0, %s135
      %s137 = sphi 0, %s135
      %s138 = sphi 0, %s137
      %s152 = sphi 0, %s138
      %s156 = sphi 0, %s156
      %s158 = sphi 0, %s156
      %s159 = sphi 0, %s158
      %s173 = sphi 0, %s159
      %s177 = sphi 0, %s177
      %s179 = sphi 0, %s177
      %s180 = sphi 0, %s179
      %s194 = sphi 0, %s180
      %s198 = sphi 0, %s198
      %s200 = sphi 0, %s198
      %s201 = sphi 0, %s200
      %s215 = sphi 0, %s201
      %s219 = sphi 0, %s219
      %s221 = sphi 0, %s219
      %s222 = sphi 0, %s221
      %s236 = sphi 0, %s222
      %s240 = sphi 0, %s240
      %s242 = sphi 0, %s240
      %s243 = sphi 0, %s242
      %s257 = sphi 0, %s243
      %s263 = sphi 0, %s265
      %s266 = sphi 0, %s263
      %s267 = sphi 0, %s266
      %s283 = sphi 0, %s267
    $region4: #{audio_cnn_pool.1} parent=1 // loop_header_branch
      %20 = sbr.rel (%p18) target = $region8
    $region5: #{audio_cnn_pool.1} parent=1 // loop_body
      %s22 = ssub.s32 %s17, 1
      %s23 = ssub.s32 %s17, 2
      %s24 = sadd.s32 %s17, 1
      %s25 = ssub.s32 %s17, %s24
      %p26 = scmp.eq.s32.totalorder %s25, 0
      %s28 = sadd.s32 %s27, 1
      %s29 = scalar_select %p26, %s27, %s28
      %p32 = pneg %p26
      %p33 = scmp.eq.s32.totalorder %s17, 1
      %p34 = por %p32, %p33
      %p35 = scmp.ne.s32.totalorder %s27, %s30
      %p36 = scmp.eq.s32.totalorder %s17, 0
      %p37 = por %p35, %p36
      %p38 = scmp.ne.s32.totalorder %s27, %s30
      %p39 = scmp.eq.s32.totalorder %s22, 1
      %p40 = por %p38, %p39
      %p41 = scmp.ne.s32.totalorder %s30, %s31
      %p42 = scmp.eq.s32.totalorder %s22, 0
      %p43 = por %p41, %p42
      %p44 = scmp.ne.s32.totalorder %s30, %s31
      %p45 = scmp.eq.s32.totalorder %s23, 1
      %p46 = por %p44, %p45
      %p48 = scmp.ne.s32.totalorder %s31, %s47
      %p49 = scmp.eq.s32.totalorder %s23, 0
      %p50 = por %p48, %p49
      %s52 = sadd.s32 %s51, 1
      %p55 = scmp.eq.s32.totalorder %s17, 1
      %p56 = scmp.ne.s32.totalorder %s51, %s53
      %p57 = scmp.eq.s32.totalorder %s17, 0
      %p58 = por %p56, %p57
      %p59 = scmp.ne.s32.totalorder %s51, %s53
      %p60 = scmp.eq.s32.totalorder %s22, 1
      %p61 = por %p59, %p60
      %p62 = scmp.ne.s32.totalorder %s53, %s54
      %p63 = scmp.eq.s32.totalorder %s22, 0
      %p64 = por %p62, %p63
      %p65 = scmp.ne.s32.totalorder %s53, %s54
      %p66 = scmp.eq.s32.totalorder %s23, 1
      %p67 = por %p65, %p66
      %p69 = scmp.ne.s32.totalorder %s54, %s68
      %p70 = scmp.eq.s32.totalorder %s23, 0
      %p71 = por %p69, %p70
      %s73 = sadd.s32 %s72, 1
      %p76 = scmp.eq.s32.totalorder %s17, 1
      %p77 = scmp.ne.s32.totalorder %s72, %s74
      %p78 = scmp.eq.s32.totalorder %s17, 0
      %p79 = por %p77, %p78
      %p80 = scmp.ne.s32.totalorder %s72, %s74
      %p81 = scmp.eq.s32.totalorder %s22, 1
      %p82 = por %p80, %p81
      %p83 = scmp.ne.s32.totalorder %s74, %s75
      %p84 = scmp.eq.s32.totalorder %s22, 0
      %p85 = por %p83, %p84
      %p86 = scmp.ne.s32.totalorder %s74, %s75
      %p87 = scmp.eq.s32.totalorder %s23, 1
      %p88 = por %p86, %p87
      %p90 = scmp.ne.s32.totalorder %s75, %s89
      %p91 = scmp.eq.s32.totalorder %s23, 0
      %p92 = por %p90, %p91
      %s94 = sadd.s32 %s93, 1
      %p97 = scmp.eq.s32.totalorder %s17, 1
      %p98 = scmp.ne.s32.totalorder %s93, %s95
      %p99 = scmp.eq.s32.totalorder %s17, 0
      %p100 = por %p98, %p99
      %p101 = scmp.ne.s32.totalorder %s93, %s95
      %p102 = scmp.eq.s32.totalorder %s22, 1
      %p103 = por %p101, %p102
      %p104 = scmp.ne.s32.totalorder %s95, %s96
      %p105 = scmp.eq.s32.totalorder %s22, 0
      %p106 = por %p104, %p105
      %p107 = scmp.ne.s32.totalorder %s95, %s96
      %p108 = scmp.eq.s32.totalorder %s23, 1
      %p109 = por %p107, %p108
      %p111 = scmp.ne.s32.totalorder %s96, %s110
      %p112 = scmp.eq.s32.totalorder %s23, 0
      %p113 = por %p111, %p112
      %s115 = sadd.s32 %s114, 1
      %p118 = scmp.eq.s32.totalorder %s17, 1
      %p119 = scmp.ne.s32.totalorder %s114, %s116
      %p120 = scmp.eq.s32.totalorder %s17, 0
      %p121 = por %p119, %p120
      %p122 = scmp.ne.s32.totalorder %s114, %s116
      %p123 = scmp.eq.s32.totalorder %s22, 1
      %p124 = por %p122, %p123
      %p125 = scmp.ne.s32.totalorder %s116, %s117
      %p126 = scmp.eq.s32.totalorder %s22, 0
      %p127 = por %p125, %p126
      %p128 = scmp.ne.s32.totalorder %s116, %s117
      %p129 = scmp.eq.s32.totalorder %s23, 1
      %p130 = por %p128, %p129
      %p132 = scmp.ne.s32.totalorder %s117, %s131
      %p133 = scmp.eq.s32.totalorder %s23, 0
      %p134 = por %p132, %p133
      %s136 = sadd.s32 %s135, 1
      %p139 = scmp.eq.s32.totalorder %s17, 1
      %p140 = scmp.ne.s32.totalorder %s135, %s137
      %p141 = scmp.eq.s32.totalorder %s17, 0
      %p142 = por %p140, %p141
      %p143 = scmp.ne.s32.totalorder %s135, %s137
      %p144 = scmp.eq.s32.totalorder %s22, 1
      %p145 = por %p143, %p144
      %p146 = scmp.ne.s32.totalorder %s137, %s138
      %p147 = scmp.eq.s32.totalorder %s22, 0
      %p148 = por %p146, %p147
      %p149 = scmp.ne.s32.totalorder %s137, %s138
      %p150 = scmp.eq.s32.totalorder %s23, 1
      %p151 = por %p149, %p150
      %p153 = scmp.ne.s32.totalorder %s138, %s152
      %p154 = scmp.eq.s32.totalorder %s23, 0
      %p155 = por %p153, %p154
      %s157 = sadd.s32 %s156, 1
      %p160 = scmp.eq.s32.totalorder %s17, 1
      %p161 = scmp.ne.s32.totalorder %s156, %s158
      %p162 = scmp.eq.s32.totalorder %s17, 0
      %p163 = por %p161, %p162
      %p164 = scmp.ne.s32.totalorder %s156, %s158
      %p165 = scmp.eq.s32.totalorder %s22, 1
      %p166 = por %p164, %p165
      %p167 = scmp.ne.s32.totalorder %s158, %s159
      %p168 = scmp.eq.s32.totalorder %s22, 0
      %p169 = por %p167, %p168
      %p170 = scmp.ne.s32.totalorder %s158, %s159
      %p171 = scmp.eq.s32.totalorder %s23, 1
      %p172 = por %p170, %p171
      %p174 = scmp.ne.s32.totalorder %s159, %s173
      %p175 = scmp.eq.s32.totalorder %s23, 0
      %p176 = por %p174, %p175
      %s178 = sadd.s32 %s177, 1
      %p181 = scmp.eq.s32.totalorder %s17, 1
      %p182 = scmp.ne.s32.totalorder %s177, %s179
      %p183 = scmp.eq.s32.totalorder %s17, 0
      %p184 = por %p182, %p183
      %p185 = scmp.ne.s32.totalorder %s177, %s179
      %p186 = scmp.eq.s32.totalorder %s22, 1
      %p187 = por %p185, %p186
      %p188 = scmp.ne.s32.totalorder %s179, %s180
      %p189 = scmp.eq.s32.totalorder %s22, 0
      %p190 = por %p188, %p189
      %p191 = scmp.ne.s32.totalorder %s179, %s180
      %p192 = scmp.eq.s32.totalorder %s23, 1
      %p193 = por %p191, %p192
      %p195 = scmp.ne.s32.totalorder %s180, %s194
      %p196 = scmp.eq.s32.totalorder %s23, 0
      %p197 = por %p195, %p196
      %s199 = sadd.s32 %s198, 1
      %p202 = scmp.eq.s32.totalorder %s17, 1
      %p203 = scmp.ne.s32.totalorder %s198, %s200
      %p204 = scmp.eq.s32.totalorder %s17, 0
      %p205 = por %p203, %p204
      %p206 = scmp.ne.s32.totalorder %s198, %s200
      %p207 = scmp.eq.s32.totalorder %s22, 1
      %p208 = por %p206, %p207
      %p209 = scmp.ne.s32.totalorder %s200, %s201
      %p210 = scmp.eq.s32.totalorder %s22, 0
      %p211 = por %p209, %p210
      %p212 = scmp.ne.s32.totalorder %s200, %s201
      %p213 = scmp.eq.s32.totalorder %s23, 1
      %p214 = por %p212, %p213
      %p216 = scmp.ne.s32.totalorder %s201, %s215
      %p217 = scmp.eq.s32.totalorder %s23, 0
      %p218 = por %p216, %p217
      %s220 = sadd.s32 %s219, 1
      %p223 = scmp.eq.s32.totalorder %s17, 1
      %p224 = scmp.ne.s32.totalorder %s219, %s221
      %p225 = scmp.eq.s32.totalorder %s17, 0
      %p226 = por %p224, %p225
      %p227 = scmp.ne.s32.totalorder %s219, %s221
      %p228 = scmp.eq.s32.totalorder %s22, 1
      %p229 = por %p227, %p228
      %p230 = scmp.ne.s32.totalorder %s221, %s222
      %p231 = scmp.eq.s32.totalorder %s22, 0
      %p232 = por %p230, %p231
      %p233 = scmp.ne.s32.totalorder %s221, %s222
      %p234 = scmp.eq.s32.totalorder %s23, 1
      %p235 = por %p233, %p234
      %p237 = scmp.ne.s32.totalorder %s222, %s236
      %p238 = scmp.eq.s32.totalorder %s23, 0
      %p239 = por %p237, %p238
      %s241 = sadd.s32 %s240, 1
      %p244 = scmp.eq.s32.totalorder %s17, 1
      %p245 = scmp.ne.s32.totalorder %s240, %s242
      %p246 = scmp.eq.s32.totalorder %s17, 0
      %p247 = por %p245, %p246
      %p248 = scmp.ne.s32.totalorder %s240, %s242
      %p249 = scmp.eq.s32.totalorder %s22, 1
      %p250 = por %p248, %p249
      %p251 = scmp.ne.s32.totalorder %s242, %s243
      %p252 = scmp.eq.s32.totalorder %s22, 0
      %p253 = por %p251, %p252
      %p254 = scmp.ne.s32.totalorder %s242, %s243
      %p255 = scmp.eq.s32.totalorder %s23, 1
      %p256 = por %p254, %p255
      %p258 = scmp.ne.s32.totalorder %s243, %s257
      %p259 = scmp.eq.s32.totalorder %s23, 0
      %p260 = por %p258, %p259
      %s261 = ssub.s32 %s17, %s24
      %p262 = scmp.eq.s32.totalorder %s261, 0
      %s264 = sadd.s32 %s263, 1
      %s265 = scalar_select %p262, %s263, %s264
      %p268 = pneg %p262
      %p269 = scmp.eq.s32.totalorder %s17, 1
      %p270 = por %p268, %p269
      %p271 = scmp.ne.s32.totalorder %s263, %s266
      %p272 = scmp.eq.s32.totalorder %s17, 0
      %p273 = por %p271, %p272
      %p274 = scmp.ne.s32.totalorder %s263, %s266
      %p275 = scmp.eq.s32.totalorder %s22, 1
      %p276 = por %p274, %p275
      %p277 = scmp.ne.s32.totalorder %s266, %s267
      %p278 = scmp.eq.s32.totalorder %s22, 0
      %p279 = por %p277, %p278
      %p280 = scmp.ne.s32.totalorder %s266, %s267
      %p281 = scmp.eq.s32.totalorder %s23, 1
      %p282 = por %p280, %p281
      %p284 = scmp.ne.s32.totalorder %s267, %s283
      %p285 = scmp.eq.s32.totalorder %s23, 0
      %p286 = por %p284, %p285
      %p287 = scmp.le.s32.totalorder 1, %s17
      %p288 = scmp.lt.s32.totalorder %s17, 3
      %p289 = pnand %p287, %p288
      %p290 = pneg %p289
      // Predicated region
      $region9: #{audio_cnn_pool.1} parent=5 // pred_check
        _
      $region10: #{audio_cnn_pool.1} parent=5 // pred_check_branch
        %292 = sbr.rel (%p289) target = $region12
      $region11: #{audio_cnn_pool.1} parent=5 // pred_region
        %s293 = ssub.s32 %s17, 1
        // Predicated region
        $region13: #{audio_cnn_pool.1} parent=11 // pred_check
          %p294 = pneg %p64
        $region14: #{audio_cnn_pool.1} parent=11 // pred_check_branch
          %296 = sbr.rel (%p294) target = $region16
        $region15: #{audio_cnn_pool.1} parent=11 // pred_region
          _
        $region16: #{audio_cnn_pool.1} parent=11 // pred_fallthru
          _
        // Predicated region
        $region17: #{audio_cnn_pool.1} parent=11 // pred_check
          %p297 = pneg %p85
        $region18: #{audio_cnn_pool.1} parent=11 // pred_check_branch
          %299 = sbr.rel (%p297) target = $region20
        $region19: #{audio_cnn_pool.1} parent=11 // pred_region
          _
        $region20: #{audio_cnn_pool.1} parent=11 // pred_fallthru
          _
        // Predicated region
        $region21: #{audio_cnn_pool.1} parent=11 // pred_check
          %p300 = pneg %p106
        $region22: #{audio_cnn_pool.1} parent=11 // pred_check_branch
          %302 = sbr.rel (%p300) target = $region24
        $region23: #{audio_cnn_pool.1} parent=11 // pred_region
          _
        $region24: #{audio_cnn_pool.1} parent=11 // pred_fallthru
          _
        // Predicated region
        $region25: #{audio_cnn_pool.1} parent=11 // pred_check
          %p303 = pneg %p127
        $region26: #{audio_cnn_pool.1} parent=11 // pred_check_branch
          %305 = sbr.rel (%p303) target = $region28
        $region27: #{audio_cnn_pool.1} parent=11 // pred_region
          _
        $region28: #{audio_cnn_pool.1} parent=11 // pred_fallthru
          _
        // Predicated region
        $region29: #{audio_cnn_pool.1} parent=11 // pred_check
          %p306 = pneg %p148
        $region30: #{audio_cnn_pool.1} parent=11 // pred_check_branch
          %308 = sbr.rel (%p306) target = $region32
        $region31: #{audio_cnn_pool.1} parent=11 // pred_region
          _
        $region32: #{audio_cnn_pool.1} parent=11 // pred_fallthru
          _
        // Predicated region
        $region33: #{audio_cnn_pool.1} parent=11 // pred_check
          %p309 = pneg %p169
        $region34: #{audio_cnn_pool.1} parent=11 // pred_check_branch
          %311 = sbr.rel (%p309) target = $region36
        $region35: #{audio_cnn_pool.1} parent=11 // pred_region
          _
        $region36: #{audio_cnn_pool.1} parent=11 // pred_fallthru
          _
        // Predicated region
        $region37: #{audio_cnn_pool.1} parent=11 // pred_check
          %p312 = pneg %p190
        $region38: #{audio_cnn_pool.1} parent=11 // pred_check_branch
          %314 = sbr.rel (%p312) target = $region40
        $region39: #{audio_cnn_pool.1} parent=11 // pred_region
          _
        $region40: #{audio_cnn_pool.1} parent=11 // pred_fallthru
          _
        // Predicated region
        $region41: #{audio_cnn_pool.1} parent=11 // pred_check
          %p315 = pneg %p211
        $region42: #{audio_cnn_pool.1} parent=11 // pred_check_branch
          %317 = sbr.rel (%p315) target = $region44
        $region43: #{audio_cnn_pool.1} parent=11 // pred_region
          _
        $region44: #{audio_cnn_pool.1} parent=11 // pred_fallthru
          _
        // Predicated region
        $region45: #{audio_cnn_pool.1} parent=11 // pred_check
          %p318 = pneg %p232
        $region46: #{audio_cnn_pool.1} parent=11 // pred_check_branch
          %320 = sbr.rel (%p318) target = $region48
        $region47: #{audio_cnn_pool.1} parent=11 // pred_region
          _
        $region48: #{audio_cnn_pool.1} parent=11 // pred_fallthru
          _
        // Predicated region
        $region49: #{audio_cnn_pool.1} parent=11 // pred_check
          %p321 = pneg %p253
        $region50: #{audio_cnn_pool.1} parent=11 // pred_check_branch
          %323 = sbr.rel (%p321) target = $region52
        $region51: #{audio_cnn_pool.1} parent=11 // pred_region
          _
        $region52: #{audio_cnn_pool.1} parent=11 // pred_fallthru
          _
      $region12: #{audio_cnn_pool.1} parent=5 // pred_fallthru
        _
      %p324 = scmp.lt.s32.totalorder %s17, 2
      // Predicated region
      $region53: #{audio_cnn_pool.1} parent=5 // pred_check
        %p325 = pneg %p324
      $region54: #{audio_cnn_pool.1} parent=5 // pred_check_branch
        %327 = sbr.rel (%p325) target = $region56
      $region55: #{audio_cnn_pool.1} parent=5 // pred_region
        // Predicated region
        $region57: #{audio_cnn_pool.1} parent=55 // pred_check
          %p328 = pneg %p37
        $region58: #{audio_cnn_pool.1} parent=55 // pred_check_branch
          %330 = sbr.rel (%p328) target = $region60
        $region59: #{audio_cnn_pool.1} parent=55 // pred_region
          %s331 = sand.u32 %s27, 1
          %s332 = sand.u32 %s27, 1
          %s333 = smul.addr %s332, 32
          %s334 = scalar_lea.vmem [#allocation2], %s333
          %s335 = smul.u32 4, %s17
          %s336 = smul.addr %s335, 4
          %s337 = scalar_lea.vmem %s0, %s336
          // Predicated region
          $region61: #{audio_cnn_pool.1} parent=59 // pred_check
            _
          $region62: #{audio_cnn_pool.1} parent=59 // pred_check_branch
            %339 = sbr.rel (0) target = $region64
          $region63: #{audio_cnn_pool.1} parent=59 // pred_region
            // Predicated region
            $region65: #{audio_cnn_pool.1} parent=63 // pred_check
              _
            $region66: #{audio_cnn_pool.1} parent=63 // pred_check_branch
              %341 = sbr.rel (0) target = $region68
            $region67: #{audio_cnn_pool.1} parent=63 // pred_region
              loop: start=0, step=1, limit=1
              $region69: #{audio_cnn_pool.1} parent=67 // loop_pre_header
                _
              $region70: #{audio_cnn_pool.1} parent=67 // loop_header
                %s343 = sphi 0, %s347
                %p344 = scmp.ge.s32.totalorder %s343, 1
                %s348 = sphi %s337, %s337
                %s349 = sphi %s334, %s334
              $region71: #{audio_cnn_pool.1} parent=67 // loop_header_branch
                %346 = sbr.rel (%p344) target = $region75
              $region72: #{audio_cnn_pool.1} parent=67 // loop_body
                %v350 = vld [vmem:[%s348] sm:$0xff]
                %351 = vst [vmem:[%s349] sm:$0xff] %v350
                %v352 = vld [vmem:[%s348 + $0x8] sm:$0xff]
                %353 = vst [vmem:[%s349 + $0x8] sm:$0xff] %v352
                %v354 = vld [vmem:[%s348 + $0x20] sm:$0xff]
                %355 = vst [vmem:[%s349 + $0x10] sm:$0xff] %v354
                %v356 = vld [vmem:[%s348 + $0x28] sm:$0xff]
                %357 = vst [vmem:[%s349 + $0x18] sm:$0xff] %v356
              $region73: #{audio_cnn_pool.1} parent=67 // loop_footer
                %s347 = sadd.s32 1, %s343
              $region74: #{audio_cnn_pool.1} parent=67 // loop_footer_branch
                %342 = sbr.rel target = $region70
              $region75: #{audio_cnn_pool.1} parent=67 // loop_exit
                _
            $region68: #{audio_cnn_pool.1} parent=63 // pred_fallthru
              _
            // Predicated region
            $region76: #{audio_cnn_pool.1} parent=63 // pred_check
              _
            $region77: #{audio_cnn_pool.1} parent=63 // pred_check_branch
              %359 = sbr.rel target = $region79
            $region78: #{audio_cnn_pool.1} parent=63 // pred_region
              _
            $region79: #{audio_cnn_pool.1} parent=63 // pred_fallthru
              _
          $region64: #{audio_cnn_pool.1} parent=59 // pred_fallthru
            _
          %360 = vnop
        $region60: #{audio_cnn_pool.1} parent=55 // pred_fallthru
          _
      $region56: #{audio_cnn_pool.1} parent=5 // pred_fallthru
        _
      %p361 = scmp.le.s32.totalorder 1, %s17
      %p362 = scmp.lt.s32.totalorder %s17, 3
      %p363 = pnand %p361, %p362
      %p364 = pneg %p363
      // Predicated region
      $region80: #{audio_cnn_pool.1} parent=5 // pred_check
        _
      $region81: #{audio_cnn_pool.1} parent=5 // pred_check_branch
        %366 = sbr.rel (%p363) target = $region83
      $region82: #{audio_cnn_pool.1} parent=5 // pred_region
        %s367 = ssub.s32 %s17, 1
        %s368 = sand.u32 %s30, 1
        %s369 = sand.u32 %s30, 1
        %s370 = smul.addr %s369, 32
        %s371 = scalar_lea.vmem [#allocation2], %s370
        // Predicated region
        $region84: #{audio_cnn_pool.1} parent=82 // pred_check
          %p372 = pneg %p43
        $region85: #{audio_cnn_pool.1} parent=82 // pred_check_branch
          %374 = sbr.rel (%p372) target = $region87
        $region86: #{audio_cnn_pool.1} parent=82 // pred_region
          _
        $region87: #{audio_cnn_pool.1} parent=82 // pred_fallthru
          _
        %s375 = sand.u32 %s30, 1
        %s376 = sand.u32 %s30, 1
        %s377 = smul.addr %s376, 32
        %s378 = scalar_lea.vmem [#allocation2], %s377
        %p379 = pneg %p43
        %p380 = pneg %p40
        %p381 = pneg %p64
        %p382 = pneg %p61
        %p383 = pneg %p85
        %p384 = pneg %p82
        %p385 = pneg %p106
        %p386 = pneg %p103
        %p387 = pneg %p127
        %p388 = pneg %p124
        %p389 = pneg %p148
        %p390 = pneg %p145
        %p391 = pneg %p169
        %p392 = pneg %p166
        %p393 = pneg %p190
        %p394 = pneg %p187
        %p395 = pneg %p211
        %p396 = pneg %p208
        %p397 = pneg %p232
        %p398 = pneg %p229
        %p399 = pneg %p253
        %p400 = pneg %p250
        %p401 = pneg %p279
        %p402 = pneg %p276
        %p403 = scmp.lt.s32.totalorder %s22, 1
        %s404 = scalar_select %p403, %s22, 1
        %s405 = smul.addr %s404, 8
        %s406 = scalar_lea.vmem %s11, %s405
        %s407 = smul.u32 4, %s22
        %p408 = scmp.lt.s32.totalorder %s22, 1
        %s409 = scalar_select %p408, %s22, 1
        %s410 = smul.addr %s409, 8
        %s411 = scalar_lea.vmem %s11, %s410
        %v413 = vld [vmem:[%s371] sm:$0xff]
        %v414 = vld [vmem:[%s371 + $0x8] sm:$0xff]
        %v415 = vld [vmem:[%s371 + $0x10] sm:$0xff]
        %v416 = vld [vmem:[%s371 + $0x18] sm:$0xff]
        %v421 = vunpack.c.l.b16 %v413
        %v422 = vunpack.c.h.b16 %v413
        %v423 = vunpack.c.l.b16 %v414
        %v424 = vunpack.c.h.b16 %v414
        %v425 = vunpack.c.l.b16 %v415
        %v426 = vunpack.c.h.b16 %v415
        %v427 = vunpack.c.l.b16 %v416
        %v428 = vunpack.c.h.b16 %v416
        %v429 = vpack.c.b16 %v425, %v421
        %v430 = vpack.c.b16 %v426, %v422
        %v431 = vpack.c.b16 %v427, %v423
        %v432 = vpack.c.b16 %v428, %v424
        %437 = vrot.lane.b32.xlu0 %v429, 127
        %v438 = vpop.permute.xlu0 %437
        %439 = vrot.lane.b32.xlu0 %v430, 127
        %v440 = vpop.permute.xlu0 %439
        %441 = vrot.lane.b32.xlu0 %v431, 127
        %v442 = vpop.permute.xlu0 %441
        %443 = vrot.lane.b32.xlu0 %v432, 127
        %v444 = vpop.permute.xlu0 %443
        %vm445 = vcmask 1039360
        %v446 = vsel %vm445, %v438, %v440
        %v447 = vsel %vm445, %v440, %v442
        %v448 = vsel %vm445, %v442, %v444
        %453 = vrot.lane.b32.xlu0 %v429, 126
        %v454 = vpop.permute.xlu0 %453
        %455 = vrot.lane.b32.xlu0 %v430, 126
        %v456 = vpop.permute.xlu0 %455
        %457 = vrot.lane.b32.xlu0 %v431, 126
        %v458 = vpop.permute.xlu0 %457
        %459 = vrot.lane.b32.xlu0 %v432, 126
        %v460 = vpop.permute.xlu0 %459
        %vm461 = vcmask 1031168
        %v462 = vsel %vm461, %v454, %v456
        %v463 = vsel %vm461, %v456, %v458
        %v464 = vsel %vm461, %v458, %v460
        %v469 = vld [vmem:[%s1] sm:$0xf]
        %v470 = vld [vmem:[%s1 + $0x4] sm:$0xf]
        %v471 = vld [vmem:[%s1 + $0x8] sm:$0xf]
        %v472 = vld [vmem:[%s1 + $0xc] sm:$0xf]
        %v473 = vld [vmem:[%s1 + $0x10] sm:$0xf]
        %v474 = vld [vmem:[%s1 + $0x14] sm:$0xf]
        %v475 = vld [vmem:[%s1 + $0x18] sm:$0xf]
        %v476 = vld [vmem:[%s1 + $0x1c] sm:$0xf]
        %v485 = vunpack.c.l.b16 %v469
        %v486 = vunpack.c.l.b16 %v470
        %v487 = vunpack.c.l.b16 %v471
        %v488 = vunpack.c.l.b16 %v472
        %v489 = vunpack.c.l.b16 %v473
        %v490 = vunpack.c.l.b16 %v474
        %v491 = vunpack.c.l.b16 %v475
        %v492 = vunpack.c.l.b16 %v476
        %v493 = vpack.c.b16 %v486, %v485
        %v494 = vpack.c.b16 %v488, %v487
        %v495 = vpack.c.b16 %v490, %v489
        %v496 = vpack.c.b16 %v492, %v491
        %vm497 = vcmask 392192
        %v499 = vsel %vm497, %v493, 0
        %v502 = vsel %vm497, %v494, 0
        %v505 = vsel %vm497, %v495, 0
        %v508 = vsel %vm497, %v496, 0
        %510 = vmatprep.subr.bf16.mxu0 %v430
        %511 = vmatpush1.bf16.msra.mxu0 %v429
        %512 = vmatprep.subr.bf16.mxu0 %v447
        %513 = vmatpush1.bf16.msra.mxu0 %v446
        %514 = vmatprep.subr.bf16.mxu0 %v463
        %515 = vmatpush1.bf16.msra.mxu0 %v462
        %516 = vmatprep.subr.bf16.mxu0 0
        %517 = vmatpush1.bf16.msra.mxu0 0
        %518 = vmatprep.subr.bf16.mxu0 0
        %519 = vmatpush1.bf16.msra.mxu0 0
        %520 = vmatprep.subr.bf16.mxu0 0
        %521 = vmatpush1.bf16.msra.mxu0 0
        %522 = vmatprep.subr.bf16.mxu0 0
        %523 = vmatpush1.bf16.msra.mxu0 0
        %524 = vmatprep.subr.bf16.mxu0 0
        %525 = vmatpush1.bf16.msra.mxu0 0
        %526 = vmatprep.subr.bf16.mxu0 0
        %527 = vmatpush1.bf16.msra.mxu0 0
        %528 = vmatprep.subr.bf16.mxu0 0
        %529 = vmatpush1.bf16.msra.mxu0 0
        %530 = vmatprep.subr.bf16.mxu0 0
        %531 = vmatpush1.bf16.msra.mxu0 0
        %532 = vmatprep.subr.bf16.mxu0 0
        %533 = vmatpush1.bf16.msra.mxu0 0
        %534 = vmatprep.subr.bf16.mxu0 0
        %535 = vmatpush1.bf16.msra.mxu0 0
        %536 = vmatprep.subr.bf16.mxu0 0
        %537 = vmatpush1.bf16.msra.mxu0 0
        %538 = vmatprep.subr.bf16.mxu0 0
        %539 = vmatpush1.bf16.msra.mxu0 0
        %540 = vmatprep.subr.bf16.mxu0 0
        %541 = vmatpush1.bf16.msra.mxu0 0
        %542 = vmatprep.mubr.bf16.mxu0 0
        %543 = vmatmul.mubr.bf16.gmra.mrb[0].mxu0 %v499
        %v544 = vpop.f32.mrb[0].mxu0
        %v545 = vadd.f32 0.0, %v544
        %v546 = vpop.f32.mrb[0].mxu0
        %v547 = vadd.f32 0.0, %v546
        %v548 = vpop.f32.mrb[0].mxu0
        %v549 = vadd.f32 0.0, %v548
        %v550 = vpop.f32.mrb[0].mxu0
        %v551 = vadd.f32 0.0, %v550
        %552 = vmatprep.mubr.bf16.mxu0 0
        %553 = vmatmul.mubr.bf16.gmra.mrb[0].mxu0 %v502
        %v554 = vpop.f32.mrb[0].mxu0
        %v555 = vadd.f32 0.0, %v554
        %v556 = vpop.f32.mrb[0].mxu0
        %v557 = vadd.f32 0.0, %v556
        %v558 = vpop.f32.mrb[0].mxu0
        %v559 = vadd.f32 0.0, %v558
        %v560 = vpop.f32.mrb[0].mxu0
        %v561 = vadd.f32 0.0, %v560
        %562 = vmatprep.mubr.bf16.mxu0 0
        %563 = vmatmul.mubr.bf16.gmra.mrb[0].mxu0 %v505
        %v564 = vpop.f32.mrb[0].mxu0
        %v565 = vadd.f32 0.0, %v564
        %v566 = vpop.f32.mrb[0].mxu0
        %v567 = vadd.f32 0.0, %v566
        %v568 = vpop.f32.mrb[0].mxu0
        %v569 = vadd.f32 0.0, %v568
        %v570 = vpop.f32.mrb[0].mxu0
        %v571 = vadd.f32 0.0, %v570
        %572 = vmatprep.mubr.bf16.mxu0 0
        %573 = vmatmul.mubr.bf16.gmra.mrb[0].mxu0 %v508
        %v574 = vpop.f32.mrb[0].mxu0
        %v575 = vadd.f32 0.0, %v574
        %v576 = vpop.f32.mrb[0].mxu0
        %v577 = vadd.f32 0.0, %v576
        %v578 = vpop.f32.mrb[0].mxu0
        %v579 = vadd.f32 0.0, %v578
        %v580 = vpop.f32.mrb[0].mxu0
        %v581 = vadd.f32 0.0, %v580
        %582 = vdwg.mxu0
        %583 = vmatprep.subr.bf16.mxu0 %v432
        %584 = vmatpush1.bf16.msra.mxu0 %v431
        %585 = vmatprep.subr.bf16.mxu0 %v444
        %586 = vmatpush1.bf16.msra.mxu0 %v448
        %587 = vmatprep.subr.bf16.mxu0 %v460
        %588 = vmatpush1.bf16.msra.mxu0 %v464
        %589 = vmatprep.subr.bf16.mxu0 0
        %590 = vmatpush1.bf16.msra.mxu0 0
        %591 = vmatprep.subr.bf16.mxu0 0
        %592 = vmatpush1.bf16.msra.mxu0 0
        %593 = vmatprep.subr.bf16.mxu0 0
        %594 = vmatpush1.bf16.msra.mxu0 0
        %595 = vmatprep.subr.bf16.mxu0 0
        %596 = vmatpush1.bf16.msra.mxu0 0
        %597 = vmatprep.subr.bf16.mxu0 0
        %598 = vmatpush1.bf16.msra.mxu0 0
        %599 = vmatprep.subr.bf16.mxu0 0
        %600 = vmatpush1.bf16.msra.mxu0 0
        %601 = vmatprep.subr.bf16.mxu0 0
        %602 = vmatpush1.bf16.msra.mxu0 0
        %603 = vmatprep.subr.bf16.mxu0 0
        %604 = vmatpush1.bf16.msra.mxu0 0
        %605 = vmatprep.subr.bf16.mxu0 0
        %606 = vmatpush1.bf16.msra.mxu0 0
        %607 = vmatprep.subr.bf16.mxu0 0
        %608 = vmatpush1.bf16.msra.mxu0 0
        %609 = vmatprep.subr.bf16.mxu0 0
        %610 = vmatpush1.bf16.msra.mxu0 0
        %611 = vmatprep.subr.bf16.mxu0 0
        %612 = vmatpush1.bf16.msra.mxu0 0
        %613 = vmatprep.subr.bf16.mxu0 0
        %614 = vmatpush1.bf16.msra.mxu0 0
        %615 = vmatprep.mubr.bf16.mxu0 0
        %616 = vmatmul.mubr.bf16.gmra.mrb[0].mxu0 %v499
        %v617 = vpop.f32.mrb[0].mxu0
        %v618 = vadd.f32 0.0, %v617
        %v619 = vpop.f32.mrb[0].mxu0
        %v620 = vadd.f32 0.0, %v619
        %v621 = vpop.f32.mrb[0].mxu0
        %v622 = vadd.f32 0.0, %v621
        %v623 = vpop.f32.mrb[0].mxu0
        %v624 = vadd.f32 0.0, %v623
        %625 = vmatprep.mubr.bf16.mxu0 0
        %626 = vmatmul.mubr.bf16.gmra.mrb[0].mxu0 %v502
        %v627 = vpop.f32.mrb[0].mxu0
        %v628 = vadd.f32 0.0, %v627
        %v629 = vpop.f32.mrb[0].mxu0
        %v630 = vadd.f32 0.0, %v629
        %v631 = vpop.f32.mrb[0].mxu0
        %v632 = vadd.f32 0.0, %v631
        %v633 = vpop.f32.mrb[0].mxu0
        %v634 = vadd.f32 0.0, %v633
        %635 = vmatprep.mubr.bf16.mxu0 0
        %636 = vmatmul.mubr.bf16.gmra.mrb[0].mxu0 %v505
        %v637 = vpop.f32.mrb[0].mxu0
        %v638 = vadd.f32 0.0, %v637
        %v639 = vpop.f32.mrb[0].mxu0
        %v640 = vadd.f32 0.0, %v639
        %v641 = vpop.f32.mrb[0].mxu0
        %v642 = vadd.f32 0.0, %v641
        %v643 = vpop.f32.mrb[0].mxu0
        %v644 = vadd.f32 0.0, %v643
        %645 = vmatprep.mubr.bf16.mxu0 0
        %646 = vmatmul.mubr.bf16.gmra.mrb[0].mxu0 %v508
        %v647 = vpop.f32.mrb[0].mxu0
        %v648 = vadd.f32 0.0, %v647
        %v649 = vpop.f32.mrb[0].mxu0
        %v650 = vadd.f32 0.0, %v649
        %v651 = vpop.f32.mrb[0].mxu0
        %v652 = vadd.f32 0.0, %v651
        %v653 = vpop.f32.mrb[0].mxu0
        %v654 = vadd.f32 0.0, %v653
        %655 = vdwg.mxu0
        %v656 = vpack.c.bf16 %v549, %v545
        %v657 = vpack.c.bf16 %v551, %v547
        %v658 = vpack.c.bf16 %v622, %v618
        %v659 = vpack.c.bf16 %v624, %v620
        %v660 = vpack.c.bf16 %v559, %v555
        %v661 = vpack.c.bf16 %v561, %v557
        %v662 = vpack.c.bf16 %v632, %v628
        %v663 = vpack.c.bf16 %v634, %v630
        %v664 = vpack.c.bf16 %v569, %v565
        %v665 = vpack.c.bf16 %v571, %v567
        %v666 = vpack.c.bf16 %v642, %v638
        %v667 = vpack.c.bf16 %v644, %v640
        %v668 = vpack.c.bf16 %v579, %v575
        %v669 = vpack.c.bf16 %v581, %v577
        %v670 = vpack.c.bf16 %v652, %v648
        %v671 = vpack.c.bf16 %v654, %v650
        %v672 = vld [vmem:[%s2] sm:$0xf]
        %v673 = vld [vmem:[%s2 + $0x4] sm:$0xf]
        %v674 = vld [vmem:[%s2 + $0x8] sm:$0xf]
        %v675 = vld [vmem:[%s2 + $0xc] sm:$0xf]
        %v676 = vld [vmem:[%s2 + $0x10] sm:$0xf]
        %v677 = vld [vmem:[%s2 + $0x14] sm:$0xf]
        %v678 = vld [vmem:[%s2 + $0x18] sm:$0xf]
        %v679 = vld [vmem:[%s2 + $0x1c] sm:$0xf]
        %681 = vset.pattern.permute.xlu0 0
        %682 = vperm.xlu0 %681, %v672
        %v683 = vpop.permute.xlu0 %682
        %v686 = vunpack.c.l.s4 839922192
        %v687 = vunpack.c.0.s8 %v686
        %v688 = vlaneseq
        %v689 = vshrl.u32 %v688, 7
        %v690 = vsub.s32 %v687, %v689
        %v691 = vrot.slane %v683, %v690
        %693 = vset.pattern.permute.xlu0 0
        %694 = vperm.xlu0 %693, %v673
        %v695 = vpop.permute.xlu0 %694
        %v698 = vunpack.c.l.s4 839922192
        %v699 = vunpack.c.0.s8 %v698
        %v700 = vlaneseq
        %v701 = vshrl.u32 %v700, 7
        %v702 = vsub.s32 %v699, %v701
        %v703 = vrot.slane %v695, %v702
        %705 = vset.pattern.permute.xlu0 0
        %706 = vperm.xlu0 %705, %v674
        %v707 = vpop.permute.xlu0 %706
        %v710 = vunpack.c.l.s4 839922192
        %v711 = vunpack.c.0.s8 %v710
        %v712 = vlaneseq
        %v713 = vshrl.u32 %v712, 7
        %v714 = vsub.s32 %v711, %v713
        %v715 = vrot.slane %v707, %v714
        %717 = vset.pattern.permute.xlu0 0
        %718 = vperm.xlu0 %717, %v675
        %v719 = vpop.permute.xlu0 %718
        %v722 = vunpack.c.l.s4 839922192
        %v723 = vunpack.c.0.s8 %v722
        %v724 = vlaneseq
        %v725 = vshrl.u32 %v724, 7
        %v726 = vsub.s32 %v723, %v725
        %v727 = vrot.slane %v719, %v726
        %729 = vset.pattern.permute.xlu0 0
        %730 = vperm.xlu0 %729, %v676
        %v731 = vpop.permute.xlu0 %730
        %v734 = vunpack.c.l.s4 839922192
        %v735 = vunpack.c.0.s8 %v734
        %v736 = vlaneseq
        %v737 = vshrl.u32 %v736, 7
        %v738 = vsub.s32 %v735, %v737
        %v739 = vrot.slane %v731, %v738
        %741 = vset.pattern.permute.xlu0 0
        %742 = vperm.xlu0 %741, %v677
        %v743 = vpop.permute.xlu0 %742
        %v746 = vunpack.c.l.s4 839922192
        %v747 = vunpack.c.0.s8 %v746
        %v748 = vlaneseq
        %v749 = vshrl.u32 %v748, 7
        %v750 = vsub.s32 %v747, %v749
        %v751 = vrot.slane %v743, %v750
        %753 = vset.pattern.permute.xlu0 0
        %754 = vperm.xlu0 %753, %v678
        %v755 = vpop.permute.xlu0 %754
        %v758 = vunpack.c.l.s4 839922192
        %v759 = vunpack.c.0.s8 %v758
        %v760 = vlaneseq
        %v761 = vshrl.u32 %v760, 7
        %v762 = vsub.s32 %v759, %v761
        %v763 = vrot.slane %v755, %v762
        %765 = vset.pattern.permute.xlu0 0
        %766 = vperm.xlu0 %765, %v679
        %v767 = vpop.permute.xlu0 %766
        %v770 = vunpack.c.l.s4 839922192
        %v771 = vunpack.c.0.s8 %v770
        %v772 = vlaneseq
        %v773 = vshrl.u32 %v772, 7
        %v774 = vsub.s32 %v771, %v773
        %v775 = vrot.slane %v767, %v774
        %v784 = vunpack.c.l.b16 %v691
        %v785 = vunpack.c.l.b16 %v703
        %v786 = vunpack.c.l.b16 %v715
        %v787 = vunpack.c.l.b16 %v727
        %v788 = vunpack.c.l.b16 %v739
        %v789 = vunpack.c.l.b16 %v751
        %v790 = vunpack.c.l.b16 %v763
        %v791 = vunpack.c.l.b16 %v775
        %v792 = vpack.c.b16 %v785, %v784
        %v793 = vpack.c.b16 %v787, %v786
        %v794 = vpack.c.b16 %v789, %v788
        %v795 = vpack.c.b16 %v791, %v790
        %v800 = vadd.bf16 %v656, %v792
        %v801 = vadd.bf16 %v657, %v792
        %v802 = vadd.bf16 %v658, %v792
        %v803 = vadd.bf16 %v659, %v792
        %v804 = vadd.bf16 %v660, %v793
        %v805 = vadd.bf16 %v661, %v793
        %v806 = vadd.bf16 %v662, %v793
        %v807 = vadd.bf16 %v663, %v793
        %v808 = vadd.bf16 %v664, %v794
        %v809 = vadd.bf16 %v665, %v794
        %v810 = vadd.bf16 %v666, %v794
        %v811 = vadd.bf16 %v667, %v794
        %v812 = vadd.bf16 %v668, %v795
        %v813 = vadd.bf16 %v669, %v795
        %v814 = vadd.bf16 %v670, %v795
        %v815 = vadd.bf16 %v671, %v795
        %v816 = vmax.bf16 %v800, 0
        %v817 = vmax.bf16 %v801, 0
        %v818 = vmax.bf16 %v802, 0
        %v819 = vmax.bf16 %v803, 0
        %v820 = vmax.bf16 %v804, 0
        %v821 = vmax.bf16 %v805, 0
        %v822 = vmax.bf16 %v806, 0
        %v823 = vmax.bf16 %v807, 0
        %v824 = vmax.bf16 %v808, 0
        %v825 = vmax.bf16 %v809, 0
        %v826 = vmax.bf16 %v810, 0
        %v827 = vmax.bf16 %v811, 0
        %v828 = vmax.bf16 %v812, 0
        %v829 = vmax.bf16 %v813, 0
        %v830 = vmax.bf16 %v814, 0
        %v831 = vmax.bf16 %v815, 0
        %848 = vrot.lane.b32.xlu0 %v816, 127
        %v849 = vpop.permute.xlu0 %848
        %850 = vrot.lane.b32.xlu0 %v817, 127
        %v851 = vpop.permute.xlu0 %850
        %852 = vrot.lane.b32.xlu0 %v818, 127
        %v853 = vpop.permute.xlu0 %852
        %854 = vrot.lane.b32.xlu0 %v819, 127
        %v855 = vpop.permute.xlu0 %854
        %856 = vrot.lane.b32.xlu0 %v820, 127
        %v857 = vpop.permute.xlu0 %856
        %858 = vrot.lane.b32.xlu0 %v821, 127
        %v859 = vpop.permute.xlu0 %858
        %860 = vrot.lane.b32.xlu0 %v822, 127
        %v861 = vpop.permute.xlu0 %860
        %862 = vrot.lane.b32.xlu0 %v823, 127
        %v863 = vpop.permute.xlu0 %862
        %864 = vrot.lane.b32.xlu0 %v824, 127
        %v865 = vpop.permute.xlu0 %864
        %866 = vrot.lane.b32.xlu0 %v825, 127
        %v867 = vpop.permute.xlu0 %866
        %868 = vrot.lane.b32.xlu0 %v826, 127
        %v869 = vpop.permute.xlu0 %868
        %870 = vrot.lane.b32.xlu0 %v827, 127
        %v871 = vpop.permute.xlu0 %870
        %872 = vrot.lane.b32.xlu0 %v828, 127
        %v873 = vpop.permute.xlu0 %872
        %874 = vrot.lane.b32.xlu0 %v829, 127
        %v875 = vpop.permute.xlu0 %874
        %876 = vrot.lane.b32.xlu0 %v830, 127
        %v877 = vpop.permute.xlu0 %876
        %878 = vrot.lane.b32.xlu0 %v831, 127
        %v879 = vpop.permute.xlu0 %878
        %v880 = vsel %vm445, %v849, %v851
        %v881 = vsel %vm445, %v851, %v853
        %v882 = vsel %vm445, %v853, %v855
        %v883 = vsel %vm445, %v857, %v859
        %v884 = vsel %vm445, %v859, %v861
        %v885 = vsel %vm445, %v861, %v863
        %v886 = vsel %vm445, %v865, %v867
        %v887 = vsel %vm445, %v867, %v869
        %v888 = vsel %vm445, %v869, %v871
        %v889 = vsel %vm445, %v873, %v875
        %v890 = vsel %vm445, %v875, %v877
        %v891 = vsel %vm445, %v877, %v879
        %v908 = vmax.bf16 %v816, %v880
        %v909 = vmax.bf16 %v817, %v881
        %v910 = vmax.bf16 %v818, %v882
        %v911 = vmax.bf16 %v819, %v855
        %v912 = vmax.bf16 %v820, %v883
        %v913 = vmax.bf16 %v821, %v884
        %v914 = vmax.bf16 %v822, %v885
        %v915 = vmax.bf16 %v823, %v863
        %v916 = vmax.bf16 %v824, %v886
        %v917 = vmax.bf16 %v825, %v887
        %v918 = vmax.bf16 %v826, %v888
        %v919 = vmax.bf16 %v827, %v871
        %v920 = vmax.bf16 %v828, %v889
        %v921 = vmax.bf16 %v829, %v890
        %v922 = vmax.bf16 %v830, %v891
        %v923 = vmax.bf16 %v831, %v879
        %940 = vrot.lane.b32.xlu0 %v908, 127
        %v941 = vpop.permute.xlu0 %940
        %942 = vrot.lane.b32.xlu0 %v909, 127
        %v943 = vpop.permute.xlu0 %942
        %944 = vrot.lane.b32.xlu0 %v910, 127
        %v945 = vpop.permute.xlu0 %944
        %946 = vrot.lane.b32.xlu0 %v911, 127
        %v947 = vpop.permute.xlu0 %946
        %948 = vrot.lane.b32.xlu0 %v912, 127
        %v949 = vpop.permute.xlu0 %948
        %950 = vrot.lane.b32.xlu0 %v913, 127
        %v951 = vpop.permute.xlu0 %950
        %952 = vrot.lane.b32.xlu0 %v914, 127
        %v953 = vpop.permute.xlu0 %952
        %954 = vrot.lane.b32.xlu0 %v915, 127
        %v955 = vpop.permute.xlu0 %954
        %956 = vrot.lane.b32.xlu0 %v916, 127
        %v957 = vpop.permute.xlu0 %956
        %958 = vrot.lane.b32.xlu0 %v917, 127
        %v959 = vpop.permute.xlu0 %958
        %960 = vrot.lane.b32.xlu0 %v918, 127
        %v961 = vpop.permute.xlu0 %960
        %962 = vrot.lane.b32.xlu0 %v919, 127
        %v963 = vpop.permute.xlu0 %962
        %964 = vrot.lane.b32.xlu0 %v920, 127
        %v965 = vpop.permute.xlu0 %964
        %966 = vrot.lane.b32.xlu0 %v921, 127
        %v967 = vpop.permute.xlu0 %966
        %968 = vrot.lane.b32.xlu0 %v922, 127
        %v969 = vpop.permute.xlu0 %968
        %970 = vrot.lane.b32.xlu0 %v923, 127
        %v971 = vpop.permute.xlu0 %970
        %v972 = vsel %vm445, %v941, %v943
        %v973 = vsel %vm445, %v943, %v945
        %v974 = vsel %vm445, %v945, %v947
        %v975 = vsel %vm445, %v949, %v951
        %v976 = vsel %vm445, %v951, %v953
        %v977 = vsel %vm445, %v953, %v955
        %v978 = vsel %vm445, %v957, %v959
        %v979 = vsel %vm445, %v959, %v961
        %v980 = vsel %vm445, %v961, %v963
        %v981 = vsel %vm445, %v965, %v967
        %v982 = vsel %vm445, %v967, %v969
        %v983 = vsel %vm445, %v969, %v971
        %1000 = vrot.lane.b32.xlu0 %v908, 126
        %v1001 = vpop.permute.xlu0 %1000
        %1002 = vrot.lane.b32.xlu0 %v909, 126
        %v1003 = vpop.permute.xlu0 %1002
        %1004 = vrot.lane.b32.xlu0 %v910, 126
        %v1005 = vpop.permute.xlu0 %1004
        %1006 = vrot.lane.b32.xlu0 %v911, 126
        %v1007 = vpop.permute.xlu0 %1006
        %1008 = vrot.lane.b32.xlu0 %v912, 126
        %v1009 = vpop.permute.xlu0 %1008
        %1010 = vrot.lane.b32.xlu0 %v913, 126
        %v1011 = vpop.permute.xlu0 %1010
        %1012 = vrot.lane.b32.xlu0 %v914, 126
        %v1013 = vpop.permute.xlu0 %1012
        %1014 = vrot.lane.b32.xlu0 %v915, 126
        %v1015 = vpop.permute.xlu0 %1014
        %1016 = vrot.lane.b32.xlu0 %v916, 126
        %v1017 = vpop.permute.xlu0 %1016
        %1018 = vrot.lane.b32.xlu0 %v917, 126
        %v1019 = vpop.permute.xlu0 %1018
        %1020 = vrot.lane.b32.xlu0 %v918, 126
        %v1021 = vpop.permute.xlu0 %1020
        %1022 = vrot.lane.b32.xlu0 %v919, 126
        %v1023 = vpop.permute.xlu0 %1022
        %1024 = vrot.lane.b32.xlu0 %v920, 126
        %v1025 = vpop.permute.xlu0 %1024
        %1026 = vrot.lane.b32.xlu0 %v921, 126
        %v1027 = vpop.permute.xlu0 %1026
        %1028 = vrot.lane.b32.xlu0 %v922, 126
        %v1029 = vpop.permute.xlu0 %1028
        %1030 = vrot.lane.b32.xlu0 %v923, 126
        %v1031 = vpop.permute.xlu0 %1030
        %v1032 = vsel %vm461, %v1001, %v1003
        %v1033 = vsel %vm461, %v1003, %v1005
        %v1034 = vsel %vm461, %v1005, %v1007
        %v1035 = vsel %vm461, %v1009, %v1011
        %v1036 = vsel %vm461, %v1011, %v1013
        %v1037 = vsel %vm461, %v1013, %v1015
        %v1038 = vsel %vm461, %v1017, %v1019
        %v1039 = vsel %vm461, %v1019, %v1021
        %v1040 = vsel %vm461, %v1021, %v1023
        %v1041 = vsel %vm461, %v1025, %v1027
        %v1042 = vsel %vm461, %v1027, %v1029
        %v1043 = vsel %vm461, %v1029, %v1031
        %v1060 = vld [vmem:[%s3] sm:$0xff]
        %v1061 = vld [vmem:[%s3 + $0x8] sm:$0xff]
        %v1062 = vld [vmem:[%s3 + $0x10] sm:$0xff]
        %v1063 = vld [vmem:[%s3 + $0x18] sm:$0xff]
        %v1064 = vld [vmem:[%s3 + $0x20] sm:$0xff]
        %v1065 = vld [vmem:[%s3 + $0x28] sm:$0xff]
        %v1066 = vld [vmem:[%s3 + $0x30] sm:$0xff]
        %v1067 = vld [vmem:[%s3 + $0x38] sm:$0xff]
        %v1068 = vld [vmem:[%s3 + $0x40] sm:$0xff]
        %v1069 = vld [vmem:[%s3 + $0x48] sm:$0xff]
        %v1070 = vld [vmem:[%s3 + $0x50] sm:$0xff]
        %v1071 = vld [vmem:[%s3 + $0x58] sm:$0xff]
        %v1072 = vld [vmem:[%s3 + $0x60] sm:$0xff]
        %v1073 = vld [vmem:[%s3 + $0x68] sm:$0xff]
        %v1074 = vld [vmem:[%s3 + $0x70] sm:$0xff]
        %v1075 = vld [vmem:[%s3 + $0x78] sm:$0xff]
        %v1092 = vunpack.c.l.b16 %v1060
        %v1093 = vunpack.c.h.b16 %v1060
        %v1094 = vunpack.c.l.b16 %v1061
        %v1095 = vunpack.c.h.b16 %v1061
        %v1096 = vunpack.c.l.b16 %v1062
        %v1097 = vunpack.c.h.b16 %v1062
        %v1098 = vunpack.c.l.b16 %v1063
        %v1099 = vunpack.c.h.b16 %v1063
        %v1100 = vunpack.c.l.b16 %v1064
        %v1101 = vunpack.c.h.b16 %v1064
        %v1102 = vunpack.c.l.b16 %v1065
        %v1103 = vunpack.c.h.b16 %v1065
        %v1104 = vunpack.c.l.b16 %v1066
        %v1105 = vunpack.c.h.b16 %v1066
        %v1106 = vunpack.c.l.b16 %v1067
        %v1107 = vunpack.c.h.b16 %v1067
        %v1108 = vunpack.c.l.b16 %v1068
        %v1109 = vunpack.c.h.b16 %v1068
        %v1110 = vunpack.c.l.b16 %v1069
        %v1111 = vunpack.c.h.b16 %v1069
        %v1112 = vunpack.c.l.b16 %v1070
        %v1113 = vunpack.c.h.b16 %v1070
        %v1114 = vunpack.c.l.b16 %v1071
        %v1115 = vunpack.c.h.b16 %v1071
        %v1116 = vunpack.c.l.b16 %v1072
        %v1117 = vunpack.c.h.b16 %v1072
        %v1118 = vunpack.c.l.b16 %v1073
        %v1119 = vunpack.c.h.b16 %v1073
        %v1120 = vunpack.c.l.b16 %v1074
        %v1121 = vunpack.c.h.b16 %v1074
        %v1122 = vunpack.c.l.b16 %v1075
        %v1123 = vunpack.c.h.b16 %v1075
        %v1124 = vpack.c.b16 %v1094, %v1092
        %v1125 = vpack.c.b16 %v1095, %v1093
        %v1126 = vpack.c.b16 %v1098, %v1096
        %v1127 = vpack.c.b16 %v1099, %v1097
        %v1128 = vpack.c.b16 %v1102, %v1100
        %v1129 = vpack.c.b16 %v1103, %v1101
        %v1130 = vpack.c.b16 %v1106, %v1104
        %v1131 = vpack.c.b16 %v1107, %v1105
        %v1132 = vpack.c.b16 %v1110, %v1108
        %v1133 = vpack.c.b16 %v1111, %v1109
        %v1134 = vpack.c.b16 %v1114, %v1112
        %v1135 = vpack.c.b16 %v1115, %v1113
        %v1136 = vpack.c.b16 %v1118, %v1116
        %v1137 = vpack.c.b16 %v1119, %v1117
        %v1138 = vpack.c.b16 %v1122, %v1120
        %v1139 = vpack.c.b16 %v1123, %v1121
        %vm1148 = vcmask 523264
        %v1150 = vsel %vm1148, %v1125, 0
        %v1153 = vsel %vm1148, %v1127, 0
        %v1156 = vsel %vm1148, %v1129, 0
        %v1159 = vsel %vm1148, %v1131, 0
        %v1162 = vsel %vm1148, %v1133, 0
        %v1165 = vsel %vm1148, %v1135, 0
        %v1168 = vsel %vm1148, %v1137, 0
        %v1171 = vsel %vm1148, %v1139, 0
        %1173 = vmatprep.subr.bf16.mxu0 %v909
        %1174 = vmatpush1.bf16.msra.mxu0 %v908
        %1175 = vmatprep.subr.bf16.mxu0 %v913
        %1176 = vmatpush1.bf16.msra.mxu0 %v912
        %1177 = vmatprep.subr.bf16.mxu0 %v917
        %1178 = vmatpush1.bf16.msra.mxu0 %v916
        %1179 = vmatprep.subr.bf16.mxu0 %v921
        %1180 = vmatpush1.bf16.msra.mxu0 %v920
        %1181 = vmatprep.subr.bf16.mxu0 %v973
        %1182 = vmatpush1.bf16.msra.mxu0 %v972
        %1183 = vmatprep.subr.bf16.mxu0 %v976
        %1184 = vmatpush1.bf16.msra.mxu0 %v975
        %1185 = vmatprep.subr.bf16.mxu0 %v979
        %1186 = vmatpush1.bf16.msra.mxu0 %v978
        %1187 = vmatprep.subr.bf16.mxu0 %v982
        %1188 = vmatpush1.bf16.msra.mxu0 %v981
        %1189 = vmatprep.subr.bf16.mxu0 %v1033
        %1190 = vmatpush1.bf16.msra.mxu0 %v1032
        %1191 = vmatprep.subr.bf16.mxu0 %v1036
        %1192 = vmatpush1.bf16.msra.mxu0 %v1035
        %1193 = vmatprep.subr.bf16.mxu0 %v1039
        %1194 = vmatpush1.bf16.msra.mxu0 %v1038
        %1195 = vmatprep.subr.bf16.mxu0 %v1042
        %1196 = vmatpush1.bf16.msra.mxu0 %v1041
        %1197 = vmatprep.subr.bf16.mxu0 0
        %1198 = vmatpush1.bf16.msra.mxu0 0
        %1199 = vmatprep.subr.bf16.mxu0 0
        %1200 = vmatpush1.bf16.msra.mxu0 0
        %1201 = vmatprep.subr.bf16.mxu0 0
        %1202 = vmatpush1.bf16.msra.mxu0 0
        %1203 = vmatprep.subr.bf16.mxu0 0
        %1204 = vmatpush1.bf16.msra.mxu0 0
        %1205 = vmatprep.mubr.bf16.mxu0 %v1150
        %1206 = vmatmul.mubr.bf16.gmra.mrb[0].mxu0 %v1124
        %v1207 = vpop.f32.mrb[0].mxu0
        %v1208 = vadd.f32 0.0, %v1207
        %v1209 = vpop.f32.mrb[0].mxu0
        %v1210 = vadd.f32 0.0, %v1209
        %v1211 = vpop.f32.mrb[0].mxu0
        %v1212 = vadd.f32 0.0, %v1211
        %v1213 = vpop.f32.mrb[0].mxu0
        %v1214 = vadd.f32 0.0, %v1213
        %1215 = vmatprep.mubr.bf16.mxu0 %v1153
        %1216 = vmatmul.mubr.bf16.gmra.mrb[0].mxu0 %v1126
        %v1217 = vpop.f32.mrb[0].mxu0
        %v1218 = vadd.f32 0.0, %v1217
        %v1219 = vpop.f32.mrb[0].mxu0
        %v1220 = vadd.f32 0.0, %v1219
        %v1221 = vpop.f32.mrb[0].mxu0
        %v1222 = vadd.f32 0.0, %v1221
        %v1223 = vpop.f32.mrb[0].mxu0
        %v1224 = vadd.f32 0.0, %v1223
        %1225 = vmatprep.mubr.bf16.mxu0 %v1156
        %1226 = vmatmul.mubr.bf16.gmra.mrb[0].mxu0 %v1128
        %v1227 = vpop.f32.mrb[0].mxu0
        %v1228 = vadd.f32 0.0, %v1227
        %v1229 = vpop.f32.mrb[0].mxu0
        %v1230 = vadd.f32 0.0, %v1229
        %v1231 = vpop.f32.mrb[0].mxu0
        %v1232 = vadd.f32 0.0, %v1231
        %v1233 = vpop.f32.mrb[0].mxu0
        %v1234 = vadd.f32 0.0, %v1233
        %1235 = vmatprep.mubr.bf16.mxu0 %v1159
        %1236 = vmatmul.mubr.bf16.gmra.mrb[0].mxu0 %v1130
        %v1237 = vpop.f32.mrb[0].mxu0
        %v1238 = vadd.f32 0.0, %v1237
        %v1239 = vpop.f32.mrb[0].mxu0
        %v1240 = vadd.f32 0.0, %v1239
        %v1241 = vpop.f32.mrb[0].mxu0
        %v1242 = vadd.f32 0.0, %v1241
        %v1243 = vpop.f32.mrb[0].mxu0
        %v1244 = vadd.f32 0.0, %v1243
        %1245 = vmatprep.mubr.bf16.mxu0 %v1162
        %1246 = vmatmul.mubr.bf16.gmra.mrb[0].mxu0 %v1132
        %v1247 = vpop.f32.mrb[0].mxu0
        %v1248 = vadd.f32 0.0, %v1247
        %v1249 = vpop.f32.mrb[0].mxu0
        %v1250 = vadd.f32 0.0, %v1249
        %v1251 = vpop.f32.mrb[0].mxu0
        %v1252 = vadd.f32 0.0, %v1251
        %v1253 = vpop.f32.mrb[0].mxu0
        %v1254 = vadd.f32 0.0, %v1253
        %1255 = vmatprep.mubr.bf16.mxu0 %v1165
        %1256 = vmatmul.mubr.bf16.gmra.mrb[0].mxu0 %v1134
        %v1257 = vpop.f32.mrb[0].mxu0
        %v1258 = vadd.f32 0.0, %v1257
        %v1259 = vpop.f32.mrb[0].mxu0
        %v1260 = vadd.f32 0.0, %v1259
        %v1261 = vpop.f32.mrb[0].mxu0
        %v1262 = vadd.f32 0.0, %v1261
        %v1263 = vpop.f32.mrb[0].mxu0
        %v1264 = vadd.f32 0.0, %v1263
        %1265 = vmatprep.mubr.bf16.mxu0 %v1168
        %1266 = vmatmul.mubr.bf16.gmra.mrb[0].mxu0 %v1136
        %v1267 = vpop.f32.mrb[0].mxu0
        %v1268 = vadd.f32 0.0, %v1267
        %v1269 = vpop.f32.mrb[0].mxu0
        %v1270 = vadd.f32 0.0, %v1269
        %v1271 = vpop.f32.mrb[0].mxu0
        %v1272 = vadd.f32 0.0, %v1271
        %v1273 = vpop.f32.mrb[0].mxu0
        %v1274 = vadd.f32 0.0, %v1273
        %1275 = vmatprep.mubr.bf16.mxu0 %v1171
        %1276 = vmatmul.mubr.bf16.gmra.mrb[0].mxu0 %v1138
        %v1277 = vpop.f32.mrb[0].mxu0
        %v1278 = vadd.f32 0.0, %v1277
        %v1279 = vpop.f32.mrb[0].mxu0
        %v1280 = vadd.f32 0.0, %v1279
        %v1281 = vpop.f32.mrb[0].mxu0
        %v1282 = vadd.f32 0.0, %v1281
        %v1283 = vpop.f32.mrb[0].mxu0
        %v1284 = vadd.f32 0.0, %v1283
        %1285 = vdwg.mxu0
        %1286 = vmatprep.subr.bf16.mxu0 %v911
        %1287 = vmatpush1.bf16.msra.mxu0 %v910
        %1288 = vmatprep.subr.bf16.mxu0 %v915
        %1289 = vmatpush1.bf16.msra.mxu0 %v914
        %1290 = vmatprep.subr.bf16.mxu0 %v919
        %1291 = vmatpush1.bf16.msra.mxu0 %v918
        %1292 = vmatprep.subr.bf16.mxu0 %v923
        %1293 = vmatpush1.bf16.msra.mxu0 %v922
        %1294 = vmatprep.subr.bf16.mxu0 %v947
        %1295 = vmatpush1.bf16.msra.mxu0 %v974
        %1296 = vmatprep.subr.bf16.mxu0 %v955
        %1297 = vmatpush1.bf16.msra.mxu0 %v977
        %1298 = vmatprep.subr.bf16.mxu0 %v963
        %1299 = vmatpush1.bf16.msra.mxu0 %v980
        %1300 = vmatprep.subr.bf16.mxu0 %v971
        %1301 = vmatpush1.bf16.msra.mxu0 %v983
        %1302 = vmatprep.subr.bf16.mxu0 %v1007
        %1303 = vmatpush1.bf16.msra.mxu0 %v1034
        %1304 = vmatprep.subr.bf16.mxu0 %v1015
        %1305 = vmatpush1.bf16.msra.mxu0 %v1037
        %1306 = vmatprep.subr.bf16.mxu0 %v1023
        %1307 = vmatpush1.bf16.msra.mxu0 %v1040
        %1308 = vmatprep.subr.bf16.mxu0 %v1031
        %1309 = vmatpush1.bf16.msra.mxu0 %v1043
        %1310 = vmatprep.subr.bf16.mxu0 0
        %1311 = vmatpush1.bf16.msra.mxu0 0
        %1312 = vmatprep.subr.bf16.mxu0 0
        %1313 = vmatpush1.bf16.msra.mxu0 0
        %1314 = vmatprep.subr.bf16.mxu0 0
        %1315 = vmatpush1.bf16.msra.mxu0 0
        %1316 = vmatprep.subr.bf16.mxu0 0
        %1317 = vmatpush1.bf16.msra.mxu0 0
        %1318 = vmatprep.mubr.bf16.mxu0 %v1150
        %1319 = vmatmul.mubr.bf16.gmra.mrb[0].mxu0 %v1124
        %v1320 = vpop.f32.mrb[0].mxu0
        %v1321 = vadd.f32 0.0, %v1320
        %v1322 = vpop.f32.mrb[0].mxu0
        %v1323 = vadd.f32 0.0, %v1322
        %v1324 = vpop.f32.mrb[0].mxu0
        %v1325 = vadd.f32 0.0, %v1324
        %v1326 = vpop.f32.mrb[0].mxu0
        %v1327 = vadd.f32 0.0, %v1326
        %1328 = vmatprep.mubr.bf16.mxu0 %v1153
        %1329 = vmatmul.mubr.bf16.gmra.mrb[0].mxu0 %v1126
        %v1330 = vpop.f32.mrb[0].mxu0
        %v1331 = vadd.f32 0.0, %v1330
        %v1332 = vpop.f32.mrb[0].mxu0
        %v1333 = vadd.f32 0.0, %v1332
        %v1334 = vpop.f32.mrb[0].mxu0
        %v1335 = vadd.f32 0.0, %v1334
        %v1336 = vpop.f32.mrb[0].mxu0
        %v1337 = vadd.f32 0.0, %v1336
        %1338 = vmatprep.mubr.bf16.mxu0 %v1156
        %1339 = vmatmul.mubr.bf16.gmra.mrb[0].mxu0 %v1128
        %v1340 = vpop.f32.mrb[0].mxu0
        %v1341 = vadd.f32 0.0, %v1340
        %v1342 = vpop.f32.mrb[0].mxu0
        %v1343 = vadd.f32 0.0, %v1342
        %v1344 = vpop.f32.mrb[0].mxu0
        %v1345 = vadd.f32 0.0, %v1344
        %v1346 = vpop.f32.mrb[0].mxu0
        %v1347 = vadd.f32 0.0, %v1346
        %1348 = vmatprep.mubr.bf16.mxu0 %v1159
        %1349 = vmatmul.mubr.bf16.gmra.mrb[0].mxu0 %v1130
        %v1350 = vpop.f32.mrb[0].mxu0
        %v1351 = vadd.f32 0.0, %v1350
        %v1352 = vpop.f32.mrb[0].mxu0
        %v1353 = vadd.f32 0.0, %v1352
        %v1354 = vpop.f32.mrb[0].mxu0
        %v1355 = vadd.f32 0.0, %v1354
        %v1356 = vpop.f32.mrb[0].mxu0
        %v1357 = vadd.f32 0.0, %v1356
        %1358 = vmatprep.mubr.bf16.mxu0 %v1162
        %1359 = vmatmul.mubr.bf16.gmra.mrb[0].mxu0 %v1132
        %v1360 = vpop.f32.mrb[0].mxu0
        %v1361 = vadd.f32 0.0, %v1360
        %v1362 = vpop.f32.mrb[0].mxu0
        %v1363 = vadd.f32 0.0, %v1362
        %v1364 = vpop.f32.mrb[0].mxu0
        %v1365 = vadd.f32 0.0, %v1364
        %v1366 = vpop.f32.mrb[0].mxu0
        %v1367 = vadd.f32 0.0, %v1366
        %1368 = vmatprep.mubr.bf16.mxu0 %v1165
        %1369 = vmatmul.mubr.bf16.gmra.mrb[0].mxu0 %v1134
        %v1370 = vpop.f32.mrb[0].mxu0
        %v1371 = vadd.f32 0.0, %v1370
        %v1372 = vpop.f32.mrb[0].mxu0
        %v1373 = vadd.f32 0.0, %v1372
        %v1374 = vpop.f32.mrb[0].mxu0
        %v1375 = vadd.f32 0.0, %v1374
        %v1376 = vpop.f32.mrb[0].mxu0
        %v1377 = vadd.f32 0.0, %v1376
        %1378 = vmatprep.mubr.bf16.mxu0 %v1168
        %1379 = vmatmul.mubr.bf16.gmra.mrb[0].mxu0 %v1136
        %v1380 = vpop.f32.mrb[0].mxu0
        %v1381 = vadd.f32 0.0, %v1380
        %v1382 = vpop.f32.mrb[0].mxu0
        %v1383 = vadd.f32 0.0, %v1382
        %v1384 = vpop.f32.mrb[0].mxu0
        %v1385 = vadd.f32 0.0, %v1384
        %v1386 = vpop.f32.mrb[0].mxu0
        %v1387 = vadd.f32 0.0, %v1386
        %1388 = vmatprep.mubr.bf16.mxu0 %v1171
        %1389 = vmatmul.mubr.bf16.gmra.mrb[0].mxu0 %v1138
        %v1390 = vpop.f32.mrb[0].mxu0
        %v1391 = vadd.f32 0.0, %v1390
        %v1392 = vpop.f32.mrb[0].mxu0
        %v1393 = vadd.f32 0.0, %v1392
        %v1394 = vpop.f32.mrb[0].mxu0
        %v1395 = vadd.f32 0.0, %v1394
        %v1396 = vpop.f32.mrb[0].mxu0
        %v1397 = vadd.f32 0.0, %v1396
        %1398 = vdwg.mxu0
        %v1399 = vpack.c.bf16 %v1212, %v1208
        %v1400 = vpack.c.bf16 %v1214, %v1210
        %v1401 = vpack.c.bf16 %v1325, %v1321
        %v1402 = vpack.c.bf16 %v1327, %v1323
        %v1403 = vpack.c.bf16 %v1222, %v1218
        %v1404 = vpack.c.bf16 %v1224, %v1220
        %v1405 = vpack.c.bf16 %v1335, %v1331
        %v1406 = vpack.c.bf16 %v1337, %v1333
        %v1407 = vpack.c.bf16 %v1232, %v1228
        %v1408 = vpack.c.bf16 %v1234, %v1230
        %v1409 = vpack.c.bf16 %v1345, %v1341
        %v1410 = vpack.c.bf16 %v1347, %v1343
        %v1411 = vpack.c.bf16 %v1242, %v1238
        %v1412 = vpack.c.bf16 %v1244, %v1240
        %v1413 = vpack.c.bf16 %v1355, %v1351
        %v1414 = vpack.c.bf16 %v1357, %v1353
        %v1415 = vpack.c.bf16 %v1252, %v1248
        %v1416 = vpack.c.bf16 %v1254, %v1250
        %v1417 = vpack.c.bf16 %v1365, %v1361
        %v1418 = vpack.c.bf16 %v1367, %v1363
        %v1419 = vpack.c.bf16 %v1262, %v1258
        %v1420 = vpack.c.bf16 %v1264, %v1260
        %v1421 = vpack.c.bf16 %v1375, %v1371
        %v1422 = vpack.c.bf16 %v1377, %v1373
        %v1423 = vpack.c.bf16 %v1272, %v1268
        %v1424 = vpack.c.bf16 %v1274, %v1270
        %v1425 = vpack.c.bf16 %v1385, %v1381
        %v1426 = vpack.c.bf16 %v1387, %v1383
        %v1427 = vpack.c.bf16 %v1282, %v1278
        %v1428 = vpack.c.bf16 %v1284, %v1280
        %v1429 = vpack.c.bf16 %v1395, %v1391
        %v1430 = vpack.c.bf16 %v1397, %v1393
        %v1431 = vld [vmem:[%s4] sm:$0xf]
        %v1432 = vld [vmem:[%s4 + $0x4] sm:$0xf]
        %v1433 = vld [vmem:[%s4 + $0x8] sm:$0xf]
        %v1434 = vld [vmem:[%s4 + $0xc] sm:$0xf]
        %v1435 = vld [vmem:[%s4 + $0x10] sm:$0xf]
        %v1436 = vld [vmem:[%s4 + $0x14] sm:$0xf]
        %v1437 = vld [vmem:[%s4 + $0x18] sm:$0xf]
        %v1438 = vld [vmem:[%s4 + $0x1c] sm:$0xf]
        %v1439 = vld [vmem:[%s4 + $0x20] sm:$0xf]
        %v1440 = vld [vmem:[%s4 + $0x24] sm:$0xf]
        %v1441 = vld [vmem:[%s4 + $0x28] sm:$0xf]
        %v1442 = vld [vmem:[%s4 + $0x2c] sm:$0xf]
        %v1443 = vld [vmem:[%s4 + $0x30] sm:$0xf]
        %v1444 = vld [vmem:[%s4 + $0x34] sm:$0xf]
        %v1445 = vld [vmem:[%s4 + $0x38] sm:$0xf]
        %v1446 = vld [vmem:[%s4 + $0x3c] sm:$0xf]
        %1448 = vset.pattern.permute.xlu0 0
        %1449 = vperm.xlu0 %1448, %v1431
        %v1450 = vpop.permute.xlu0 %1449
        %v1453 = vunpack.c.l.s4 839922192
        %v1454 = vunpack.c.0.s8 %v1453
        %v1455 = vlaneseq
        %v1456 = vshrl.u32 %v1455, 7
        %v1457 = vsub.s32 %v1454, %v1456
        %v1458 = vrot.slane %v1450, %v1457
        %1460 = vset.pattern.permute.xlu0 0
        %1461 = vperm.xlu0 %1460, %v1432
        %v1462 = vpop.permute.xlu0 %1461
        %v1465 = vunpack.c.l.s4 839922192
        %v1466 = vunpack.c.0.s8 %v1465
        %v1467 = vlaneseq
        %v1468 = vshrl.u32 %v1467, 7
        %v1469 = vsub.s32 %v1466, %v1468
        %v1470 = vrot.slane %v1462, %v1469
        %1472 = vset.pattern.permute.xlu0 0
        %1473 = vperm.xlu0 %1472, %v1433
        %v1474 = vpop.permute.xlu0 %1473
        %v1477 = vunpack.c.l.s4 839922192
        %v1478 = vunpack.c.0.s8 %v1477
        %v1479 = vlaneseq
        %v1480 = vshrl.u32 %v1479, 7
        %v1481 = vsub.s32 %v1478, %v1480
        %v1482 = vrot.slane %v1474, %v1481
        %1484 = vset.pattern.permute.xlu0 0
        %1485 = vperm.xlu0 %1484, %v1434
        %v1486 = vpop.permute.xlu0 %1485
        %v1489 = vunpack.c.l.s4 839922192
        %v1490 = vunpack.c.0.s8 %v1489
        %v1491 = vlaneseq
        %v1492 = vshrl.u32 %v1491, 7
        %v1493 = vsub.s32 %v1490, %v1492
        %v1494 = vrot.slane %v1486, %v1493
        %1496 = vset.pattern.permute.xlu0 0
        %1497 = vperm.xlu0 %1496, %v1435
        %v1498 = vpop.permute.xlu0 %1497
        %v1501 = vunpack.c.l.s4 839922192
        %v1502 = vunpack.c.0.s8 %v1501
        %v1503 = vlaneseq
        %v1504 = vshrl.u32 %v1503, 7
        %v1505 = vsub.s32 %v1502, %v1504
        %v1506 = vrot.slane %v1498, %v1505
        %1508 = vset.pattern.permute.xlu0 0
        %1509 = vperm.xlu0 %1508, %v1436
        %v1510 = vpop.permute.xlu0 %1509
        %v1513 = vunpack.c.l.s4 839922192
        %v1514 = vunpack.c.0.s8 %v1513
        %v1515 = vlaneseq
        %v1516 = vshrl.u32 %v1515, 7
        %v1517 = vsub.s32 %v1514, %v1516
        %v1518 = vrot.slane %v1510, %v1517
        %1520 = vset.pattern.permute.xlu0 0
        %1521 = vperm.xlu0 %1520, %v1437
        %v1522 = vpop.permute.xlu0 %1521
        %v1525 = vunpack.c.l.s4 839922192
        %v1526 = vunpack.c.0.s8 %v1525
        %v1527 = vlaneseq
        %v1528 = vshrl.u32 %v1527, 7
        %v1529 = vsub.s32 %v1526, %v1528
        %v1530 = vrot.slane %v1522, %v1529
        %1532 = vset.pattern.permute.xlu0 0
        %1533 = vperm.xlu0 %1532, %v1438
        %v1534 = vpop.permute.xlu0 %1533
        %v1537 = vunpack.c.l.s4 839922192
        %v1538 = vunpack.c.0.s8 %v1537
        %v1539 = vlaneseq
        %v1540 = vshrl.u32 %v1539, 7
        %v1541 = vsub.s32 %v1538, %v1540
        %v1542 = vrot.slane %v1534, %v1541
        %1544 = vset.pattern.permute.xlu0 0
        %1545 = vperm.xlu0 %1544, %v1439
        %v1546 = vpop.permute.xlu0 %1545
        %v1549 = vunpack.c.l.s4 839922192
        %v1550 = vunpack.c.0.s8 %v1549
        %v1551 = vlaneseq
        %v1552 = vshrl.u32 %v1551, 7
        %v1553 = vsub.s32 %v1550, %v1552
        %v1554 = vrot.slane %v1546, %v1553
        %1556 = vset.pattern.permute.xlu0 0
        %1557 = vperm.xlu0 %1556, %v1440
        %v1558 = vpop.permute.xlu0 %1557
        %v1561 = vunpack.c.l.s4 839922192
        %v1562 = vunpack.c.0.s8 %v1561
        %v1563 = vlaneseq
        %v1564 = vshrl.u32 %v1563, 7
        %v1565 = vsub.s32 %v1562, %v1564
        %v1566 = vrot.slane %v1558, %v1565
        %1568 = vset.pattern.permute.xlu0 0
        %1569 = vperm.xlu0 %1568, %v1441
        %v1570 = vpop.permute.xlu0 %1569
        %v1573 = vunpack.c.l.s4 839922192
        %v1574 = vunpack.c.0.s8 %v1573
        %v1575 = vlaneseq
        %v1576 = vshrl.u32 %v1575, 7
        %v1577 = vsub.s32 %v1574, %v1576
        %v1578 = vrot.slane %v1570, %v1577
        %1580 = vset.pattern.permute.xlu0 0
        %1581 = vperm.xlu0 %1580, %v1442
        %v1582 = vpop.permute.xlu0 %1581
        %v1585 = vunpack.c.l.s4 839922192
        %v1586 = vunpack.c.0.s8 %v1585
        %v1587 = vlaneseq
        %v1588 = vshrl.u32 %v1587, 7
        %v1589 = vsub.s32 %v1586, %v1588
        %v1590 = vrot.slane %v1582, %v1589
        %1592 = vset.pattern.permute.xlu0 0
        %1593 = vperm.xlu0 %1592, %v1443
        %v1594 = vpop.permute.xlu0 %1593
        %v1597 = vunpack.c.l.s4 839922192
        %v1598 = vunpack.c.0.s8 %v1597
        %v1599 = vlaneseq
        %v1600 = vshrl.u32 %v1599, 7
        %v1601 = vsub.s32 %v1598, %v1600
        %v1602 = vrot.slane %v1594, %v1601
        %1604 = vset.pattern.permute.xlu0 0
        %1605 = vperm.xlu0 %1604, %v1444
        %v1606 = vpop.permute.xlu0 %1605
        %v1609 = vunpack.c.l.s4 839922192
        %v1610 = vunpack.c.0.s8 %v1609
        %v1611 = vlaneseq
        %v1612 = vshrl.u32 %v1611, 7
        %v1613 = vsub.s32 %v1610, %v1612
        %v1614 = vrot.slane %v1606, %v1613
        %1616 = vset.pattern.permute.xlu0 0
        %1617 = vperm.xlu0 %1616, %v1445
        %v1618 = vpop.permute.xlu0 %1617
        %v1621 = vunpack.c.l.s4 839922192
        %v1622 = vunpack.c.0.s8 %v1621
        %v1623 = vlaneseq
        %v1624 = vshrl.u32 %v1623, 7
        %v1625 = vsub.s32 %v1622, %v1624
        %v1626 = vrot.slane %v1618, %v1625
        %1628 = vset.pattern.permute.xlu0 0
        %1629 = vperm.xlu0 %1628, %v1446
        %v1630 = vpop.permute.xlu0 %1629
        %v1633 = vunpack.c.l.s4 839922192
        %v1634 = vunpack.c.0.s8 %v1633
        %v1635 = vlaneseq
        %v1636 = vshrl.u32 %v1635, 7
        %v1637 = vsub.s32 %v1634, %v1636
        %v1638 = vrot.slane %v1630, %v1637
        %v1655 = vunpack.c.l.b16 %v1458
        %v1656 = vunpack.c.l.b16 %v1470
        %v1657 = vunpack.c.l.b16 %v1482
        %v1658 = vunpack.c.l.b16 %v1494
        %v1659 = vunpack.c.l.b16 %v1506
        %v1660 = vunpack.c.l.b16 %v1518
        %v1661 = vunpack.c.l.b16 %v1530
        %v1662 = vunpack.c.l.b16 %v1542
        %v1663 = vunpack.c.l.b16 %v1554
        %v1664 = vunpack.c.l.b16 %v1566
        %v1665 = vunpack.c.l.b16 %v1578
        %v1666 = vunpack.c.l.b16 %v1590
        %v1667 = vunpack.c.l.b16 %v1602
        %v1668 = vunpack.c.l.b16 %v1614
        %v1669 = vunpack.c.l.b16 %v1626
        %v1670 = vunpack.c.l.b16 %v1638
        %v1671 = vpack.c.b16 %v1656, %v1655
        %v1672 = vpack.c.b16 %v1658, %v1657
        %v1673 = vpack.c.b16 %v1660, %v1659
        %v1674 = vpack.c.b16 %v1662, %v1661
        %v1675 = vpack.c.b16 %v1664, %v1663
        %v1676 = vpack.c.b16 %v1666, %v1665
        %v1677 = vpack.c.b16 %v1668, %v1667
        %v1678 = vpack.c.b16 %v1670, %v1669
        %v1687 = vadd.bf16 %v1399, %v1671
        %v1688 = vadd.bf16 %v1400, %v1671
        %v1689 = vadd.bf16 %v1401, %v1671
        %v1690 = vadd.bf16 %v1402, %v1671
        %v1691 = vadd.bf16 %v1403, %v1672
        %v1692 = vadd.bf16 %v1404, %v1672
        %v1693 = vadd.bf16 %v1405, %v1672
        %v1694 = vadd.bf16 %v1406, %v1672
        %v1695 = vadd.bf16 %v1407, %v1673
        %v1696 = vadd.bf16 %v1408, %v1673
        %v1697 = vadd.bf16 %v1409, %v1673
        %v1698 = vadd.bf16 %v1410, %v1673
        %v1699 = vadd.bf16 %v1411, %v1674
        %v1700 = vadd.bf16 %v1412, %v1674
        %v1701 = vadd.bf16 %v1413, %v1674
        %v1702 = vadd.bf16 %v1414, %v1674
        %v1703 = vadd.bf16 %v1415, %v1675
        %v1704 = vadd.bf16 %v1416, %v1675
        %v1705 = vadd.bf16 %v1417, %v1675
        %v1706 = vadd.bf16 %v1418, %v1675
        %v1707 = vadd.bf16 %v1419, %v1676
        %v1708 = vadd.bf16 %v1420, %v1676
        %v1709 = vadd.bf16 %v1421, %v1676
        %v1710 = vadd.bf16 %v1422, %v1676
        %v1711 = vadd.bf16 %v1423, %v1677
        %v1712 = vadd.bf16 %v1424, %v1677
        %v1713 = vadd.bf16 %v1425, %v1677
        %v1714 = vadd.bf16 %v1426, %v1677
        %v1715 = vadd.bf16 %v1427, %v1678
        %v1716 = vadd.bf16 %v1428, %v1678
        %v1717 = vadd.bf16 %v1429, %v1678
        %v1718 = vadd.bf16 %v1430, %v1678
        %v1719 = vmax.bf16 %v1687, 0
        %v1720 = vmax.bf16 %v1688, 0
        %v1721 = vmax.bf16 %v1689, 0
        %v1722 = vmax.bf16 %v1690, 0
        %v1723 = vmax.bf16 %v1691, 0
        %v1724 = vmax.bf16 %v1692, 0
        %v1725 = vmax.bf16 %v1693, 0
        %v1726 = vmax.bf16 %v1694, 0
        %v1727 = vmax.bf16 %v1695, 0
        %v1728 = vmax.bf16 %v1696, 0
        %v1729 = vmax.bf16 %v1697, 0
        %v1730 = vmax.bf16 %v1698, 0
        %v1731 = vmax.bf16 %v1699, 0
        %v1732 = vmax.bf16 %v1700, 0
        %v1733 = vmax.bf16 %v1701, 0
        %v1734 = vmax.bf16 %v1702, 0
        %v1735 = vmax.bf16 %v1703, 0
        %v1736 = vmax.bf16 %v1704, 0
        %v1737 = vmax.bf16 %v1705, 0
        %v1738 = vmax.bf16 %v1706, 0
        %v1739 = vmax.bf16 %v1707, 0
        %v1740 = vmax.bf16 %v1708, 0
        %v1741 = vmax.bf16 %v1709, 0
        %v1742 = vmax.bf16 %v1710, 0
        %v1743 = vmax.bf16 %v1711, 0
        %v1744 = vmax.bf16 %v1712, 0
        %v1745 = vmax.bf16 %v1713, 0
        %v1746 = vmax.bf16 %v1714, 0
        %v1747 = vmax.bf16 %v1715, 0
        %v1748 = vmax.bf16 %v1716, 0
        %v1749 = vmax.bf16 %v1717, 0
        %v1750 = vmax.bf16 %v1718, 0
        %1783 = vrot.lane.b32.xlu0 %v1719, 127
        %v1784 = vpop.permute.xlu0 %1783
        %1785 = vrot.lane.b32.xlu0 %v1720, 127
        %v1786 = vpop.permute.xlu0 %1785
        %1787 = vrot.lane.b32.xlu0 %v1721, 127
        %v1788 = vpop.permute.xlu0 %1787
        %1789 = vrot.lane.b32.xlu0 %v1722, 127
        %v1790 = vpop.permute.xlu0 %1789
        %1791 = vrot.lane.b32.xlu0 %v1723, 127
        %v1792 = vpop.permute.xlu0 %1791
        %1793 = vrot.lane.b32.xlu0 %v1724, 127
        %v1794 = vpop.permute.xlu0 %1793
        %1795 = vrot.lane.b32.xlu0 %v1725, 127
        %v1796 = vpop.permute.xlu0 %1795
        %1797 = vrot.lane.b32.xlu0 %v1726, 127
        %v1798 = vpop.permute.xlu0 %1797
        %1799 = vrot.lane.b32.xlu0 %v1727, 127
        %v1800 = vpop.permute.xlu0 %1799
        %1801 = vrot.lane.b32.xlu0 %v1728, 127
        %v1802 = vpop.permute.xlu0 %1801
        %1803 = vrot.lane.b32.xlu0 %v1729, 127
        %v1804 = vpop.permute.xlu0 %1803
        %1805 = vrot.lane.b32.xlu0 %v1730, 127
        %v1806 = vpop.permute.xlu0 %1805
        %1807 = vrot.lane.b32.xlu0 %v1731, 127
        %v1808 = vpop.permute.xlu0 %1807
        %1809 = vrot.lane.b32.xlu0 %v1732, 127
        %v1810 = vpop.permute.xlu0 %1809
        %1811 = vrot.lane.b32.xlu0 %v1733, 127
        %v1812 = vpop.permute.xlu0 %1811
        %1813 = vrot.lane.b32.xlu0 %v1734, 127
        %v1814 = vpop.permute.xlu0 %1813
        %1815 = vrot.lane.b32.xlu0 %v1735, 127
        %v1816 = vpop.permute.xlu0 %1815
        %1817 = vrot.lane.b32.xlu0 %v1736, 127
        %v1818 = vpop.permute.xlu0 %1817
        %1819 = vrot.lane.b32.xlu0 %v1737, 127
        %v1820 = vpop.permute.xlu0 %1819
        %1821 = vrot.lane.b32.xlu0 %v1738, 127
        %v1822 = vpop.permute.xlu0 %1821
        %1823 = vrot.lane.b32.xlu0 %v1739, 127
        %v1824 = vpop.permute.xlu0 %1823
        %1825 = vrot.lane.b32.xlu0 %v1740, 127
        %v1826 = vpop.permute.xlu0 %1825
        %1827 = vrot.lane.b32.xlu0 %v1741, 127
        %v1828 = vpop.permute.xlu0 %1827
        %1829 = vrot.lane.b32.xlu0 %v1742, 127
        %v1830 = vpop.permute.xlu0 %1829
        %1831 = vrot.lane.b32.xlu0 %v1743, 127
        %v1832 = vpop.permute.xlu0 %1831
        %1833 = vrot.lane.b32.xlu0 %v1744, 127
        %v1834 = vpop.permute.xlu0 %1833
        %1835 = vrot.lane.b32.xlu0 %v1745, 127
        %v1836 = vpop.permute.xlu0 %1835
        %1837 = vrot.lane.b32.xlu0 %v1746, 127
        %v1838 = vpop.permute.xlu0 %1837
        %1839 = vrot.lane.b32.xlu0 %v1747, 127
        %v1840 = vpop.permute.xlu0 %1839
        %1841 = vrot.lane.b32.xlu0 %v1748, 127
        %v1842 = vpop.permute.xlu0 %1841
        %1843 = vrot.lane.b32.xlu0 %v1749, 127
        %v1844 = vpop.permute.xlu0 %1843
        %1845 = vrot.lane.b32.xlu0 %v1750, 127
        %v1846 = vpop.permute.xlu0 %1845
        %v1847 = vsel %vm445, %v1784, %v1786
        %v1848 = vsel %vm445, %v1786, %v1788
        %v1849 = vsel %vm445, %v1788, %v1790
        %v1850 = vsel %vm445, %v1792, %v1794
        %v1851 = vsel %vm445, %v1794, %v1796
        %v1852 = vsel %vm445, %v1796, %v1798
        %v1853 = vsel %vm445, %v1800, %v1802
        %v1854 = vsel %vm445, %v1802, %v1804
        %v1855 = vsel %vm445, %v1804, %v1806
        %v1856 = vsel %vm445, %v1808, %v1810
        %v1857 = vsel %vm445, %v1810, %v1812
        %v1858 = vsel %vm445, %v1812, %v1814
        %v1859 = vsel %vm445, %v1816, %v1818
        %v1860 = vsel %vm445, %v1818, %v1820
        %v1861 = vsel %vm445, %v1820, %v1822
        %v1862 = vsel %vm445, %v1824, %v1826
        %v1863 = vsel %vm445, %v1826, %v1828
        %v1864 = vsel %vm445, %v1828, %v1830
        %v1865 = vsel %vm445, %v1832, %v1834
        %v1866 = vsel %vm445, %v1834, %v1836
        %v1867 = vsel %vm445, %v1836, %v1838
        %v1868 = vsel %vm445, %v1840, %v1842
        %v1869 = vsel %vm445, %v1842, %v1844
        %v1870 = vsel %vm445, %v1844, %v1846
        %v1903 = vmax.bf16 %v1719, %v1847
        %v1904 = vmax.bf16 %v1720, %v1848
        %v1905 = vmax.bf16 %v1721, %v1849
        %v1906 = vmax.bf16 %v1722, %v1790
        %v1907 = vmax.bf16 %v1723, %v1850
        %v1908 = vmax.bf16 %v1724, %v1851
        %v1909 = vmax.bf16 %v1725, %v1852
        %v1910 = vmax.bf16 %v1726, %v1798
        %v1911 = vmax.bf16 %v1727, %v1853
        %v1912 = vmax.bf16 %v1728, %v1854
        %v1913 = vmax.bf16 %v1729, %v1855
        %v1914 = vmax.bf16 %v1730, %v1806
        %v1915 = vmax.bf16 %v1731, %v1856
        %v1916 = vmax.bf16 %v1732, %v1857
        %v1917 = vmax.bf16 %v1733, %v1858
        %v1918 = vmax.bf16 %v1734, %v1814
        %v1919 = vmax.bf16 %v1735, %v1859
        %v1920 = vmax.bf16 %v1736, %v1860
        %v1921 = vmax.bf16 %v1737, %v1861
        %v1922 = vmax.bf16 %v1738, %v1822
        %v1923 = vmax.bf16 %v1739, %v1862
        %v1924 = vmax.bf16 %v1740, %v1863
        %v1925 = vmax.bf16 %v1741, %v1864
        %v1926 = vmax.bf16 %v1742, %v1830
        %v1927 = vmax.bf16 %v1743, %v1865
        %v1928 = vmax.bf16 %v1744, %v1866
        %v1929 = vmax.bf16 %v1745, %v1867
        %v1930 = vmax.bf16 %v1746, %v1838
        %v1931 = vmax.bf16 %v1747, %v1868
        %v1932 = vmax.bf16 %v1748, %v1869
        %v1933 = vmax.bf16 %v1749, %v1870
        %v1934 = vmax.bf16 %v1750, %v1846
        %1967 = vrot.lane.b32.xlu0 %v1903, 127
        %v1968 = vpop.permute.xlu0 %1967
        %1969 = vrot.lane.b32.xlu0 %v1904, 127
        %v1970 = vpop.permute.xlu0 %1969
        %1971 = vrot.lane.b32.xlu0 %v1905, 127
        %v1972 = vpop.permute.xlu0 %1971
        %1973 = vrot.lane.b32.xlu0 %v1906, 127
        %v1974 = vpop.permute.xlu0 %1973
        %1975 = vrot.lane.b32.xlu0 %v1907, 127
        %v1976 = vpop.permute.xlu0 %1975
        %1977 = vrot.lane.b32.xlu0 %v1908, 127
        %v1978 = vpop.permute.xlu0 %1977
        %1979 = vrot.lane.b32.xlu0 %v1909, 127
        %v1980 = vpop.permute.xlu0 %1979
        %1981 = vrot.lane.b32.xlu0 %v1910, 127
        %v1982 = vpop.permute.xlu0 %1981
        %1983 = vrot.lane.b32.xlu0 %v1911, 127
        %v1984 = vpop.permute.xlu0 %1983
        %1985 = vrot.lane.b32.xlu0 %v1912, 127
        %v1986 = vpop.permute.xlu0 %1985
        %1987 = vrot.lane.b32.xlu0 %v1913, 127
        %v1988 = vpop.permute.xlu0 %1987
        %1989 = vrot.lane.b32.xlu0 %v1914, 127
        %v1990 = vpop.permute.xlu0 %1989
        %1991 = vrot.lane.b32.xlu0 %v1915, 127
        %v1992 = vpop.permute.xlu0 %1991
        %1993 = vrot.lane.b32.xlu0 %v1916, 127
        %v1994 = vpop.permute.xlu0 %1993
        %1995 = vrot.lane.b32.xlu0 %v1917, 127
        %v1996 = vpop.permute.xlu0 %1995
        %1997 = vrot.lane.b32.xlu0 %v1918, 127
        %v1998 = vpop.permute.xlu0 %1997
        %1999 = vrot.lane.b32.xlu0 %v1919, 127
        %v2000 = vpop.permute.xlu0 %1999
        %2001 = vrot.lane.b32.xlu0 %v1920, 127
        %v2002 = vpop.permute.xlu0 %2001
        %2003 = vrot.lane.b32.xlu0 %v1921, 127
        %v2004 = vpop.permute.xlu0 %2003
        %2005 = vrot.lane.b32.xlu0 %v1922, 127
        %v2006 = vpop.permute.xlu0 %2005
        %2007 = vrot.lane.b32.xlu0 %v1923, 127
        %v2008 = vpop.permute.xlu0 %2007
        %2009 = vrot.lane.b32.xlu0 %v1924, 127
        %v2010 = vpop.permute.xlu0 %2009
        %2011 = vrot.lane.b32.xlu0 %v1925, 127
        %v2012 = vpop.permute.xlu0 %2011
        %2013 = vrot.lane.b32.xlu0 %v1926, 127
        %v2014 = vpop.permute.xlu0 %2013
        %2015 = vrot.lane.b32.xlu0 %v1927, 127
        %v2016 = vpop.permute.xlu0 %2015
        %2017 = vrot.lane.b32.xlu0 %v1928, 127
        %v2018 = vpop.permute.xlu0 %2017
        %2019 = vrot.lane.b32.xlu0 %v1929, 127
        %v2020 = vpop.permute.xlu0 %2019
        %2021 = vrot.lane.b32.xlu0 %v1930, 127
        %v2022 = vpop.permute.xlu0 %2021
        %2023 = vrot.lane.b32.xlu0 %v1931, 127
        %v2024 = vpop.permute.xlu0 %2023
        %2025 = vrot.lane.b32.xlu0 %v1932, 127
        %v2026 = vpop.permute.xlu0 %2025
        %2027 = vrot.lane.b32.xlu0 %v1933, 127
        %v2028 = vpop.permute.xlu0 %2027
        %2029 = vrot.lane.b32.xlu0 %v1934, 127
        %v2030 = vpop.permute.xlu0 %2029
        %v2031 = vsel %vm445, %v1968, %v1970
        %v2032 = vsel %vm445, %v1970, %v1972
        %v2033 = vsel %vm445, %v1972, %v1974
        %v2034 = vsel %vm445, %v1976, %v1978
        %v2035 = vsel %vm445, %v1978, %v1980
        %v2036 = vsel %vm445, %v1980, %v1982
        %v2037 = vsel %vm445, %v1984, %v1986
        %v2038 = vsel %vm445, %v1986, %v1988
        %v2039 = vsel %vm445, %v1988, %v1990
        %v2040 = vsel %vm445, %v1992, %v1994
        %v2041 = vsel %vm445, %v1994, %v1996
        %v2042 = vsel %vm445, %v1996, %v1998
        %v2043 = vsel %vm445, %v2000, %v2002
        %v2044 = vsel %vm445, %v2002, %v2004
        %v2045 = vsel %vm445, %v2004, %v2006
        %v2046 = vsel %vm445, %v2008, %v2010
        %v2047 = vsel %vm445, %v2010, %v2012
        %v2048 = vsel %vm445, %v2012, %v2014
        %v2049 = vsel %vm445, %v2016, %v2018
        %v2050 = vsel %vm445, %v2018, %v2020
        %v2051 = vsel %vm445, %v2020, %v2022
        %v2052 = vsel %vm445, %v2024, %v2026
        %v2053 = vsel %vm445, %v2026, %v2028
        %v2054 = vsel %vm445, %v2028, %v2030
        %2087 = vrot.lane.b32.xlu0 %v1903, 126
        %v2088 = vpop.permute.xlu0 %2087
        %2089 = vrot.lane.b32.xlu0 %v1904, 126
        %v2090 = vpop.permute.xlu0 %2089
        %2091 = vrot.lane.b32.xlu0 %v1905, 126
        %v2092 = vpop.permute.xlu0 %2091
        %2093 = vrot.lane.b32.xlu0 %v1906, 126
        %v2094 = vpop.permute.xlu0 %2093
        %2095 = vrot.lane.b32.xlu0 %v1907, 126
        %v2096 = vpop.permute.xlu0 %2095
        %2097 = vrot.lane.b32.xlu0 %v1908, 126
        %v2098 = vpop.permute.xlu0 %2097
        %2099 = vrot.lane.b32.xlu0 %v1909, 126
        %v2100 = vpop.permute.xlu0 %2099
        %2101 = vrot.lane.b32.xlu0 %v1910, 126
        %v2102 = vpop.permute.xlu0 %2101
        %2103 = vrot.lane.b32.xlu0 %v1911, 126
        %v2104 = vpop.permute.xlu0 %2103
        %2105 = vrot.lane.b32.xlu0 %v1912, 126
        %v2106 = vpop.permute.xlu0 %2105
        %2107 = vrot.lane.b32.xlu0 %v1913, 126
        %v2108 = vpop.permute.xlu0 %2107
        %2109 = vrot.lane.b32.xlu0 %v1914, 126
        %v2110 = vpop.permute.xlu0 %2109
        %2111 = vrot.lane.b32.xlu0 %v1915, 126
        %v2112 = vpop.permute.xlu0 %2111
        %2113 = vrot.lane.b32.xlu0 %v1916, 126
        %v2114 = vpop.permute.xlu0 %2113
        %2115 = vrot.lane.b32.xlu0 %v1917, 126
        %v2116 = vpop.permute.xlu0 %2115
        %2117 = vrot.lane.b32.xlu0 %v1918, 126
        %v2118 = vpop.permute.xlu0 %2117
        %2119 = vrot.lane.b32.xlu0 %v1919, 126
        %v2120 = vpop.permute.xlu0 %2119
        %2121 = vrot.lane.b32.xlu0 %v1920, 126
        %v2122 = vpop.permute.xlu0 %2121
        %2123 = vrot.lane.b32.xlu0 %v1921, 126
        %v2124 = vpop.permute.xlu0 %2123
        %2125 = vrot.lane.b32.xlu0 %v1922, 126
        %v2126 = vpop.permute.xlu0 %2125
        %2127 = vrot.lane.b32.xlu0 %v1923, 126
        %v2128 = vpop.permute.xlu0 %2127
        %2129 = vrot.lane.b32.xlu0 %v1924, 126
        %v2130 = vpop.permute.xlu0 %2129
        %2131 = vrot.lane.b32.xlu0 %v1925, 126
        %v2132 = vpop.permute.xlu0 %2131
        %2133 = vrot.lane.b32.xlu0 %v1926, 126
        %v2134 = vpop.permute.xlu0 %2133
        %2135 = vrot.lane.b32.xlu0 %v1927, 126
        %v2136 = vpop.permute.xlu0 %2135
        %2137 = vrot.lane.b32.xlu0 %v1928, 126
        %v2138 = vpop.permute.xlu0 %2137
        %2139 = vrot.lane.b32.xlu0 %v1929, 126
        %v2140 = vpop.permute.xlu0 %2139
        %2141 = vrot.lane.b32.xlu0 %v1930, 126
        %v2142 = vpop.permute.xlu0 %2141
        %2143 = vrot.lane.b32.xlu0 %v1931, 126
        %v2144 = vpop.permute.xlu0 %2143
        %2145 = vrot.lane.b32.xlu0 %v1932, 126
        %v2146 = vpop.permute.xlu0 %2145
        %2147 = vrot.lane.b32.xlu0 %v1933, 126
        %v2148 = vpop.permute.xlu0 %2147
        %2149 = vrot.lane.b32.xlu0 %v1934, 126
        %v2150 = vpop.permute.xlu0 %2149
        %v2151 = vsel %vm461, %v2088, %v2090
        %v2152 = vsel %vm461, %v2090, %v2092
        %v2153 = vsel %vm461, %v2092, %v2094
        %v2154 = vsel %vm461, %v2096, %v2098
        %v2155 = vsel %vm461, %v2098, %v2100
        %v2156 = vsel %vm461, %v2100, %v2102
        %v2157 = vsel %vm461, %v2104, %v2106
        %v2158 = vsel %vm461, %v2106, %v2108
        %v2159 = vsel %vm461, %v2108, %v2110
        %v2160 = vsel %vm461, %v2112, %v2114
        %v2161 = vsel %vm461, %v2114, %v2116
        %v2162 = vsel %vm461, %v2116, %v2118
        %v2163 = vsel %vm461, %v2120, %v2122
        %v2164 = vsel %vm461, %v2122, %v2124
        %v2165 = vsel %vm461, %v2124, %v2126
        %v2166 = vsel %vm461, %v2128, %v2130
        %v2167 = vsel %vm461, %v2130, %v2132
        %v2168 = vsel %vm461, %v2132, %v2134
        %v2169 = vsel %vm461, %v2136, %v2138
        %v2170 = vsel %vm461, %v2138, %v2140
        %v2171 = vsel %vm461, %v2140, %v2142
        %v2172 = vsel %vm461, %v2144, %v2146
        %v2173 = vsel %vm461, %v2146, %v2148
        %v2174 = vsel %vm461, %v2148, %v2150
        %v2207 = vld [vmem:[%s5] sm:$0xff]
        %v2208 = vld [vmem:[%s5 + $0x8] sm:$0xf]
        %v2209 = vld [vmem:[%s5 + $0xc] sm:$0xff]
        %v2210 = vld [vmem:[%s5 + $0x14] sm:$0xf]
        %v2211 = vld [vmem:[%s5 + $0x18] sm:$0xff]
        %v2212 = vld [vmem:[%s5 + $0x20] sm:$0xf]
        %v2213 = vld [vmem:[%s5 + $0x24] sm:$0xff]
        %v2214 = vld [vmem:[%s5 + $0x2c] sm:$0xf]
        %v2215 = vld [vmem:[%s5 + $0x30] sm:$0xff]
        %v2216 = vld [vmem:[%s5 + $0x38] sm:$0xf]
        %v2217 = vld [vmem:[%s5 + $0x3c] sm:$0xff]
        %v2218 = vld [vmem:[%s5 + $0x44] sm:$0xf]
        %v2219 = vld [vmem:[%s5 + $0x48] sm:$0xff]
        %v2220 = vld [vmem:[%s5 + $0x50] sm:$0xf]
        %v2221 = vld [vmem:[%s5 + $0x54] sm:$0xff]
        %v2222 = vld [vmem:[%s5 + $0x5c] sm:$0xf]
        %v2223 = vld [vmem:[%s5 + $0x60] sm:$0xff]
        %v2224 = vld [vmem:[%s5 + $0x68] sm:$0xf]
        %v2225 = vld [vmem:[%s5 + $0x6c] sm:$0xff]
        %v2226 = vld [vmem:[%s5 + $0x74] sm:$0xf]
        %v2227 = vld [vmem:[%s5 + $0x78] sm:$0xff]
        %v2228 = vld [vmem:[%s5 + $0x80] sm:$0xf]
        %v2229 = vld [vmem:[%s5 + $0x84] sm:$0xff]
        %v2230 = vld [vmem:[%s5 + $0x8c] sm:$0xf]
        %v2231 = vld [vmem:[%s5 + $0x90] sm:$0xff]
        %v2232 = vld [vmem:[%s5 + $0x98] sm:$0xf]
        %v2233 = vld [vmem:[%s5 + $0x9c] sm:$0xff]
        %v2234 = vld [vmem:[%s5 + $0xa4] sm:$0xf]
        %v2235 = vld [vmem:[%s5 + $0xa8] sm:$0xff]
        %v2236 = vld [vmem:[%s5 + $0xb0] sm:$0xf]
        %v2237 = vld [vmem:[%s5 + $0xb4] sm:$0xff]
        %v2238 = vld [vmem:[%s5 + $0xbc] sm:$0xf]
        %v2239 = vld [vmem:[%s5 + $0xc0] sm:$0xff]
        %v2240 = vld [vmem:[%s5 + $0xc8] sm:$0xf]
        %v2241 = vld [vmem:[%s5 + $0xcc] sm:$0xff]
        %v2242 = vld [vmem:[%s5 + $0xd4] sm:$0xf]
        %v2243 = vld [vmem:[%s5 + $0xd8] sm:$0xff]
        %v2244 = vld [vmem:[%s5 + $0xe0] sm:$0xf]
        %v2245 = vld [vmem:[%s5 + $0xe4] sm:$0xff]
        %v2246 = vld [vmem:[%s5 + $0xec] sm:$0xf]
        %v2247 = vld [vmem:[%s5 + $0xf0] sm:$0xff]
        %v2248 = vld [vmem:[%s5 + $0xf8] sm:$0xf]
        %v2249 = vld [vmem:[%s5 + $0xfc] sm:$0xff]
        %v2250 = vld [vmem:[%s5 + $0x104] sm:$0xf]
        %v2251 = vld [vmem:[%s5 + $0x108] sm:$0xff]
        %v2252 = vld [vmem:[%s5 + $0x110] sm:$0xf]
        %v2253 = vld [vmem:[%s5 + $0x114] sm:$0xff]
        %v2254 = vld [vmem:[%s5 + $0x11c] sm:$0xf]
        %v2255 = vld [vmem:[%s5 + $0x120] sm:$0xff]
        %v2256 = vld [vmem:[%s5 + $0x128] sm:$0xf]
        %v2257 = vld [vmem:[%s5 + $0x12c] sm:$0xff]
        %v2258 = vld [vmem:[%s5 + $0x134] sm:$0xf]
        %v2259 = vld [vmem:[%s5 + $0x138] sm:$0xff]
        %v2260 = vld [vmem:[%s5 + $0x140] sm:$0xf]
        %v2261 = vld [vmem:[%s5 + $0x144] sm:$0xff]
        %v2262 = vld [vmem:[%s5 + $0x14c] sm:$0xf]
        %v2263 = vld [vmem:[%s5 + $0x150] sm:$0xff]
        %v2264 = vld [vmem:[%s5 + $0x158] sm:$0xf]
        %v2265 = vld [vmem:[%s5 + $0x15c] sm:$0xff]
        %v2266 = vld [vmem:[%s5 + $0x164] sm:$0xf]
        %v2267 = vld [vmem:[%s5 + $0x168] sm:$0xff]
        %v2268 = vld [vmem:[%s5 + $0x170] sm:$0xf]
        %v2269 = vld [vmem:[%s5 + $0x174] sm:$0xff]
        %v2270 = vld [vmem:[%s5 + $0x17c] sm:$0xf]
        %v2335 = vunpack.c.l.b16 %v2207
        %v2336 = vunpack.c.h.b16 %v2207
        %v2337 = vunpack.c.l.b16 %v2208
        %v2338 = vunpack.c.l.b16 %v2209
        %v2339 = vunpack.c.h.b16 %v2209
        %v2340 = vunpack.c.l.b16 %v2210
        %v2341 = vunpack.c.l.b16 %v2211
        %v2342 = vunpack.c.h.b16 %v2211
        %v2343 = vunpack.c.l.b16 %v2212
        %v2344 = vunpack.c.l.b16 %v2213
        %v2345 = vunpack.c.h.b16 %v2213
        %v2346 = vunpack.c.l.b16 %v2214
        %v2347 = vunpack.c.l.b16 %v2215
        %v2348 = vunpack.c.h.b16 %v2215
        %v2349 = vunpack.c.l.b16 %v2216
        %v2350 = vunpack.c.l.b16 %v2217
        %v2351 = vunpack.c.h.b16 %v2217
        %v2352 = vunpack.c.l.b16 %v2218
        %v2353 = vunpack.c.l.b16 %v2219
        %v2354 = vunpack.c.h.b16 %v2219
        %v2355 = vunpack.c.l.b16 %v2220
        %v2356 = vunpack.c.l.b16 %v2221
        %v2357 = vunpack.c.h.b16 %v2221
        %v2358 = vunpack.c.l.b16 %v2222
        %v2359 = vunpack.c.l.b16 %v2223
        %v2360 = vunpack.c.h.b16 %v2223
        %v2361 = vunpack.c.l.b16 %v2224
        %v2362 = vunpack.c.l.b16 %v2225
        %v2363 = vunpack.c.h.b16 %v2225
        %v2364 = vunpack.c.l.b16 %v2226
        %v2365 = vunpack.c.l.b16 %v2227
        %v2366 = vunpack.c.h.b16 %v2227
        %v2367 = vunpack.c.l.b16 %v2228
        %v2368 = vunpack.c.l.b16 %v2229
        %v2369 = vunpack.c.h.b16 %v2229
        %v2370 = vunpack.c.l.b16 %v2230
        %v2371 = vunpack.c.l.b16 %v2231
        %v2372 = vunpack.c.h.b16 %v2231
        %v2373 = vunpack.c.l.b16 %v2232
        %v2374 = vunpack.c.l.b16 %v2233
        %v2375 = vunpack.c.h.b16 %v2233
        %v2376 = vunpack.c.l.b16 %v2234
        %v2377 = vunpack.c.l.b16 %v2235
        %v2378 = vunpack.c.h.b16 %v2235
        %v2379 = vunpack.c.l.b16 %v2236
        %v2380 = vunpack.c.l.b16 %v2237
        %v2381 = vunpack.c.h.b16 %v2237
        %v2382 = vunpack.c.l.b16 %v2238
        %v2383 = vunpack.c.l.b16 %v2239
        %v2384 = vunpack.c.h.b16 %v2239
        %v2385 = vunpack.c.l.b16 %v2240
        %v2386 = vunpack.c.l.b16 %v2241
        %v2387 = vunpack.c.h.b16 %v2241
        %v2388 = vunpack.c.l.b16 %v2242
        %v2389 = vunpack.c.l.b16 %v2243
        %v2390 = vunpack.c.h.b16 %v2243
        %v2391 = vunpack.c.l.b16 %v2244
        %v2392 = vunpack.c.l.b16 %v2245
        %v2393 = vunpack.c.h.b16 %v2245
        %v2394 = vunpack.c.l.b16 %v2246
        %v2395 = vunpack.c.l.b16 %v2247
        %v2396 = vunpack.c.h.b16 %v2247
        %v2397 = vunpack.c.l.b16 %v2248
        %v2398 = vunpack.c.l.b16 %v2249
        %v2399 = vunpack.c.h.b16 %v2249
        %v2400 = vunpack.c.l.b16 %v2250
        %v2401 = vunpack.c.l.b16 %v2251
        %v2402 = vunpack.c.h.b16 %v2251
        %v2403 = vunpack.c.l.b16 %v2252
        %v2404 = vunpack.c.l.b16 %v2253
        %v2405 = vunpack.c.h.b16 %v2253
        %v2406 = vunpack.c.l.b16 %v2254
        %v2407 = vunpack.c.l.b16 %v2255
        %v2408 = vunpack.c.h.b16 %v2255
        %v2409 = vunpack.c.l.b16 %v2256
        %v2410 = vunpack.c.l.b16 %v2257
        %v2411 = vunpack.c.h.b16 %v2257
        %v2412 = vunpack.c.l.b16 %v2258
        %v2413 = vunpack.c.l.b16 %v2259
        %v2414 = vunpack.c.h.b16 %v2259
        %v2415 = vunpack.c.l.b16 %v2260
        %v2416 = vunpack.c.l.b16 %v2261
        %v2417 = vunpack.c.h.b16 %v2261
        %v2418 = vunpack.c.l.b16 %v2262
        %v2419 = vunpack.c.l.b16 %v2263
        %v2420 = vunpack.c.h.b16 %v2263
        %v2421 = vunpack.c.l.b16 %v2264
        %v2422 = vunpack.c.l.b16 %v2265
        %v2423 = vunpack.c.h.b16 %v2265
        %v2424 = vunpack.c.l.b16 %v2266
        %v2425 = vunpack.c.l.b16 %v2267
        %v2426 = vunpack.c.h.b16 %v2267
        %v2427 = vunpack.c.l.b16 %v2268
        %v2428 = vunpack.c.l.b16 %v2269
        %v2429 = vunpack.c.h.b16 %v2269
        %v2430 = vunpack.c.l.b16 %v2270
        %v2431 = vpack.c.b16 %v2338, %v2335
        %v2432 = vpack.c.b16 %v2339, %v2336
        %v2433 = vpack.c.b16 %v2340, %v2337
        %v2434 = vpack.c.b16 %v2344, %v2341
        %v2435 = vpack.c.b16 %v2345, %v2342
        %v2436 = vpack.c.b16 %v2346, %v2343
        %v2437 = vpack.c.b16 %v2350, %v2347
        %v2438 = vpack.c.b16 %v2351, %v2348
        %v2439 = vpack.c.b16 %v2352, %v2349
        %v2440 = vpack.c.b16 %v2356, %v2353
        %v2441 = vpack.c.b16 %v2357, %v2354
        %v2442 = vpack.c.b16 %v2358, %v2355
        %v2443 = vpack.c.b16 %v2362, %v2359
        %v2444 = vpack.c.b16 %v2363, %v2360
        %v2445 = vpack.c.b16 %v2364, %v2361
        %v2446 = vpack.c.b16 %v2368, %v2365
        %v2447 = vpack.c.b16 %v2369, %v2366
        %v2448 = vpack.c.b16 %v2370, %v2367
        %v2449 = vpack.c.b16 %v2374, %v2371
        %v2450 = vpack.c.b16 %v2375, %v2372
        %v2451 = vpack.c.b16 %v2376, %v2373
        %v2452 = vpack.c.b16 %v2380, %v2377
        %v2453 = vpack.c.b16 %v2381, %v2378
        %v2454 = vpack.c.b16 %v2382, %v2379
        %v2455 = vpack.c.b16 %v2386, %v2383
        %v2456 = vpack.c.b16 %v2387, %v2384
        %v2457 = vpack.c.b16 %v2388, %v2385
        %v2458 = vpack.c.b16 %v2392, %v2389
        %v2459 = vpack.c.b16 %v2393, %v2390
        %v2460 = vpack.c.b16 %v2394, %v2391
        %v2461 = vpack.c.b16 %v2398, %v2395
        %v2462 = vpack.c.b16 %v2399, %v2396
        %v2463 = vpack.c.b16 %v2400, %v2397
        %v2464 = vpack.c.b16 %v2404, %v2401
        %v2465 = vpack.c.b16 %v2405, %v2402
        %v2466 = vpack.c.b16 %v2406, %v2403
        %v2467 = vpack.c.b16 %v2410, %v2407
        %v2468 = vpack.c.b16 %v2411, %v2408
        %v2469 = vpack.c.b16 %v2412, %v2409
        %v2470 = vpack.c.b16 %v2416, %v2413
        %v2471 = vpack.c.b16 %v2417, %v2414
        %v2472 = vpack.c.b16 %v2418, %v2415
        %v2473 = vpack.c.b16 %v2422, %v2419
        %v2474 = vpack.c.b16 %v2423, %v2420
        %v2475 = vpack.c.b16 %v2424, %v2421
        %v2476 = vpack.c.b16 %v2428, %v2425
        %v2477 = vpack.c.b16 %v2429, %v2426
        %v2478 = vpack.c.b16 %v2430, %v2427
        %2527 = vmatprep.subr.bf16.mxu0 %v1904
        %2528 = vmatpush1.bf16.msra.mxu0 %v1903
        %2529 = vmatprep.subr.bf16.mxu0 %v1908
        %2530 = vmatpush1.bf16.msra.mxu0 %v1907
        %2531 = vmatprep.subr.bf16.mxu0 %v1912
        %2532 = vmatpush1.bf16.msra.mxu0 %v1911
        %2533 = vmatprep.subr.bf16.mxu0 %v1916
        %2534 = vmatpush1.bf16.msra.mxu0 %v1915
        %2535 = vmatprep.subr.bf16.mxu0 %v1920
        %2536 = vmatpush1.bf16.msra.mxu0 %v1919
        %2537 = vmatprep.subr.bf16.mxu0 %v1924
        %2538 = vmatpush1.bf16.msra.mxu0 %v1923
        %2539 = vmatprep.subr.bf16.mxu0 %v1928
        %2540 = vmatpush1.bf16.msra.mxu0 %v1927
        %2541 = vmatprep.subr.bf16.mxu0 %v1932
        %2542 = vmatpush1.bf16.msra.mxu0 %v1931
        %2543 = vmatprep.subr.bf16.mxu0 %v2032
        %2544 = vmatpush1.bf16.msra.mxu0 %v2031
        %2545 = vmatprep.subr.bf16.mxu0 %v2035
        %2546 = vmatpush1.bf16.msra.mxu0 %v2034
        %2547 = vmatprep.subr.bf16.mxu0 %v2038
        %2548 = vmatpush1.bf16.msra.mxu0 %v2037
        %2549 = vmatprep.subr.bf16.mxu0 %v2041
        %2550 = vmatpush1.bf16.msra.mxu0 %v2040
        %2551 = vmatprep.subr.bf16.mxu0 %v2044
        %2552 = vmatpush1.bf16.msra.mxu0 %v2043
        %2553 = vmatprep.subr.bf16.mxu0 %v2047
        %2554 = vmatpush1.bf16.msra.mxu0 %v2046
        %2555 = vmatprep.subr.bf16.mxu0 %v2050
        %2556 = vmatpush1.bf16.msra.mxu0 %v2049
        %2557 = vmatprep.subr.bf16.mxu0 %v2053
        %2558 = vmatpush1.bf16.msra.mxu0 %v2052
        %2559 = vmatprep.mubr.bf16.mxu0 %v2432
        %2560 = vmatmul.mubr.bf16.gmra.mrb[0].mxu0 %v2431
        %v2561 = vpop.f32.mrb[0].mxu0
        %v2562 = vadd.f32 0.0, %v2561
        %v2563 = vpop.f32.mrb[0].mxu0
        %v2564 = vadd.f32 0.0, %v2563
        %v2565 = vpop.f32.mrb[0].mxu0
        %v2566 = vadd.f32 0.0, %v2565
        %v2567 = vpop.f32.mrb[0].mxu0
        %v2568 = vadd.f32 0.0, %v2567
        %2569 = vmatprep.mubr.bf16.mxu0 %v2435
        %2570 = vmatmul.mubr.bf16.gmra.mrb[0].mxu0 %v2434
        %v2571 = vpop.f32.mrb[0].mxu0
        %v2572 = vadd.f32 0.0, %v2571
        %v2573 = vpop.f32.mrb[0].mxu0
        %v2574 = vadd.f32 0.0, %v2573
        %v2575 = vpop.f32.mrb[0].mxu0
        %v2576 = vadd.f32 0.0, %v2575
        %v2577 = vpop.f32.mrb[0].mxu0
        %v2578 = vadd.f32 0.0, %v2577
        %2579 = vmatprep.mubr.bf16.mxu0 %v2438
        %2580 = vmatmul.mubr.bf16.gmra.mrb[0].mxu0 %v2437
        %v2581 = vpop.f32.mrb[0].mxu0
        %v2582 = vadd.f32 0.0, %v2581
        %v2583 = vpop.f32.mrb[0].mxu0
        %v2584 = vadd.f32 0.0, %v2583
        %v2585 = vpop.f32.mrb[0].mxu0
        %v2586 = vadd.f32 0.0, %v2585
        %v2587 = vpop.f32.mrb[0].mxu0
        %v2588 = vadd.f32 0.0, %v2587
        %2589 = vmatprep.mubr.bf16.mxu0 %v2441
        %2590 = vmatmul.mubr.bf16.gmra.mrb[0].mxu0 %v2440
        %v2591 = vpop.f32.mrb[0].mxu0
        %v2592 = vadd.f32 0.0, %v2591
        %v2593 = vpop.f32.mrb[0].mxu0
        %v2594 = vadd.f32 0.0, %v2593
        %v2595 = vpop.f32.mrb[0].mxu0
        %v2596 = vadd.f32 0.0, %v2595
        %v2597 = vpop.f32.mrb[0].mxu0
        %v2598 = vadd.f32 0.0, %v2597
        %2599 = vmatprep.mubr.bf16.mxu0 %v2444
        %2600 = vmatmul.mubr.bf16.gmra.mrb[0].mxu0 %v2443
        %v2601 = vpop.f32.mrb[0].mxu0
        %v2602 = vadd.f32 0.0, %v2601
        %v2603 = vpop.f32.mrb[0].mxu0
        %v2604 = vadd.f32 0.0, %v2603
        %v2605 = vpop.f32.mrb[0].mxu0
        %v2606 = vadd.f32 0.0, %v2605
        %v2607 = vpop.f32.mrb[0].mxu0
        %v2608 = vadd.f32 0.0, %v2607
        %2609 = vmatprep.mubr.bf16.mxu0 %v2447
        %2610 = vmatmul.mubr.bf16.gmra.mrb[0].mxu0 %v2446
        %v2611 = vpop.f32.mrb[0].mxu0
        %v2612 = vadd.f32 0.0, %v2611
        %v2613 = vpop.f32.mrb[0].mxu0
        %v2614 = vadd.f32 0.0, %v2613
        %v2615 = vpop.f32.mrb[0].mxu0
        %v2616 = vadd.f32 0.0, %v2615
        %v2617 = vpop.f32.mrb[0].mxu0
        %v2618 = vadd.f32 0.0, %v2617
        %2619 = vmatprep.mubr.bf16.mxu0 %v2450
        %2620 = vmatmul.mubr.bf16.gmra.mrb[0].mxu0 %v2449
        %v2621 = vpop.f32.mrb[0].mxu0
        %v2622 = vadd.f32 0.0, %v2621
        %v2623 = vpop.f32.mrb[0].mxu0
        %v2624 = vadd.f32 0.0, %v2623
        %v2625 = vpop.f32.mrb[0].mxu0
        %v2626 = vadd.f32 0.0, %v2625
        %v2627 = vpop.f32.mrb[0].mxu0
        %v2628 = vadd.f32 0.0, %v2627
        %2629 = vmatprep.mubr.bf16.mxu0 %v2453
        %2630 = vmatmul.mubr.bf16.gmra.mrb[0].mxu0 %v2452
        %v2631 = vpop.f32.mrb[0].mxu0
        %v2632 = vadd.f32 0.0, %v2631
        %v2633 = vpop.f32.mrb[0].mxu0
        %v2634 = vadd.f32 0.0, %v2633
        %v2635 = vpop.f32.mrb[0].mxu0
        %v2636 = vadd.f32 0.0, %v2635
        %v2637 = vpop.f32.mrb[0].mxu0
        %v2638 = vadd.f32 0.0, %v2637
        %2639 = vmatprep.mubr.bf16.mxu0 %v2456
        %2640 = vmatmul.mubr.bf16.gmra.mrb[0].mxu0 %v2455
        %v2641 = vpop.f32.mrb[0].mxu0
        %v2642 = vadd.f32 0.0, %v2641
        %v2643 = vpop.f32.mrb[0].mxu0
        %v2644 = vadd.f32 0.0, %v2643
        %v2645 = vpop.f32.mrb[0].mxu0
        %v2646 = vadd.f32 0.0, %v2645
        %v2647 = vpop.f32.mrb[0].mxu0
        %v2648 = vadd.f32 0.0, %v2647
        %2649 = vmatprep.mubr.bf16.mxu0 %v2459
        %2650 = vmatmul.mubr.bf16.gmra.mrb[0].mxu0 %v2458
        %v2651 = vpop.f32.mrb[0].mxu0
        %v2652 = vadd.f32 0.0, %v2651
        %v2653 = vpop.f32.mrb[0].mxu0
        %v2654 = vadd.f32 0.0, %v2653
        %v2655 = vpop.f32.mrb[0].mxu0
        %v2656 = vadd.f32 0.0, %v2655
        %v2657 = vpop.f32.mrb[0].mxu0
        %v2658 = vadd.f32 0.0, %v2657
        %2659 = vmatprep.mubr.bf16.mxu0 %v2462
        %2660 = vmatmul.mubr.bf16.gmra.mrb[0].mxu0 %v2461
        %v2661 = vpop.f32.mrb[0].mxu0
        %v2662 = vadd.f32 0.0, %v2661
        %v2663 = vpop.f32.mrb[0].mxu0
        %v2664 = vadd.f32 0.0, %v2663
        %v2665 = vpop.f32.mrb[0].mxu0
        %v2666 = vadd.f32 0.0, %v2665
        %v2667 = vpop.f32.mrb[0].mxu0
        %v2668 = vadd.f32 0.0, %v2667
        %2669 = vmatprep.mubr.bf16.mxu0 %v2465
        %2670 = vmatmul.mubr.bf16.gmra.mrb[0].mxu0 %v2464
        %v2671 = vpop.f32.mrb[0].mxu0
        %v2672 = vadd.f32 0.0, %v2671
        %v2673 = vpop.f32.mrb[0].mxu0
        %v2674 = vadd.f32 0.0, %v2673
        %v2675 = vpop.f32.mrb[0].mxu0
        %v2676 = vadd.f32 0.0, %v2675
        %v2677 = vpop.f32.mrb[0].mxu0
        %v2678 = vadd.f32 0.0, %v2677
        %2679 = vmatprep.mubr.bf16.mxu0 %v2468
        %2680 = vmatmul.mubr.bf16.gmra.mrb[0].mxu0 %v2467
        %v2681 = vpop.f32.mrb[0].mxu0
        %v2682 = vadd.f32 0.0, %v2681
        %v2683 = vpop.f32.mrb[0].mxu0
        %v2684 = vadd.f32 0.0, %v2683
        %v2685 = vpop.f32.mrb[0].mxu0
        %v2686 = vadd.f32 0.0, %v2685
        %v2687 = vpop.f32.mrb[0].mxu0
        %v2688 = vadd.f32 0.0, %v2687
        %2689 = vmatprep.mubr.bf16.mxu0 %v2471
        %2690 = vmatmul.mubr.bf16.gmra.mrb[0].mxu0 %v2470
        %v2691 = vpop.f32.mrb[0].mxu0
        %v2692 = vadd.f32 0.0, %v2691
        %v2693 = vpop.f32.mrb[0].mxu0
        %v2694 = vadd.f32 0.0, %v2693
        %v2695 = vpop.f32.mrb[0].mxu0
        %v2696 = vadd.f32 0.0, %v2695
        %v2697 = vpop.f32.mrb[0].mxu0
        %v2698 = vadd.f32 0.0, %v2697
        %2699 = vmatprep.mubr.bf16.mxu0 %v2474
        %2700 = vmatmul.mubr.bf16.gmra.mrb[0].mxu0 %v2473
        %v2701 = vpop.f32.mrb[0].mxu0
        %v2702 = vadd.f32 0.0, %v2701
        %v2703 = vpop.f32.mrb[0].mxu0
        %v2704 = vadd.f32 0.0, %v2703
        %v2705 = vpop.f32.mrb[0].mxu0
        %v2706 = vadd.f32 0.0, %v2705
        %v2707 = vpop.f32.mrb[0].mxu0
        %v2708 = vadd.f32 0.0, %v2707
        %2709 = vmatprep.mubr.bf16.mxu0 %v2477
        %2710 = vmatmul.mubr.bf16.gmra.mrb[0].mxu0 %v2476
        %v2711 = vpop.f32.mrb[0].mxu0
        %v2712 = vadd.f32 0.0, %v2711
        %v2713 = vpop.f32.mrb[0].mxu0
        %v2714 = vadd.f32 0.0, %v2713
        %v2715 = vpop.f32.mrb[0].mxu0
        %v2716 = vadd.f32 0.0, %v2715
        %v2717 = vpop.f32.mrb[0].mxu0
        %v2718 = vadd.f32 0.0, %v2717
        %2719 = vdwg.mxu0
        %2720 = vmatprep.subr.bf16.mxu0 %v2152
        %2721 = vmatpush1.bf16.msra.mxu0 %v2151
        %2722 = vmatprep.subr.bf16.mxu0 %v2155
        %2723 = vmatpush1.bf16.msra.mxu0 %v2154
        %2724 = vmatprep.subr.bf16.mxu0 %v2158
        %2725 = vmatpush1.bf16.msra.mxu0 %v2157
        %2726 = vmatprep.subr.bf16.mxu0 %v2161
        %2727 = vmatpush1.bf16.msra.mxu0 %v2160
        %2728 = vmatprep.subr.bf16.mxu0 %v2164
        %2729 = vmatpush1.bf16.msra.mxu0 %v2163
        %2730 = vmatprep.subr.bf16.mxu0 %v2167
        %2731 = vmatpush1.bf16.msra.mxu0 %v2166
        %2732 = vmatprep.subr.bf16.mxu0 %v2170
        %2733 = vmatpush1.bf16.msra.mxu0 %v2169
        %2734 = vmatprep.subr.bf16.mxu0 %v2173
        %2735 = vmatpush1.bf16.msra.mxu0 %v2172
        %2736 = vmatprep.subr.bf16.mxu0 0
        %2737 = vmatpush1.bf16.msra.mxu0 0
        %2738 = vmatprep.subr.bf16.mxu0 0
        %2739 = vmatpush1.bf16.msra.mxu0 0
        %2740 = vmatprep.subr.bf16.mxu0 0
        %2741 = vmatpush1.bf16.msra.mxu0 0
        %2742 = vmatprep.subr.bf16.mxu0 0
        %2743 = vmatpush1.bf16.msra.mxu0 0
        %2744 = vmatprep.subr.bf16.mxu0 0
        %2745 = vmatpush1.bf16.msra.mxu0 0
        %2746 = vmatprep.subr.bf16.mxu0 0
        %2747 = vmatpush1.bf16.msra.mxu0 0
        %2748 = vmatprep.subr.bf16.mxu0 0
        %2749 = vmatpush1.bf16.msra.mxu0 0
        %2750 = vmatprep.subr.bf16.mxu0 0
        %2751 = vmatpush1.bf16.msra.mxu0 0
        %2752 = vmatprep.mubr.bf16.mxu0 0
        %2753 = vmatmul.mubr.bf16.gmra.mrb[0].mxu0 %v2433
        %v2754 = vpop.f32.mrb[0].mxu0
        %v2755 = vadd.f32 %v2562, %v2754
        %v2756 = vpop.f32.mrb[0].mxu0
        %v2757 = vadd.f32 %v2564, %v2756
        %v2758 = vpop.f32.mrb[0].mxu0
        %v2759 = vadd.f32 %v2566, %v2758
        %v2760 = vpop.f32.mrb[0].mxu0
        %v2761 = vadd.f32 %v2568, %v2760
        %2762 = vmatprep.mubr.bf16.mxu0 0
        %2763 = vmatmul.mubr.bf16.gmra.mrb[0].mxu0 %v2436
        %v2764 = vpop.f32.mrb[0].mxu0
        %v2765 = vadd.f32 %v2572, %v2764
        %v2766 = vpop.f32.mrb[0].mxu0
        %v2767 = vadd.f32 %v2574, %v2766
        %v2768 = vpop.f32.mrb[0].mxu0
        %v2769 = vadd.f32 %v2576, %v2768
        %v2770 = vpop.f32.mrb[0].mxu0
        %v2771 = vadd.f32 %v2578, %v2770
        %2772 = vmatprep.mubr.bf16.mxu0 0
        %2773 = vmatmul.mubr.bf16.gmra.mrb[0].mxu0 %v2439
        %v2774 = vpop.f32.mrb[0].mxu0
        %v2775 = vadd.f32 %v2582, %v2774
        %v2776 = vpop.f32.mrb[0].mxu0
        %v2777 = vadd.f32 %v2584, %v2776
        %v2778 = vpop.f32.mrb[0].mxu0
        %v2779 = vadd.f32 %v2586, %v2778
        %v2780 = vpop.f32.mrb[0].mxu0
        %v2781 = vadd.f32 %v2588, %v2780
        %2782 = vmatprep.mubr.bf16.mxu0 0
        %2783 = vmatmul.mubr.bf16.gmra.mrb[0].mxu0 %v2442
        %v2784 = vpop.f32.mrb[0].mxu0
        %v2785 = vadd.f32 %v2592, %v2784
        %v2786 = vpop.f32.mrb[0].mxu0
        %v2787 = vadd.f32 %v2594, %v2786
        %v2788 = vpop.f32.mrb[0].mxu0
        %v2789 = vadd.f32 %v2596, %v2788
        %v2790 = vpop.f32.mrb[0].mxu0
        %v2791 = vadd.f32 %v2598, %v2790
        %2792 = vmatprep.mubr.bf16.mxu0 0
        %2793 = vmatmul.mubr.bf16.gmra.mrb[0].mxu0 %v2445
        %v2794 = vpop.f32.mrb[0].mxu0
        %v2795 = vadd.f32 %v2602, %v2794
        %v2796 = vpop.f32.mrb[0].mxu0
        %v2797 = vadd.f32 %v2604, %v2796
        %v2798 = vpop.f32.mrb[0].mxu0
        %v2799 = vadd.f32 %v2606, %v2798
        %v2800 = vpop.f32.mrb[0].mxu0
        %v2801 = vadd.f32 %v2608, %v2800
        %2802 = vmatprep.mubr.bf16.mxu0 0
        %2803 = vmatmul.mubr.bf16.gmra.mrb[0].mxu0 %v2448
        %v2804 = vpop.f32.mrb[0].mxu0
        %v2805 = vadd.f32 %v2612, %v2804
        %v2806 = vpop.f32.mrb[0].mxu0
        %v2807 = vadd.f32 %v2614, %v2806
        %v2808 = vpop.f32.mrb[0].mxu0
        %v2809 = vadd.f32 %v2616, %v2808
        %v2810 = vpop.f32.mrb[0].mxu0
        %v2811 = vadd.f32 %v2618, %v2810
        %2812 = vmatprep.mubr.bf16.mxu0 0
        %2813 = vmatmul.mubr.bf16.gmra.mrb[0].mxu0 %v2451
        %v2814 = vpop.f32.mrb[0].mxu0
        %v2815 = vadd.f32 %v2622, %v2814
        %v2816 = vpop.f32.mrb[0].mxu0
        %v2817 = vadd.f32 %v2624, %v2816
        %v2818 = vpop.f32.mrb[0].mxu0
        %v2819 = vadd.f32 %v2626, %v2818
        %v2820 = vpop.f32.mrb[0].mxu0
        %v2821 = vadd.f32 %v2628, %v2820
        %2822 = vmatprep.mubr.bf16.mxu0 0
        %2823 = vmatmul.mubr.bf16.gmra.mrb[0].mxu0 %v2454
        %v2824 = vpop.f32.mrb[0].mxu0
        %v2825 = vadd.f32 %v2632, %v2824
        %v2826 = vpop.f32.mrb[0].mxu0
        %v2827 = vadd.f32 %v2634, %v2826
        %v2828 = vpop.f32.mrb[0].mxu0
        %v2829 = vadd.f32 %v2636, %v2828
        %v2830 = vpop.f32.mrb[0].mxu0
        %v2831 = vadd.f32 %v2638, %v2830
        %2832 = vmatprep.mubr.bf16.mxu0 0
        %2833 = vmatmul.mubr.bf16.gmra.mrb[0].mxu0 %v2457
        %v2834 = vpop.f32.mrb[0].mxu0
        %v2835 = vadd.f32 %v2642, %v2834
        %v2836 = vpop.f32.mrb[0].mxu0
        %v2837 = vadd.f32 %v2644, %v2836
        %v2838 = vpop.f32.mrb[0].mxu0
        %v2839 = vadd.f32 %v2646, %v2838
        %v2840 = vpop.f32.mrb[0].mxu0
        %v2841 = vadd.f32 %v2648, %v2840
        %2842 = vmatprep.mubr.bf16.mxu0 0
        %2843 = vmatmul.mubr.bf16.gmra.mrb[0].mxu0 %v2460
        %v2844 = vpop.f32.mrb[0].mxu0
        %v2845 = vadd.f32 %v2652, %v2844
        %v2846 = vpop.f32.mrb[0].mxu0
        %v2847 = vadd.f32 %v2654, %v2846
        %v2848 = vpop.f32.mrb[0].mxu0
        %v2849 = vadd.f32 %v2656, %v2848
        %v2850 = vpop.f32.mrb[0].mxu0
        %v2851 = vadd.f32 %v2658, %v2850
        %2852 = vmatprep.mubr.bf16.mxu0 0
        %2853 = vmatmul.mubr.bf16.gmra.mrb[0].mxu0 %v2463
        %v2854 = vpop.f32.mrb[0].mxu0
        %v2855 = vadd.f32 %v2662, %v2854
        %v2856 = vpop.f32.mrb[0].mxu0
        %v2857 = vadd.f32 %v2664, %v2856
        %v2858 = vpop.f32.mrb[0].mxu0
        %v2859 = vadd.f32 %v2666, %v2858
        %v2860 = vpop.f32.mrb[0].mxu0
        %v2861 = vadd.f32 %v2668, %v2860
        %2862 = vmatprep.mubr.bf16.mxu0 0
        %2863 = vmatmul.mubr.bf16.gmra.mrb[0].mxu0 %v2466
        %v2864 = vpop.f32.mrb[0].mxu0
        %v2865 = vadd.f32 %v2672, %v2864
        %v2866 = vpop.f32.mrb[0].mxu0
        %v2867 = vadd.f32 %v2674, %v2866
        %v2868 = vpop.f32.mrb[0].mxu0
        %v2869 = vadd.f32 %v2676, %v2868
        %v2870 = vpop.f32.mrb[0].mxu0
        %v2871 = vadd.f32 %v2678, %v2870
        %2872 = vmatprep.mubr.bf16.mxu0 0
        %2873 = vmatmul.mubr.bf16.gmra.mrb[0].mxu0 %v2469
        %v2874 = vpop.f32.mrb[0].mxu0
        %v2875 = vadd.f32 %v2682, %v2874
        %v2876 = vpop.f32.mrb[0].mxu0
        %v2877 = vadd.f32 %v2684, %v2876
        %v2878 = vpop.f32.mrb[0].mxu0
        %v2879 = vadd.f32 %v2686, %v2878
        %v2880 = vpop.f32.mrb[0].mxu0
        %v2881 = vadd.f32 %v2688, %v2880
        %2882 = vmatprep.mubr.bf16.mxu0 0
        %2883 = vmatmul.mubr.bf16.gmra.mrb[0].mxu0 %v2472
        %v2884 = vpop.f32.mrb[0].mxu0
        %v2885 = vadd.f32 %v2692, %v2884
        %v2886 = vpop.f32.mrb[0].mxu0
        %v2887 = vadd.f32 %v2694, %v2886
        %v2888 = vpop.f32.mrb[0].mxu0
        %v2889 = vadd.f32 %v2696, %v2888
        %v2890 = vpop.f32.mrb[0].mxu0
        %v2891 = vadd.f32 %v2698, %v2890
        %2892 = vmatprep.mubr.bf16.mxu0 0
        %2893 = vmatmul.mubr.bf16.gmra.mrb[0].mxu0 %v2475
        %v2894 = vpop.f32.mrb[0].mxu0
        %v2895 = vadd.f32 %v2702, %v2894
        %v2896 = vpop.f32.mrb[0].mxu0
        %v2897 = vadd.f32 %v2704, %v2896
        %v2898 = vpop.f32.mrb[0].mxu0
        %v2899 = vadd.f32 %v2706, %v2898
        %v2900 = vpop.f32.mrb[0].mxu0
        %v2901 = vadd.f32 %v2708, %v2900
        %2902 = vmatprep.mubr.bf16.mxu0 0
        %2903 = vmatmul.mubr.bf16.gmra.mrb[0].mxu0 %v2478
        %v2904 = vpop.f32.mrb[0].mxu0
        %v2905 = vadd.f32 %v2712, %v2904
        %v2906 = vpop.f32.mrb[0].mxu0
        %v2907 = vadd.f32 %v2714, %v2906
        %v2908 = vpop.f32.mrb[0].mxu0
        %v2909 = vadd.f32 %v2716, %v2908
        %v2910 = vpop.f32.mrb[0].mxu0
        %v2911 = vadd.f32 %v2718, %v2910
        %2912 = vdwg.mxu0
        %2913 = vmatprep.subr.bf16.mxu0 %v1906
        %2914 = vmatpush1.bf16.msra.mxu0 %v1905
        %2915 = vmatprep.subr.bf16.mxu0 %v1910
        %2916 = vmatpush1.bf16.msra.mxu0 %v1909
        %2917 = vmatprep.subr.bf16.mxu0 %v1914
        %2918 = vmatpush1.bf16.msra.mxu0 %v1913
        %2919 = vmatprep.subr.bf16.mxu0 %v1918
        %2920 = vmatpush1.bf16.msra.mxu0 %v1917
        %2921 = vmatprep.subr.bf16.mxu0 %v1922
        %2922 = vmatpush1.bf16.msra.mxu0 %v1921
        %2923 = vmatprep.subr.bf16.mxu0 %v1926
        %2924 = vmatpush1.bf16.msra.mxu0 %v1925
        %2925 = vmatprep.subr.bf16.mxu0 %v1930
        %2926 = vmatpush1.bf16.msra.mxu0 %v1929
        %2927 = vmatprep.subr.bf16.mxu0 %v1934
        %2928 = vmatpush1.bf16.msra.mxu0 %v1933
        %2929 = vmatprep.subr.bf16.mxu0 %v1974
        %2930 = vmatpush1.bf16.msra.mxu0 %v2033
        %2931 = vmatprep.subr.bf16.mxu0 %v1982
        %2932 = vmatpush1.bf16.msra.mxu0 %v2036
        %2933 = vmatprep.subr.bf16.mxu0 %v1990
        %2934 = vmatpush1.bf16.msra.mxu0 %v2039
        %2935 = vmatprep.subr.bf16.mxu0 %v1998
        %2936 = vmatpush1.bf16.msra.mxu0 %v2042
        %2937 = vmatprep.subr.bf16.mxu0 %v2006
        %2938 = vmatpush1.bf16.msra.mxu0 %v2045
        %2939 = vmatprep.subr.bf16.mxu0 %v2014
        %2940 = vmatpush1.bf16.msra.mxu0 %v2048
        %2941 = vmatprep.subr.bf16.mxu0 %v2022
        %2942 = vmatpush1.bf16.msra.mxu0 %v2051
        %2943 = vmatprep.subr.bf16.mxu0 %v2030
        %2944 = vmatpush1.bf16.msra.mxu0 %v2054
        %2945 = vmatprep.mubr.bf16.mxu0 %v2432
        %2946 = vmatmul.mubr.bf16.gmra.mrb[0].mxu0 %v2431
        %v2947 = vpop.f32.mrb[0].mxu0
        %v2948 = vadd.f32 0.0, %v2947
        %v2949 = vpop.f32.mrb[0].mxu0
        %v2950 = vadd.f32 0.0, %v2949
        %v2951 = vpop.f32.mrb[0].mxu0
        %v2952 = vadd.f32 0.0, %v2951
        %v2953 = vpop.f32.mrb[0].mxu0
        %v2954 = vadd.f32 0.0, %v2953
        %2955 = vmatprep.mubr.bf16.mxu0 %v2435
        %2956 = vmatmul.mubr.bf16.gmra.mrb[0].mxu0 %v2434
        %v2957 = vpop.f32.mrb[0].mxu0
        %v2958 = vadd.f32 0.0, %v2957
        %v2959 = vpop.f32.mrb[0].mxu0
        %v2960 = vadd.f32 0.0, %v2959
        %v2961 = vpop.f32.mrb[0].mxu0
        %v2962 = vadd.f32 0.0, %v2961
        %v2963 = vpop.f32.mrb[0].mxu0
        %v2964 = vadd.f32 0.0, %v2963
        %2965 = vmatprep.mubr.bf16.mxu0 %v2438
        %2966 = vmatmul.mubr.bf16.gmra.mrb[0].mxu0 %v2437
        %v2967 = vpop.f32.mrb[0].mxu0
        %v2968 = vadd.f32 0.0, %v2967
        %v2969 = vpop.f32.mrb[0].mxu0
        %v2970 = vadd.f32 0.0, %v2969
        %v2971 = vpop.f32.mrb[0].mxu0
        %v2972 = vadd.f32 0.0, %v2971
        %v2973 = vpop.f32.mrb[0].mxu0
        %v2974 = vadd.f32 0.0, %v2973
        %2975 = vmatprep.mubr.bf16.mxu0 %v2441
        %2976 = vmatmul.mubr.bf16.gmra.mrb[0].mxu0 %v2440
        %v2977 = vpop.f32.mrb[0].mxu0
        %v2978 = vadd.f32 0.0, %v2977
        %v2979 = vpop.f32.mrb[0].mxu0
        %v2980 = vadd.f32 0.0, %v2979
        %v2981 = vpop.f32.mrb[0].mxu0
        %v2982 = vadd.f32 0.0, %v2981
        %v2983 = vpop.f32.mrb[0].mxu0
        %v2984 = vadd.f32 0.0, %v2983
        %2985 = vmatprep.mubr.bf16.mxu0 %v2444
        %2986 = vmatmul.mubr.bf16.gmra.mrb[0].mxu0 %v2443
        %v2987 = vpop.f32.mrb[0].mxu0
        %v2988 = vadd.f32 0.0, %v2987
        %v2989 = vpop.f32.mrb[0].mxu0
        %v2990 = vadd.f32 0.0, %v2989
        %v2991 = vpop.f32.mrb[0].mxu0
        %v2992 = vadd.f32 0.0, %v2991
        %v2993 = vpop.f32.mrb[0].mxu0
        %v2994 = vadd.f32 0.0, %v2993
        %2995 = vmatprep.mubr.bf16.mxu0 %v2447
        %2996 = vmatmul.mubr.bf16.gmra.mrb[0].mxu0 %v2446
        %v2997 = vpop.f32.mrb[0].mxu0
        %v2998 = vadd.f32 0.0, %v2997
        %v2999 = vpop.f32.mrb[0].mxu0
        %v3000 = vadd.f32 0.0, %v2999
        %v3001 = vpop.f32.mrb[0].mxu0
        %v3002 = vadd.f32 0.0, %v3001
        %v3003 = vpop.f32.mrb[0].mxu0
        %v3004 = vadd.f32 0.0, %v3003
        %3005 = vmatprep.mubr.bf16.mxu0 %v2450
        %3006 = vmatmul.mubr.bf16.gmra.mrb[0].mxu0 %v2449
        %v3007 = vpop.f32.mrb[0].mxu0
        %v3008 = vadd.f32 0.0, %v3007
        %v3009 = vpop.f32.mrb[0].mxu0
        %v3010 = vadd.f32 0.0, %v3009
        %v3011 = vpop.f32.mrb[0].mxu0
        %v3012 = vadd.f32 0.0, %v3011
        %v3013 = vpop.f32.mrb[0].mxu0
        %v3014 = vadd.f32 0.0, %v3013
        %3015 = vmatprep.mubr.bf16.mxu0 %v2453
        %3016 = vmatmul.mubr.bf16.gmra.mrb[0].mxu0 %v2452
        %v3017 = vpop.f32.mrb[0].mxu0
        %v3018 = vadd.f32 0.0, %v3017
        %v3019 = vpop.f32.mrb[0].mxu0
        %v3020 = vadd.f32 0.0, %v3019
        %v3021 = vpop.f32.mrb[0].mxu0
        %v3022 = vadd.f32 0.0, %v3021
        %v3023 = vpop.f32.mrb[0].mxu0
        %v3024 = vadd.f32 0.0, %v3023
        %3025 = vmatprep.mubr.bf16.mxu0 %v2456
        %3026 = vmatmul.mubr.bf16.gmra.mrb[0].mxu0 %v2455
        %v3027 = vpop.f32.mrb[0].mxu0
        %v3028 = vadd.f32 0.0, %v3027
        %v3029 = vpop.f32.mrb[0].mxu0
        %v3030 = vadd.f32 0.0, %v3029
        %v3031 = vpop.f32.mrb[0].mxu0
        %v3032 = vadd.f32 0.0, %v3031
        %v3033 = vpop.f32.mrb[0].mxu0
        %v3034 = vadd.f32 0.0, %v3033
        %3035 = vmatprep.mubr.bf16.mxu0 %v2459
        %3036 = vmatmul.mubr.bf16.gmra.mrb[0].mxu0 %v2458
        %v3037 = vpop.f32.mrb[0].mxu0
        %v3038 = vadd.f32 0.0, %v3037
        %v3039 = vpop.f32.mrb[0].mxu0
        %v3040 = vadd.f32 0.0, %v3039
        %v3041 = vpop.f32.mrb[0].mxu0
        %v3042 = vadd.f32 0.0, %v3041
        %v3043 = vpop.f32.mrb[0].mxu0
        %v3044 = vadd.f32 0.0, %v3043
        %3045 = vmatprep.mubr.bf16.mxu0 %v2462
        %3046 = vmatmul.mubr.bf16.gmra.mrb[0].mxu0 %v2461
        %v3047 = vpop.f32.mrb[0].mxu0
        %v3048 = vadd.f32 0.0, %v3047
        %v3049 = vpop.f32.mrb[0].mxu0
        %v3050 = vadd.f32 0.0, %v3049
        %v3051 = vpop.f32.mrb[0].mxu0
        %v3052 = vadd.f32 0.0, %v3051
        %v3053 = vpop.f32.mrb[0].mxu0
        %v3054 = vadd.f32 0.0, %v3053
        %3055 = vmatprep.mubr.bf16.mxu0 %v2465
        %3056 = vmatmul.mubr.bf16.gmra.mrb[0].mxu0 %v2464
        %v3057 = vpop.f32.mrb[0].mxu0
        %v3058 = vadd.f32 0.0, %v3057
        %v3059 = vpop.f32.mrb[0].mxu0
        %v3060 = vadd.f32 0.0, %v3059
        %v3061 = vpop.f32.mrb[0].mxu0
        %v3062 = vadd.f32 0.0, %v3061
        %v3063 = vpop.f32.mrb[0].mxu0
        %v3064 = vadd.f32 0.0, %v3063
        %3065 = vmatprep.mubr.bf16.mxu0 %v2468
        %3066 = vmatmul.mubr.bf16.gmra.mrb[0].mxu0 %v2467
        %v3067 = vpop.f32.mrb[0].mxu0
        %v3068 = vadd.f32 0.0, %v3067
        %v3069 = vpop.f32.mrb[0].mxu0
        %v3070 = vadd.f32 0.0, %v3069
        %v3071 = vpop.f32.mrb[0].mxu0
        %v3072 = vadd.f32 0.0, %v3071
        %v3073 = vpop.f32.mrb[0].mxu0
        %v3074 = vadd.f32 0.0, %v3073
        %3075 = vmatprep.mubr.bf16.mxu0 %v2471
        %3076 = vmatmul.mubr.bf16.gmra.mrb[0].mxu0 %v2470
        %v3077 = vpop.f32.mrb[0].mxu0
        %v3078 = vadd.f32 0.0, %v3077
        %v3079 = vpop.f32.mrb[0].mxu0
        %v3080 = vadd.f32 0.0, %v3079
        %v3081 = vpop.f32.mrb[0].mxu0
        %v3082 = vadd.f32 0.0, %v3081
        %v3083 = vpop.f32.mrb[0].mxu0
        %v3084 = vadd.f32 0.0, %v3083
        %3085 = vmatprep.mubr.bf16.mxu0 %v2474
        %3086 = vmatmul.mubr.bf16.gmra.mrb[0].mxu0 %v2473
        %v3087 = vpop.f32.mrb[0].mxu0
        %v3088 = vadd.f32 0.0, %v3087
        %v3089 = vpop.f32.mrb[0].mxu0
        %v3090 = vadd.f32 0.0, %v3089
        %v3091 = vpop.f32.mrb[0].mxu0
        %v3092 = vadd.f32 0.0, %v3091
        %v3093 = vpop.f32.mrb[0].mxu0
        %v3094 = vadd.f32 0.0, %v3093
        %3095 = vmatprep.mubr.bf16.mxu0 %v2477
        %3096 = vmatmul.mubr.bf16.gmra.mrb[0].mxu0 %v2476
        %v3097 = vpop.f32.mrb[0].mxu0
        %v3098 = vadd.f32 0.0, %v3097
        %v3099 = vpop.f32.mrb[0].mxu0
        %v3100 = vadd.f32 0.0, %v3099
        %v3101 = vpop.f32.mrb[0].mxu0
        %v3102 = vadd.f32 0.0, %v3101
        %v3103 = vpop.f32.mrb[0].mxu0
        %v3104 = vadd.f32 0.0, %v3103
        %3105 = vdwg.mxu0
        %3106 = vmatprep.subr.bf16.mxu0 %v2094
        %3107 = vmatpush1.bf16.msra.mxu0 %v2153
        %3108 = vmatprep.subr.bf16.mxu0 %v2102
        %3109 = vmatpush1.bf16.msra.mxu0 %v2156
        %3110 = vmatprep.subr.bf16.mxu0 %v2110
        %3111 = vmatpush1.bf16.msra.mxu0 %v2159
        %3112 = vmatprep.subr.bf16.mxu0 %v2118
        %3113 = vmatpush1.bf16.msra.mxu0 %v2162
        %3114 = vmatprep.subr.bf16.mxu0 %v2126
        %3115 = vmatpush1.bf16.msra.mxu0 %v2165
        %3116 = vmatprep.subr.bf16.mxu0 %v2134
        %3117 = vmatpush1.bf16.msra.mxu0 %v2168
        %3118 = vmatprep.subr.bf16.mxu0 %v2142
        %3119 = vmatpush1.bf16.msra.mxu0 %v2171
        %3120 = vmatprep.subr.bf16.mxu0 %v2150
        %3121 = vmatpush1.bf16.msra.mxu0 %v2174
        %3122 = vmatprep.subr.bf16.mxu0 0
        %3123 = vmatpush1.bf16.msra.mxu0 0
        %3124 = vmatprep.subr.bf16.mxu0 0
        %3125 = vmatpush1.bf16.msra.mxu0 0
        %3126 = vmatprep.subr.bf16.mxu0 0
        %3127 = vmatpush1.bf16.msra.mxu0 0
        %3128 = vmatprep.subr.bf16.mxu0 0
        %3129 = vmatpush1.bf16.msra.mxu0 0
        %3130 = vmatprep.subr.bf16.mxu0 0
        %3131 = vmatpush1.bf16.msra.mxu0 0
        %3132 = vmatprep.subr.bf16.mxu0 0
        %3133 = vmatpush1.bf16.msra.mxu0 0
        %3134 = vmatprep.subr.bf16.mxu0 0
        %3135 = vmatpush1.bf16.msra.mxu0 0
        %3136 = vmatprep.subr.bf16.mxu0 0
        %3137 = vmatpush1.bf16.msra.mxu0 0
        %3138 = vmatprep.mubr.bf16.mxu0 0
        %3139 = vmatmul.mubr.bf16.gmra.mrb[0].mxu0 %v2433
        %v3140 = vpop.f32.mrb[0].mxu0
        %v3141 = vadd.f32 %v2948, %v3140
        %v3142 = vpop.f32.mrb[0].mxu0
        %v3143 = vadd.f32 %v2950, %v3142
        %v3144 = vpop.f32.mrb[0].mxu0
        %v3145 = vadd.f32 %v2952, %v3144
        %v3146 = vpop.f32.mrb[0].mxu0
        %v3147 = vadd.f32 %v2954, %v3146
        %3148 = vmatprep.mubr.bf16.mxu0 0
        %3149 = vmatmul.mubr.bf16.gmra.mrb[0].mxu0 %v2436
        %v3150 = vpop.f32.mrb[0].mxu0
        %v3151 = vadd.f32 %v2958, %v3150
        %v3152 = vpop.f32.mrb[0].mxu0
        %v3153 = vadd.f32 %v2960, %v3152
        %v3154 = vpop.f32.mrb[0].mxu0
        %v3155 = vadd.f32 %v2962, %v3154
        %v3156 = vpop.f32.mrb[0].mxu0
        %v3157 = vadd.f32 %v2964, %v3156
        %3158 = vmatprep.mubr.bf16.mxu0 0
        %3159 = vmatmul.mubr.bf16.gmra.mrb[0].mxu0 %v2439
        %v3160 = vpop.f32.mrb[0].mxu0
        %v3161 = vadd.f32 %v2968, %v3160
        %v3162 = vpop.f32.mrb[0].mxu0
        %v3163 = vadd.f32 %v2970, %v3162
        %v3164 = vpop.f32.mrb[0].mxu0
        %v3165 = vadd.f32 %v2972, %v3164
        %v3166 = vpop.f32.mrb[0].mxu0
        %v3167 = vadd.f32 %v2974, %v3166
        %3168 = vmatprep.mubr.bf16.mxu0 0
        %3169 = vmatmul.mubr.bf16.gmra.mrb[0].mxu0 %v2442
        %v3170 = vpop.f32.mrb[0].mxu0
        %v3171 = vadd.f32 %v2978, %v3170
        %v3172 = vpop.f32.mrb[0].mxu0
        %v3173 = vadd.f32 %v2980, %v3172
        %v3174 = vpop.f32.mrb[0].mxu0
        %v3175 = vadd.f32 %v2982, %v3174
        %v3176 = vpop.f32.mrb[0].mxu0
        %v3177 = vadd.f32 %v2984, %v3176
        %3178 = vmatprep.mubr.bf16.mxu0 0
        %3179 = vmatmul.mubr.bf16.gmra.mrb[0].mxu0 %v2445
        %v3180 = vpop.f32.mrb[0].mxu0
        %v3181 = vadd.f32 %v2988, %v3180
        %v3182 = vpop.f32.mrb[0].mxu0
        %v3183 = vadd.f32 %v2990, %v3182
        %v3184 = vpop.f32.mrb[0].mxu0
        %v3185 = vadd.f32 %v2992, %v3184
        %v3186 = vpop.f32.mrb[0].mxu0
        %v3187 = vadd.f32 %v2994, %v3186
        %3188 = vmatprep.mubr.bf16.mxu0 0
        %3189 = vmatmul.mubr.bf16.gmra.mrb[0].mxu0 %v2448
        %v3190 = vpop.f32.mrb[0].mxu0
        %v3191 = vadd.f32 %v2998, %v3190
        %v3192 = vpop.f32.mrb[0].mxu0
        %v3193 = vadd.f32 %v3000, %v3192
        %v3194 = vpop.f32.mrb[0].mxu0
        %v3195 = vadd.f32 %v3002, %v3194
        %v3196 = vpop.f32.mrb[0].mxu0
        %v3197 = vadd.f32 %v3004, %v3196
        %3198 = vmatprep.mubr.bf16.mxu0 0
        %3199 = vmatmul.mubr.bf16.gmra.mrb[0].mxu0 %v2451
        %v3200 = vpop.f32.mrb[0].mxu0
        %v3201 = vadd.f32 %v3008, %v3200
        %v3202 = vpop.f32.mrb[0].mxu0
        %v3203 = vadd.f32 %v3010, %v3202
        %v3204 = vpop.f32.mrb[0].mxu0
        %v3205 = vadd.f32 %v3012, %v3204
        %v3206 = vpop.f32.mrb[0].mxu0
        %v3207 = vadd.f32 %v3014, %v3206
        %3208 = vmatprep.mubr.bf16.mxu0 0
        %3209 = vmatmul.mubr.bf16.gmra.mrb[0].mxu0 %v2454
        %v3210 = vpop.f32.mrb[0].mxu0
        %v3211 = vadd.f32 %v3018, %v3210
        %v3212 = vpop.f32.mrb[0].mxu0
        %v3213 = vadd.f32 %v3020, %v3212
        %v3214 = vpop.f32.mrb[0].mxu0
        %v3215 = vadd.f32 %v3022, %v3214
        %v3216 = vpop.f32.mrb[0].mxu0
        %v3217 = vadd.f32 %v3024, %v3216
        %3218 = vmatprep.mubr.bf16.mxu0 0
        %3219 = vmatmul.mubr.bf16.gmra.mrb[0].mxu0 %v2457
        %v3220 = vpop.f32.mrb[0].mxu0
        %v3221 = vadd.f32 %v3028, %v3220
        %v3222 = vpop.f32.mrb[0].mxu0
        %v3223 = vadd.f32 %v3030, %v3222
        %v3224 = vpop.f32.mrb[0].mxu0
        %v3225 = vadd.f32 %v3032, %v3224
        %v3226 = vpop.f32.mrb[0].mxu0
        %v3227 = vadd.f32 %v3034, %v3226
        %3228 = vmatprep.mubr.bf16.mxu0 0
        %3229 = vmatmul.mubr.bf16.gmra.mrb[0].mxu0 %v2460
        %v3230 = vpop.f32.mrb[0].mxu0
        %v3231 = vadd.f32 %v3038, %v3230
        %v3232 = vpop.f32.mrb[0].mxu0
        %v3233 = vadd.f32 %v3040, %v3232
        %v3234 = vpop.f32.mrb[0].mxu0
        %v3235 = vadd.f32 %v3042, %v3234
        %v3236 = vpop.f32.mrb[0].mxu0
        %v3237 = vadd.f32 %v3044, %v3236
        %3238 = vmatprep.mubr.bf16.mxu0 0
        %3239 = vmatmul.mubr.bf16.gmra.mrb[0].mxu0 %v2463
        %v3240 = vpop.f32.mrb[0].mxu0
        %v3241 = vadd.f32 %v3048, %v3240
        %v3242 = vpop.f32.mrb[0].mxu0
        %v3243 = vadd.f32 %v3050, %v3242
        %v3244 = vpop.f32.mrb[0].mxu0
        %v3245 = vadd.f32 %v3052, %v3244
        %v3246 = vpop.f32.mrb[0].mxu0
        %v3247 = vadd.f32 %v3054, %v3246
        %3248 = vmatprep.mubr.bf16.mxu0 0
        %3249 = vmatmul.mubr.bf16.gmra.mrb[0].mxu0 %v2466
        %v3250 = vpop.f32.mrb[0].mxu0
        %v3251 = vadd.f32 %v3058, %v3250
        %v3252 = vpop.f32.mrb[0].mxu0
        %v3253 = vadd.f32 %v3060, %v3252
        %v3254 = vpop.f32.mrb[0].mxu0
        %v3255 = vadd.f32 %v3062, %v3254
        %v3256 = vpop.f32.mrb[0].mxu0
        %v3257 = vadd.f32 %v3064, %v3256
        %3258 = vmatprep.mubr.bf16.mxu0 0
        %3259 = vmatmul.mubr.bf16.gmra.mrb[0].mxu0 %v2469
        %v3260 = vpop.f32.mrb[0].mxu0
        %v3261 = vadd.f32 %v3068, %v3260
        %v3262 = vpop.f32.mrb[0].mxu0
        %v3263 = vadd.f32 %v3070, %v3262
        %v3264 = vpop.f32.mrb[0].mxu0
        %v3265 = vadd.f32 %v3072, %v3264
        %v3266 = vpop.f32.mrb[0].mxu0
        %v3267 = vadd.f32 %v3074, %v3266
        %3268 = vmatprep.mubr.bf16.mxu0 0
        %3269 = vmatmul.mubr.bf16.gmra.mrb[0].mxu0 %v2472
        %v3270 = vpop.f32.mrb[0].mxu0
        %v3271 = vadd.f32 %v3078, %v3270
        %v3272 = vpop.f32.mrb[0].mxu0
        %v3273 = vadd.f32 %v3080, %v3272
        %v3274 = vpop.f32.mrb[0].mxu0
        %v3275 = vadd.f32 %v3082, %v3274
        %v3276 = vpop.f32.mrb[0].mxu0
        %v3277 = vadd.f32 %v3084, %v3276
        %3278 = vmatprep.mubr.bf16.mxu0 0
        %3279 = vmatmul.mubr.bf16.gmra.mrb[0].mxu0 %v2475
        %v3280 = vpop.f32.mrb[0].mxu0
        %v3281 = vadd.f32 %v3088, %v3280
        %v3282 = vpop.f32.mrb[0].mxu0
        %v3283 = vadd.f32 %v3090, %v3282
        %v3284 = vpop.f32.mrb[0].mxu0
        %v3285 = vadd.f32 %v3092, %v3284
        %v3286 = vpop.f32.mrb[0].mxu0
        %v3287 = vadd.f32 %v3094, %v3286
        %3288 = vmatprep.mubr.bf16.mxu0 0
        %3289 = vmatmul.mubr.bf16.gmra.mrb[0].mxu0 %v2478
        %v3290 = vpop.f32.mrb[0].mxu0
        %v3291 = vadd.f32 %v3098, %v3290
        %v3292 = vpop.f32.mrb[0].mxu0
        %v3293 = vadd.f32 %v3100, %v3292
        %v3294 = vpop.f32.mrb[0].mxu0
        %v3295 = vadd.f32 %v3102, %v3294
        %v3296 = vpop.f32.mrb[0].mxu0
        %v3297 = vadd.f32 %v3104, %v3296
        %3298 = vdwg.mxu0
        %v3299 = vpack.c.bf16 %v2759, %v2755
        %v3300 = vpack.c.bf16 %v2761, %v2757
        %v3301 = vpack.c.bf16 %v3145, %v3141
        %v3302 = vpack.c.bf16 %v3147, %v3143
        %v3303 = vpack.c.bf16 %v2769, %v2765
        %v3304 = vpack.c.bf16 %v2771, %v2767
        %v3305 = vpack.c.bf16 %v3155, %v3151
        %v3306 = vpack.c.bf16 %v3157, %v3153
        %v3307 = vpack.c.bf16 %v2779, %v2775
        %v3308 = vpack.c.bf16 %v2781, %v2777
        %v3309 = vpack.c.bf16 %v3165, %v3161
        %v3310 = vpack.c.bf16 %v3167, %v3163
        %v3311 = vpack.c.bf16 %v2789, %v2785
        %v3312 = vpack.c.bf16 %v2791, %v2787
        %v3313 = vpack.c.bf16 %v3175, %v3171
        %v3314 = vpack.c.bf16 %v3177, %v3173
        %v3315 = vpack.c.bf16 %v2799, %v2795
        %v3316 = vpack.c.bf16 %v2801, %v2797
        %v3317 = vpack.c.bf16 %v3185, %v3181
        %v3318 = vpack.c.bf16 %v3187, %v3183
        %v3319 = vpack.c.bf16 %v2809, %v2805
        %v3320 = vpack.c.bf16 %v2811, %v2807
        %v3321 = vpack.c.bf16 %v3195, %v3191
        %v3322 = vpack.c.bf16 %v3197, %v3193
        %v3323 = vpack.c.bf16 %v2819, %v2815
        %v3324 = vpack.c.bf16 %v2821, %v2817
        %v3325 = vpack.c.bf16 %v3205, %v3201
        %v3326 = vpack.c.bf16 %v3207, %v3203
        %v3327 = vpack.c.bf16 %v2829, %v2825
        %v3328 = vpack.c.bf16 %v2831, %v2827
        %v3329 = vpack.c.bf16 %v3215, %v3211
        %v3330 = vpack.c.bf16 %v3217, %v3213
        %v3331 = vpack.c.bf16 %v2839, %v2835
        %v3332 = vpack.c.bf16 %v2841, %v2837
        %v3333 = vpack.c.bf16 %v3225, %v3221
        %v3334 = vpack.c.bf16 %v3227, %v3223
        %v3335 = vpack.c.bf16 %v2849, %v2845
        %v3336 = vpack.c.bf16 %v2851, %v2847
        %v3337 = vpack.c.bf16 %v3235, %v3231
        %v3338 = vpack.c.bf16 %v3237, %v3233
        %v3339 = vpack.c.bf16 %v2859, %v2855
        %v3340 = vpack.c.bf16 %v2861, %v2857
        %v3341 = vpack.c.bf16 %v3245, %v3241
        %v3342 = vpack.c.bf16 %v3247, %v3243
        %v3343 = vpack.c.bf16 %v2869, %v2865
        %v3344 = vpack.c.bf16 %v2871, %v2867
        %v3345 = vpack.c.bf16 %v3255, %v3251
        %v3346 = vpack.c.bf16 %v3257, %v3253
        %v3347 = vpack.c.bf16 %v2879, %v2875
        %v3348 = vpack.c.bf16 %v2881, %v2877
        %v3349 = vpack.c.bf16 %v3265, %v3261
        %v3350 = vpack.c.bf16 %v3267, %v3263
        %v3351 = vpack.c.bf16 %v2889, %v2885
        %v3352 = vpack.c.bf16 %v2891, %v2887
        %v3353 = vpack.c.bf16 %v3275, %v3271
        %v3354 = vpack.c.bf16 %v3277, %v3273
        %v3355 = vpack.c.bf16 %v2899, %v2895
        %v3356 = vpack.c.bf16 %v2901, %v2897
        %v3357 = vpack.c.bf16 %v3285, %v3281
        %v3358 = vpack.c.bf16 %v3287, %v3283
        %v3359 = vpack.c.bf16 %v2909, %v2905
        %v3360 = vpack.c.bf16 %v2911, %v2907
        %v3361 = vpack.c.bf16 %v3295, %v3291
        %v3362 = vpack.c.bf16 %v3297, %v3293
        %v3363 = vld [vmem:[%s6] sm:$0xf]
        %v3364 = vld [vmem:[%s6 + $0x4] sm:$0xf]
        %v3365 = vld [vmem:[%s6 + $0x8] sm:$0xf]
        %v3366 = vld [vmem:[%s6 + $0xc] sm:$0xf]
        %v3367 = vld [vmem:[%s6 + $0x10] sm:$0xf]
        %v3368 = vld [vmem:[%s6 + $0x14] sm:$0xf]
        %v3369 = vld [vmem:[%s6 + $0x18] sm:$0xf]
        %v3370 = vld [vmem:[%s6 + $0x1c] sm:$0xf]
        %v3371 = vld [vmem:[%s6 + $0x20] sm:$0xf]
        %v3372 = vld [vmem:[%s6 + $0x24] sm:$0xf]
        %v3373 = vld [vmem:[%s6 + $0x28] sm:$0xf]
        %v3374 = vld [vmem:[%s6 + $0x2c] sm:$0xf]
        %v3375 = vld [vmem:[%s6 + $0x30] sm:$0xf]
        %v3376 = vld [vmem:[%s6 + $0x34] sm:$0xf]
        %v3377 = vld [vmem:[%s6 + $0x38] sm:$0xf]
        %v3378 = vld [vmem:[%s6 + $0x3c] sm:$0xf]
        %v3379 = vld [vmem:[%s6 + $0x40] sm:$0xf]
        %v3380 = vld [vmem:[%s6 + $0x44] sm:$0xf]
        %v3381 = vld [vmem:[%s6 + $0x48] sm:$0xf]
        %v3382 = vld [vmem:[%s6 + $0x4c] sm:$0xf]
        %v3383 = vld [vmem:[%s6 + $0x50] sm:$0xf]
        %v3384 = vld [vmem:[%s6 + $0x54] sm:$0xf]
        %v3385 = vld [vmem:[%s6 + $0x58] sm:$0xf]
        %v3386 = vld [vmem:[%s6 + $0x5c] sm:$0xf]
        %v3387 = vld [vmem:[%s6 + $0x60] sm:$0xf]
        %v3388 = vld [vmem:[%s6 + $0x64] sm:$0xf]
        %v3389 = vld [vmem:[%s6 + $0x68] sm:$0xf]
        %v3390 = vld [vmem:[%s6 + $0x6c] sm:$0xf]
        %v3391 = vld [vmem:[%s6 + $0x70] sm:$0xf]
        %v3392 = vld [vmem:[%s6 + $0x74] sm:$0xf]
        %v3393 = vld [vmem:[%s6 + $0x78] sm:$0xf]
        %v3394 = vld [vmem:[%s6 + $0x7c] sm:$0xf]
        %3396 = vset.pattern.permute.xlu0 0
        %3397 = vperm.xlu0 %3396, %v3363
        %v3398 = vpop.permute.xlu0 %3397
        %v3401 = vunpack.c.l.s4 839922192
        %v3402 = vunpack.c.0.s8 %v3401
        %v3403 = vlaneseq
        %v3404 = vshrl.u32 %v3403, 7
        %v3405 = vsub.s32 %v3402, %v3404
        %v3406 = vrot.slane %v3398, %v3405
        %3408 = vset.pattern.permute.xlu0 0
        %3409 = vperm.xlu0 %3408, %v3364
        %v3410 = vpop.permute.xlu0 %3409
        %v3413 = vunpack.c.l.s4 839922192
        %v3414 = vunpack.c.0.s8 %v3413
        %v3415 = vlaneseq
        %v3416 = vshrl.u32 %v3415, 7
        %v3417 = vsub.s32 %v3414, %v3416
        %v3418 = vrot.slane %v3410, %v3417
        %3420 = vset.pattern.permute.xlu0 0
        %3421 = vperm.xlu0 %3420, %v3365
        %v3422 = vpop.permute.xlu0 %3421
        %v3425 = vunpack.c.l.s4 839922192
        %v3426 = vunpack.c.0.s8 %v3425
        %v3427 = vlaneseq
        %v3428 = vshrl.u32 %v3427, 7
        %v3429 = vsub.s32 %v3426, %v3428
        %v3430 = vrot.slane %v3422, %v3429
        %3432 = vset.pattern.permute.xlu0 0
        %3433 = vperm.xlu0 %3432, %v3366
        %v3434 = vpop.permute.xlu0 %3433
        %v3437 = vunpack.c.l.s4 839922192
        %v3438 = vunpack.c.0.s8 %v3437
        %v3439 = vlaneseq
        %v3440 = vshrl.u32 %v3439, 7
        %v3441 = vsub.s32 %v3438, %v3440
        %v3442 = vrot.slane %v3434, %v3441
        %3444 = vset.pattern.permute.xlu0 0
        %3445 = vperm.xlu0 %3444, %v3367
        %v3446 = vpop.permute.xlu0 %3445
        %v3449 = vunpack.c.l.s4 839922192
        %v3450 = vunpack.c.0.s8 %v3449
        %v3451 = vlaneseq
        %v3452 = vshrl.u32 %v3451, 7
        %v3453 = vsub.s32 %v3450, %v3452
        %v3454 = vrot.slane %v3446, %v3453
        %3456 = vset.pattern.permute.xlu0 0
        %3457 = vperm.xlu0 %3456, %v3368
        %v3458 = vpop.permute.xlu0 %3457
        %v3461 = vunpack.c.l.s4 839922192
        %v3462 = vunpack.c.0.s8 %v3461
        %v3463 = vlaneseq
        %v3464 = vshrl.u32 %v3463, 7
        %v3465 = vsub.s32 %v3462, %v3464
        %v3466 = vrot.slane %v3458, %v3465
        %3468 = vset.pattern.permute.xlu0 0
        %3469 = vperm.xlu0 %3468, %v3369
        %v3470 = vpop.permute.xlu0 %3469
        %v3473 = vunpack.c.l.s4 839922192
        %v3474 = vunpack.c.0.s8 %v3473
        %v3475 = vlaneseq
        %v3476 = vshrl.u32 %v3475, 7
        %v3477 = vsub.s32 %v3474, %v3476
        %v3478 = vrot.slane %v3470, %v3477
        %3480 = vset.pattern.permute.xlu0 0
        %3481 = vperm.xlu0 %3480, %v3370
        %v3482 = vpop.permute.xlu0 %3481
        %v3485 = vunpack.c.l.s4 839922192
        %v3486 = vunpack.c.0.s8 %v3485
        %v3487 = vlaneseq
        %v3488 = vshrl.u32 %v3487, 7
        %v3489 = vsub.s32 %v3486, %v3488
        %v3490 = vrot.slane %v3482, %v3489
        %3492 = vset.pattern.permute.xlu0 0
        %3493 = vperm.xlu0 %3492, %v3371
        %v3494 = vpop.permute.xlu0 %3493
        %v3497 = vunpack.c.l.s4 839922192
        %v3498 = vunpack.c.0.s8 %v3497
        %v3499 = vlaneseq
        %v3500 = vshrl.u32 %v3499, 7
        %v3501 = vsub.s32 %v3498, %v3500
        %v3502 = vrot.slane %v3494, %v3501
        %3504 = vset.pattern.permute.xlu0 0
        %3505 = vperm.xlu0 %3504, %v3372
        %v3506 = vpop.permute.xlu0 %3505
        %v3509 = vunpack.c.l.s4 839922192
        %v3510 = vunpack.c.0.s8 %v3509
        %v3511 = vlaneseq
        %v3512 = vshrl.u32 %v3511, 7
        %v3513 = vsub.s32 %v3510, %v3512
        %v3514 = vrot.slane %v3506, %v3513
        %3516 = vset.pattern.permute.xlu0 0
        %3517 = vperm.xlu0 %3516, %v3373
        %v3518 = vpop.permute.xlu0 %3517
        %v3521 = vunpack.c.l.s4 839922192
        %v3522 = vunpack.c.0.s8 %v3521
        %v3523 = vlaneseq
        %v3524 = vshrl.u32 %v3523, 7
        %v3525 = vsub.s32 %v3522, %v3524
        %v3526 = vrot.slane %v3518, %v3525
        %3528 = vset.pattern.permute.xlu0 0
        %3529 = vperm.xlu0 %3528, %v3374
        %v3530 = vpop.permute.xlu0 %3529
        %v3533 = vunpack.c.l.s4 839922192
        %v3534 = vunpack.c.0.s8 %v3533
        %v3535 = vlaneseq
        %v3536 = vshrl.u32 %v3535, 7
        %v3537 = vsub.s32 %v3534, %v3536
        %v3538 = vrot.slane %v3530, %v3537
        %3540 = vset.pattern.permute.xlu0 0
        %3541 = vperm.xlu0 %3540, %v3375
        %v3542 = vpop.permute.xlu0 %3541
        %v3545 = vunpack.c.l.s4 839922192
        %v3546 = vunpack.c.0.s8 %v3545
        %v3547 = vlaneseq
        %v3548 = vshrl.u32 %v3547, 7
        %v3549 = vsub.s32 %v3546, %v3548
        %v3550 = vrot.slane %v3542, %v3549
        %3552 = vset.pattern.permute.xlu0 0
        %3553 = vperm.xlu0 %3552, %v3376
        %v3554 = vpop.permute.xlu0 %3553
        %v3557 = vunpack.c.l.s4 839922192
        %v3558 = vunpack.c.0.s8 %v3557
        %v3559 = vlaneseq
        %v3560 = vshrl.u32 %v3559, 7
        %v3561 = vsub.s32 %v3558, %v3560
        %v3562 = vrot.slane %v3554, %v3561
        %3564 = vset.pattern.permute.xlu0 0
        %3565 = vperm.xlu0 %3564, %v3377
        %v3566 = vpop.permute.xlu0 %3565
        %v3569 = vunpack.c.l.s4 839922192
        %v3570 = vunpack.c.0.s8 %v3569
        %v3571 = vlaneseq
        %v3572 = vshrl.u32 %v3571, 7
        %v3573 = vsub.s32 %v3570, %v3572
        %v3574 = vrot.slane %v3566, %v3573
        %3576 = vset.pattern.permute.xlu0 0
        %3577 = vperm.xlu0 %3576, %v3378
        %v3578 = vpop.permute.xlu0 %3577
        %v3581 = vunpack.c.l.s4 839922192
        %v3582 = vunpack.c.0.s8 %v3581
        %v3583 = vlaneseq
        %v3584 = vshrl.u32 %v3583, 7
        %v3585 = vsub.s32 %v3582, %v3584
        %v3586 = vrot.slane %v3578, %v3585
        %3588 = vset.pattern.permute.xlu0 0
        %3589 = vperm.xlu0 %3588, %v3379
        %v3590 = vpop.permute.xlu0 %3589
        %v3593 = vunpack.c.l.s4 839922192
        %v3594 = vunpack.c.0.s8 %v3593
        %v3595 = vlaneseq
        %v3596 = vshrl.u32 %v3595, 7
        %v3597 = vsub.s32 %v3594, %v3596
        %v3598 = vrot.slane %v3590, %v3597
        %3600 = vset.pattern.permute.xlu0 0
        %3601 = vperm.xlu0 %3600, %v3380
        %v3602 = vpop.permute.xlu0 %3601
        %v3605 = vunpack.c.l.s4 839922192
        %v3606 = vunpack.c.0.s8 %v3605
        %v3607 = vlaneseq
        %v3608 = vshrl.u32 %v3607, 7
        %v3609 = vsub.s32 %v3606, %v3608
        %v3610 = vrot.slane %v3602, %v3609
        %3612 = vset.pattern.permute.xlu0 0
        %3613 = vperm.xlu0 %3612, %v3381
        %v3614 = vpop.permute.xlu0 %3613
        %v3617 = vunpack.c.l.s4 839922192
        %v3618 = vunpack.c.0.s8 %v3617
        %v3619 = vlaneseq
        %v3620 = vshrl.u32 %v3619, 7
        %v3621 = vsub.s32 %v3618, %v3620
        %v3622 = vrot.slane %v3614, %v3621
        %3624 = vset.pattern.permute.xlu0 0
        %3625 = vperm.xlu0 %3624, %v3382
        %v3626 = vpop.permute.xlu0 %3625
        %v3629 = vunpack.c.l.s4 839922192
        %v3630 = vunpack.c.0.s8 %v3629
        %v3631 = vlaneseq
        %v3632 = vshrl.u32 %v3631, 7
        %v3633 = vsub.s32 %v3630, %v3632
        %v3634 = vrot.slane %v3626, %v3633
        %3636 = vset.pattern.permute.xlu0 0
        %3637 = vperm.xlu0 %3636, %v3383
        %v3638 = vpop.permute.xlu0 %3637
        %v3641 = vunpack.c.l.s4 839922192
        %v3642 = vunpack.c.0.s8 %v3641
        %v3643 = vlaneseq
        %v3644 = vshrl.u32 %v3643, 7
        %v3645 = vsub.s32 %v3642, %v3644
        %v3646 = vrot.slane %v3638, %v3645
        %3648 = vset.pattern.permute.xlu0 0
        %3649 = vperm.xlu0 %3648, %v3384
        %v3650 = vpop.permute.xlu0 %3649
        %v3653 = vunpack.c.l.s4 839922192
        %v3654 = vunpack.c.0.s8 %v3653
        %v3655 = vlaneseq
        %v3656 = vshrl.u32 %v3655, 7
        %v3657 = vsub.s32 %v3654, %v3656
        %v3658 = vrot.slane %v3650, %v3657
        %3660 = vset.pattern.permute.xlu0 0
        %3661 = vperm.xlu0 %3660, %v3385
        %v3662 = vpop.permute.xlu0 %3661
        %v3665 = vunpack.c.l.s4 839922192
        %v3666 = vunpack.c.0.s8 %v3665
        %v3667 = vlaneseq
        %v3668 = vshrl.u32 %v3667, 7
        %v3669 = vsub.s32 %v3666, %v3668
        %v3670 = vrot.slane %v3662, %v3669
        %3672 = vset.pattern.permute.xlu0 0
        %3673 = vperm.xlu0 %3672, %v3386
        %v3674 = vpop.permute.xlu0 %3673
        %v3677 = vunpack.c.l.s4 839922192
        %v3678 = vunpack.c.0.s8 %v3677
        %v3679 = vlaneseq
        %v3680 = vshrl.u32 %v3679, 7
        %v3681 = vsub.s32 %v3678, %v3680
        %v3682 = vrot.slane %v3674, %v3681
        %3684 = vset.pattern.permute.xlu0 0
        %3685 = vperm.xlu0 %3684, %v3387
        %v3686 = vpop.permute.xlu0 %3685
        %v3689 = vunpack.c.l.s4 839922192
        %v3690 = vunpack.c.0.s8 %v3689
        %v3691 = vlaneseq
        %v3692 = vshrl.u32 %v3691, 7
        %v3693 = vsub.s32 %v3690, %v3692
        %v3694 = vrot.slane %v3686, %v3693
        %3696 = vset.pattern.permute.xlu0 0
        %3697 = vperm.xlu0 %3696, %v3388
        %v3698 = vpop.permute.xlu0 %3697
        %v3701 = vunpack.c.l.s4 839922192
        %v3702 = vunpack.c.0.s8 %v3701
        %v3703 = vlaneseq
        %v3704 = vshrl.u32 %v3703, 7
        %v3705 = vsub.s32 %v3702, %v3704
        %v3706 = vrot.slane %v3698, %v3705
        %3708 = vset.pattern.permute.xlu0 0
        %3709 = vperm.xlu0 %3708, %v3389
        %v3710 = vpop.permute.xlu0 %3709
        %v3713 = vunpack.c.l.s4 839922192
        %v3714 = vunpack.c.0.s8 %v3713
        %v3715 = vlaneseq
        %v3716 = vshrl.u32 %v3715, 7
        %v3717 = vsub.s32 %v3714, %v3716
        %v3718 = vrot.slane %v3710, %v3717
        %3720 = vset.pattern.permute.xlu0 0
        %3721 = vperm.xlu0 %3720, %v3390
        %v3722 = vpop.permute.xlu0 %3721
        %v3725 = vunpack.c.l.s4 839922192
        %v3726 = vunpack.c.0.s8 %v3725
        %v3727 = vlaneseq
        %v3728 = vshrl.u32 %v3727, 7
        %v3729 = vsub.s32 %v3726, %v3728
        %v3730 = vrot.slane %v3722, %v3729
        %3732 = vset.pattern.permute.xlu0 0
        %3733 = vperm.xlu0 %3732, %v3391
        %v3734 = vpop.permute.xlu0 %3733
        %v3737 = vunpack.c.l.s4 839922192
        %v3738 = vunpack.c.0.s8 %v3737
        %v3739 = vlaneseq
        %v3740 = vshrl.u32 %v3739, 7
        %v3741 = vsub.s32 %v3738, %v3740
        %v3742 = vrot.slane %v3734, %v3741
        %3744 = vset.pattern.permute.xlu0 0
        %3745 = vperm.xlu0 %3744, %v3392
        %v3746 = vpop.permute.xlu0 %3745
        %v3749 = vunpack.c.l.s4 839922192
        %v3750 = vunpack.c.0.s8 %v3749
        %v3751 = vlaneseq
        %v3752 = vshrl.u32 %v3751, 7
        %v3753 = vsub.s32 %v3750, %v3752
        %v3754 = vrot.slane %v3746, %v3753
        %3756 = vset.pattern.permute.xlu0 0
        %3757 = vperm.xlu0 %3756, %v3393
        %v3758 = vpop.permute.xlu0 %3757
        %v3761 = vunpack.c.l.s4 839922192
        %v3762 = vunpack.c.0.s8 %v3761
        %v3763 = vlaneseq
        %v3764 = vshrl.u32 %v3763, 7
        %v3765 = vsub.s32 %v3762, %v3764
        %v3766 = vrot.slane %v3758, %v3765
        %3768 = vset.pattern.permute.xlu0 0
        %3769 = vperm.xlu0 %3768, %v3394
        %v3770 = vpop.permute.xlu0 %3769
        %v3773 = vunpack.c.l.s4 839922192
        %v3774 = vunpack.c.0.s8 %v3773
        %v3775 = vlaneseq
        %v3776 = vshrl.u32 %v3775, 7
        %v3777 = vsub.s32 %v3774, %v3776
        %v3778 = vrot.slane %v3770, %v3777
        %v3811 = vunpack.c.l.b16 %v3406
        %v3812 = vunpack.c.l.b16 %v3418
        %v3813 = vunpack.c.l.b16 %v3430
        %v3814 = vunpack.c.l.b16 %v3442
        %v3815 = vunpack.c.l.b16 %v3454
        %v3816 = vunpack.c.l.b16 %v3466
        %v3817 = vunpack.c.l.b16 %v3478
        %v3818 = vunpack.c.l.b16 %v3490
        %v3819 = vunpack.c.l.b16 %v3502
        %v3820 = vunpack.c.l.b16 %v3514
        %v3821 = vunpack.c.l.b16 %v3526
        %v3822 = vunpack.c.l.b16 %v3538
        %v3823 = vunpack.c.l.b16 %v3550
        %v3824 = vunpack.c.l.b16 %v3562
        %v3825 = vunpack.c.l.b16 %v3574
        %v3826 = vunpack.c.l.b16 %v3586
        %v3827 = vunpack.c.l.b16 %v3598
        %v3828 = vunpack.c.l.b16 %v3610
        %v3829 = vunpack.c.l.b16 %v3622
        %v3830 = vunpack.c.l.b16 %v3634
        %v3831 = vunpack.c.l.b16 %v3646
        %v3832 = vunpack.c.l.b16 %v3658
        %v3833 = vunpack.c.l.b16 %v3670
        %v3834 = vunpack.c.l.b16 %v3682
        %v3835 = vunpack.c.l.b16 %v3694
        %v3836 = vunpack.c.l.b16 %v3706
        %v3837 = vunpack.c.l.b16 %v3718
        %v3838 = vunpack.c.l.b16 %v3730
        %v3839 = vunpack.c.l.b16 %v3742
        %v3840 = vunpack.c.l.b16 %v3754
        %v3841 = vunpack.c.l.b16 %v3766
        %v3842 = vunpack.c.l.b16 %v3778
        %v3843 = vpack.c.b16 %v3812, %v3811
        %v3844 = vpack.c.b16 %v3814, %v3813
        %v3845 = vpack.c.b16 %v3816, %v3815
        %v3846 = vpack.c.b16 %v3818, %v3817
        %v3847 = vpack.c.b16 %v3820, %v3819
        %v3848 = vpack.c.b16 %v3822, %v3821
        %v3849 = vpack.c.b16 %v3824, %v3823
        %v3850 = vpack.c.b16 %v3826, %v3825
        %v3851 = vpack.c.b16 %v3828, %v3827
        %v3852 = vpack.c.b16 %v3830, %v3829
        %v3853 = vpack.c.b16 %v3832, %v3831
        %v3854 = vpack.c.b16 %v3834, %v3833
        %v3855 = vpack.c.b16 %v3836, %v3835
        %v3856 = vpack.c.b16 %v3838, %v3837
        %v3857 = vpack.c.b16 %v3840, %v3839
        %v3858 = vpack.c.b16 %v3842, %v3841
        %v3875 = vadd.bf16 %v3299, %v3843
        %v3876 = vadd.bf16 %v3300, %v3843
        %v3877 = vadd.bf16 %v3301, %v3843
        %v3878 = vadd.bf16 %v3302, %v3843
        %v3879 = vadd.bf16 %v3303, %v3844
        %v3880 = vadd.bf16 %v3304, %v3844
        %v3881 = vadd.bf16 %v3305, %v3844
        %v3882 = vadd.bf16 %v3306, %v3844
        %v3883 = vadd.bf16 %v3307, %v3845
        %v3884 = vadd.bf16 %v3308, %v3845
        %v3885 = vadd.bf16 %v3309, %v3845
        %v3886 = vadd.bf16 %v3310, %v3845
        %v3887 = vadd.bf16 %v3311, %v3846
        %v3888 = vadd.bf16 %v3312, %v3846
        %v3889 = vadd.bf16 %v3313, %v3846
        %v3890 = vadd.bf16 %v3314, %v3846
        %v3891 = vadd.bf16 %v3315, %v3847
        %v3892 = vadd.bf16 %v3316, %v3847
        %v3893 = vadd.bf16 %v3317, %v3847
        %v3894 = vadd.bf16 %v3318, %v3847
        %v3895 = vadd.bf16 %v3319, %v3848
        %v3896 = vadd.bf16 %v3320, %v3848
        %v3897 = vadd.bf16 %v3321, %v3848
        %v3898 = vadd.bf16 %v3322, %v3848
        %v3899 = vadd.bf16 %v3323, %v3849
        %v3900 = vadd.bf16 %v3324, %v3849
        %v3901 = vadd.bf16 %v3325, %v3849
        %v3902 = vadd.bf16 %v3326, %v3849
        %v3903 = vadd.bf16 %v3327, %v3850
        %v3904 = vadd.bf16 %v3328, %v3850
        %v3905 = vadd.bf16 %v3329, %v3850
        %v3906 = vadd.bf16 %v3330, %v3850
        %v3907 = vadd.bf16 %v3331, %v3851
        %v3908 = vadd.bf16 %v3332, %v3851
        %v3909 = vadd.bf16 %v3333, %v3851
        %v3910 = vadd.bf16 %v3334, %v3851
        %v3911 = vadd.bf16 %v3335, %v3852
        %v3912 = vadd.bf16 %v3336, %v3852
        %v3913 = vadd.bf16 %v3337, %v3852
        %v3914 = vadd.bf16 %v3338, %v3852
        %v3915 = vadd.bf16 %v3339, %v3853
        %v3916 = vadd.bf16 %v3340, %v3853
        %v3917 = vadd.bf16 %v3341, %v3853
        %v3918 = vadd.bf16 %v3342, %v3853
        %v3919 = vadd.bf16 %v3343, %v3854
        %v3920 = vadd.bf16 %v3344, %v3854
        %v3921 = vadd.bf16 %v3345, %v3854
        %v3922 = vadd.bf16 %v3346, %v3854
        %v3923 = vadd.bf16 %v3347, %v3855
        %v3924 = vadd.bf16 %v3348, %v3855
        %v3925 = vadd.bf16 %v3349, %v3855
        %v3926 = vadd.bf16 %v3350, %v3855
        %v3927 = vadd.bf16 %v3351, %v3856
        %v3928 = vadd.bf16 %v3352, %v3856
        %v3929 = vadd.bf16 %v3353, %v3856
        %v3930 = vadd.bf16 %v3354, %v3856
        %v3931 = vadd.bf16 %v3355, %v3857
        %v3932 = vadd.bf16 %v3356, %v3857
        %v3933 = vadd.bf16 %v3357, %v3857
        %v3934 = vadd.bf16 %v3358, %v3857
        %v3935 = vadd.bf16 %v3359, %v3858
        %v3936 = vadd.bf16 %v3360, %v3858
        %v3937 = vadd.bf16 %v3361, %v3858
        %v3938 = vadd.bf16 %v3362, %v3858
        %v3939 = vmax.bf16 %v3875, 0
        %v3940 = vmax.bf16 %v3876, 0
        %v3941 = vmax.bf16 %v3877, 0
        %v3942 = vmax.bf16 %v3878, 0
        %v3943 = vmax.bf16 %v3879, 0
        %v3944 = vmax.bf16 %v3880, 0
        %v3945 = vmax.bf16 %v3881, 0
        %v3946 = vmax.bf16 %v3882, 0
        %v3947 = vmax.bf16 %v3883, 0
        %v3948 = vmax.bf16 %v3884, 0
        %v3949 = vmax.bf16 %v3885, 0
        %v3950 = vmax.bf16 %v3886, 0
        %v3951 = vmax.bf16 %v3887, 0
        %v3952 = vmax.bf16 %v3888, 0
        %v3953 = vmax.bf16 %v3889, 0
        %v3954 = vmax.bf16 %v3890, 0
        %v3955 = vmax.bf16 %v3891, 0
        %v3956 = vmax.bf16 %v3892, 0
        %v3957 = vmax.bf16 %v3893, 0
        %v3958 = vmax.bf16 %v3894, 0
        %v3959 = vmax.bf16 %v3895, 0
        %v3960 = vmax.bf16 %v3896, 0
        %v3961 = vmax.bf16 %v3897, 0
        %v3962 = vmax.bf16 %v3898, 0
        %v3963 = vmax.bf16 %v3899, 0
        %v3964 = vmax.bf16 %v3900, 0
        %v3965 = vmax.bf16 %v3901, 0
        %v3966 = vmax.bf16 %v3902, 0
        %v3967 = vmax.bf16 %v3903, 0
        %v3968 = vmax.bf16 %v3904, 0
        %v3969 = vmax.bf16 %v3905, 0
        %v3970 = vmax.bf16 %v3906, 0
        %v3971 = vmax.bf16 %v3907, 0
        %v3972 = vmax.bf16 %v3908, 0
        %v3973 = vmax.bf16 %v3909, 0
        %v3974 = vmax.bf16 %v3910, 0
        %v3975 = vmax.bf16 %v3911, 0
        %v3976 = vmax.bf16 %v3912, 0
        %v3977 = vmax.bf16 %v3913, 0
        %v3978 = vmax.bf16 %v3914, 0
        %v3979 = vmax.bf16 %v3915, 0
        %v3980 = vmax.bf16 %v3916, 0
        %v3981 = vmax.bf16 %v3917, 0
        %v3982 = vmax.bf16 %v3918, 0
        %v3983 = vmax.bf16 %v3919, 0
        %v3984 = vmax.bf16 %v3920, 0
        %v3985 = vmax.bf16 %v3921, 0
        %v3986 = vmax.bf16 %v3922, 0
        %v3987 = vmax.bf16 %v3923, 0
        %v3988 = vmax.bf16 %v3924, 0
        %v3989 = vmax.bf16 %v3925, 0
        %v3990 = vmax.bf16 %v3926, 0
        %v3991 = vmax.bf16 %v3927, 0
        %v3992 = vmax.bf16 %v3928, 0
        %v3993 = vmax.bf16 %v3929, 0
        %v3994 = vmax.bf16 %v3930, 0
        %v3995 = vmax.bf16 %v3931, 0
        %v3996 = vmax.bf16 %v3932, 0
        %v3997 = vmax.bf16 %v3933, 0
        %v3998 = vmax.bf16 %v3934, 0
        %v3999 = vmax.bf16 %v3935, 0
        %v4000 = vmax.bf16 %v3936, 0
        %v4001 = vmax.bf16 %v3937, 0
        %v4002 = vmax.bf16 %v3938, 0
        %4067 = vrot.lane.b32.xlu0 %v3939, 127
        %v4068 = vpop.permute.xlu0 %4067
        %4069 = vrot.lane.b32.xlu0 %v3940, 127
        %v4070 = vpop.permute.xlu0 %4069
        %4071 = vrot.lane.b32.xlu0 %v3941, 127
        %v4072 = vpop.permute.xlu0 %4071
        %4073 = vrot.lane.b32.xlu0 %v3942, 127
        %v4074 = vpop.permute.xlu0 %4073
        %4075 = vrot.lane.b32.xlu0 %v3943, 127
        %v4076 = vpop.permute.xlu0 %4075
        %4077 = vrot.lane.b32.xlu0 %v3944, 127
        %v4078 = vpop.permute.xlu0 %4077
        %4079 = vrot.lane.b32.xlu0 %v3945, 127
        %v4080 = vpop.permute.xlu0 %4079
        %4081 = vrot.lane.b32.xlu0 %v3946, 127
        %v4082 = vpop.permute.xlu0 %4081
        %4083 = vrot.lane.b32.xlu0 %v3947, 127
        %v4084 = vpop.permute.xlu0 %4083
        %4085 = vrot.lane.b32.xlu0 %v3948, 127
        %v4086 = vpop.permute.xlu0 %4085
        %4087 = vrot.lane.b32.xlu0 %v3949, 127
        %v4088 = vpop.permute.xlu0 %4087
        %4089 = vrot.lane.b32.xlu0 %v3950, 127
        %v4090 = vpop.permute.xlu0 %4089
        %4091 = vrot.lane.b32.xlu0 %v3951, 127
        %v4092 = vpop.permute.xlu0 %4091
        %4093 = vrot.lane.b32.xlu0 %v3952, 127
        %v4094 = vpop.permute.xlu0 %4093
        %4095 = vrot.lane.b32.xlu0 %v3953, 127
        %v4096 = vpop.permute.xlu0 %4095
        %4097 = vrot.lane.b32.xlu0 %v3954, 127
        %v4098 = vpop.permute.xlu0 %4097
        %4099 = vrot.lane.b32.xlu0 %v3955, 127
        %v4100 = vpop.permute.xlu0 %4099
        %4101 = vrot.lane.b32.xlu0 %v3956, 127
        %v4102 = vpop.permute.xlu0 %4101
        %4103 = vrot.lane.b32.xlu0 %v3957, 127
        %v4104 = vpop.permute.xlu0 %4103
        %4105 = vrot.lane.b32.xlu0 %v3958, 127
        %v4106 = vpop.permute.xlu0 %4105
        %4107 = vrot.lane.b32.xlu0 %v3959, 127
        %v4108 = vpop.permute.xlu0 %4107
        %4109 = vrot.lane.b32.xlu0 %v3960, 127
        %v4110 = vpop.permute.xlu0 %4109
        %4111 = vrot.lane.b32.xlu0 %v3961, 127
        %v4112 = vpop.permute.xlu0 %4111
        %4113 = vrot.lane.b32.xlu0 %v3962, 127
        %v4114 = vpop.permute.xlu0 %4113
        %4115 = vrot.lane.b32.xlu0 %v3963, 127
        %v4116 = vpop.permute.xlu0 %4115
        %4117 = vrot.lane.b32.xlu0 %v3964, 127
        %v4118 = vpop.permute.xlu0 %4117
        %4119 = vrot.lane.b32.xlu0 %v3965, 127
        %v4120 = vpop.permute.xlu0 %4119
        %4121 = vrot.lane.b32.xlu0 %v3966, 127
        %v4122 = vpop.permute.xlu0 %4121
        %4123 = vrot.lane.b32.xlu0 %v3967, 127
        %v4124 = vpop.permute.xlu0 %4123
        %4125 = vrot.lane.b32.xlu0 %v3968, 127
        %v4126 = vpop.permute.xlu0 %4125
        %4127 = vrot.lane.b32.xlu0 %v3969, 127
        %v4128 = vpop.permute.xlu0 %4127
        %4129 = vrot.lane.b32.xlu0 %v3970, 127
        %v4130 = vpop.permute.xlu0 %4129
        %4131 = vrot.lane.b32.xlu0 %v3971, 127
        %v4132 = vpop.permute.xlu0 %4131
        %4133 = vrot.lane.b32.xlu0 %v3972, 127
        %v4134 = vpop.permute.xlu0 %4133
        %4135 = vrot.lane.b32.xlu0 %v3973, 127
        %v4136 = vpop.permute.xlu0 %4135
        %4137 = vrot.lane.b32.xlu0 %v3974, 127
        %v4138 = vpop.permute.xlu0 %4137
        %4139 = vrot.lane.b32.xlu0 %v3975, 127
        %v4140 = vpop.permute.xlu0 %4139
        %4141 = vrot.lane.b32.xlu0 %v3976, 127
        %v4142 = vpop.permute.xlu0 %4141
        %4143 = vrot.lane.b32.xlu0 %v3977, 127
        %v4144 = vpop.permute.xlu0 %4143
        %4145 = vrot.lane.b32.xlu0 %v3978, 127
        %v4146 = vpop.permute.xlu0 %4145
        %4147 = vrot.lane.b32.xlu0 %v3979, 127
        %v4148 = vpop.permute.xlu0 %4147
        %4149 = vrot.lane.b32.xlu0 %v3980, 127
        %v4150 = vpop.permute.xlu0 %4149
        %4151 = vrot.lane.b32.xlu0 %v3981, 127
        %v4152 = vpop.permute.xlu0 %4151
        %4153 = vrot.lane.b32.xlu0 %v3982, 127
        %v4154 = vpop.permute.xlu0 %4153
        %4155 = vrot.lane.b32.xlu0 %v3983, 127
        %v4156 = vpop.permute.xlu0 %4155
        %4157 = vrot.lane.b32.xlu0 %v3984, 127
        %v4158 = vpop.permute.xlu0 %4157
        %4159 = vrot.lane.b32.xlu0 %v3985, 127
        %v4160 = vpop.permute.xlu0 %4159
        %4161 = vrot.lane.b32.xlu0 %v3986, 127
        %v4162 = vpop.permute.xlu0 %4161
        %4163 = vrot.lane.b32.xlu0 %v3987, 127
        %v4164 = vpop.permute.xlu0 %4163
        %4165 = vrot.lane.b32.xlu0 %v3988, 127
        %v4166 = vpop.permute.xlu0 %4165
        %4167 = vrot.lane.b32.xlu0 %v3989, 127
        %v4168 = vpop.permute.xlu0 %4167
        %4169 = vrot.lane.b32.xlu0 %v3990, 127
        %v4170 = vpop.permute.xlu0 %4169
        %4171 = vrot.lane.b32.xlu0 %v3991, 127
        %v4172 = vpop.permute.xlu0 %4171
        %4173 = vrot.lane.b32.xlu0 %v3992, 127
        %v4174 = vpop.permute.xlu0 %4173
        %4175 = vrot.lane.b32.xlu0 %v3993, 127
        %v4176 = vpop.permute.xlu0 %4175
        %4177 = vrot.lane.b32.xlu0 %v3994, 127
        %v4178 = vpop.permute.xlu0 %4177
        %4179 = vrot.lane.b32.xlu0 %v3995, 127
        %v4180 = vpop.permute.xlu0 %4179
        %4181 = vrot.lane.b32.xlu0 %v3996, 127
        %v4182 = vpop.permute.xlu0 %4181
        %4183 = vrot.lane.b32.xlu0 %v3997, 127
        %v4184 = vpop.permute.xlu0 %4183
        %4185 = vrot.lane.b32.xlu0 %v3998, 127
        %v4186 = vpop.permute.xlu0 %4185
        %4187 = vrot.lane.b32.xlu0 %v3999, 127
        %v4188 = vpop.permute.xlu0 %4187
        %4189 = vrot.lane.b32.xlu0 %v4000, 127
        %v4190 = vpop.permute.xlu0 %4189
        %4191 = vrot.lane.b32.xlu0 %v4001, 127
        %v4192 = vpop.permute.xlu0 %4191
        %4193 = vrot.lane.b32.xlu0 %v4002, 127
        %v4194 = vpop.permute.xlu0 %4193
        %v4195 = vsel %vm445, %v4068, %v4070
        %v4196 = vsel %vm445, %v4070, %v4072
        %v4197 = vsel %vm445, %v4072, %v4074
        %v4198 = vsel %vm445, %v4076, %v4078
        %v4199 = vsel %vm445, %v4078, %v4080
        %v4200 = vsel %vm445, %v4080, %v4082
        %v4201 = vsel %vm445, %v4084, %v4086
        %v4202 = vsel %vm445, %v4086, %v4088
        %v4203 = vsel %vm445, %v4088, %v4090
        %v4204 = vsel %vm445, %v4092, %v4094
        %v4205 = vsel %vm445, %v4094, %v4096
        %v4206 = vsel %vm445, %v4096, %v4098
        %v4207 = vsel %vm445, %v4100, %v4102
        %v4208 = vsel %vm445, %v4102, %v4104
        %v4209 = vsel %vm445, %v4104, %v4106
        %v4210 = vsel %vm445, %v4108, %v4110
        %v4211 = vsel %vm445, %v4110, %v4112
        %v4212 = vsel %vm445, %v4112, %v4114
        %v4213 = vsel %vm445, %v4116, %v4118
        %v4214 = vsel %vm445, %v4118, %v4120
        %v4215 = vsel %vm445, %v4120, %v4122
        %v4216 = vsel %vm445, %v4124, %v4126
        %v4217 = vsel %vm445, %v4126, %v4128
        %v4218 = vsel %vm445, %v4128, %v4130
        %v4219 = vsel %vm445, %v4132, %v4134
        %v4220 = vsel %vm445, %v4134, %v4136
        %v4221 = vsel %vm445, %v4136, %v4138
        %v4222 = vsel %vm445, %v4140, %v4142
        %v4223 = vsel %vm445, %v4142, %v4144
        %v4224 = vsel %vm445, %v4144, %v4146
        %v4225 = vsel %vm445, %v4148, %v4150
        %v4226 = vsel %vm445, %v4150, %v4152
        %v4227 = vsel %vm445, %v4152, %v4154
        %v4228 = vsel %vm445, %v4156, %v4158
        %v4229 = vsel %vm445, %v4158, %v4160
        %v4230 = vsel %vm445, %v4160, %v4162
        %v4231 = vsel %vm445, %v4164, %v4166
        %v4232 = vsel %vm445, %v4166, %v4168
        %v4233 = vsel %vm445, %v4168, %v4170
        %v4234 = vsel %vm445, %v4172, %v4174
        %v4235 = vsel %vm445, %v4174, %v4176
        %v4236 = vsel %vm445, %v4176, %v4178
        %v4237 = vsel %vm445, %v4180, %v4182
        %v4238 = vsel %vm445, %v4182, %v4184
        %v4239 = vsel %vm445, %v4184, %v4186
        %v4240 = vsel %vm445, %v4188, %v4190
        %v4241 = vsel %vm445, %v4190, %v4192
        %v4242 = vsel %vm445, %v4192, %v4194
        %v4307 = vmax.bf16 %v3939, %v4195
        %v4308 = vmax.bf16 %v3940, %v4196
        %v4309 = vmax.bf16 %v3941, %v4197
        %v4310 = vmax.bf16 %v3942, %v4074
        %v4311 = vmax.bf16 %v3943, %v4198
        %v4312 = vmax.bf16 %v3944, %v4199
        %v4313 = vmax.bf16 %v3945, %v4200
        %v4314 = vmax.bf16 %v3946, %v4082
        %v4315 = vmax.bf16 %v3947, %v4201
        %v4316 = vmax.bf16 %v3948, %v4202
        %v4317 = vmax.bf16 %v3949, %v4203
        %v4318 = vmax.bf16 %v3950, %v4090
        %v4319 = vmax.bf16 %v3951, %v4204
        %v4320 = vmax.bf16 %v3952, %v4205
        %v4321 = vmax.bf16 %v3953, %v4206
        %v4322 = vmax.bf16 %v3954, %v4098
        %v4323 = vmax.bf16 %v3955, %v4207
        %v4324 = vmax.bf16 %v3956, %v4208
        %v4325 = vmax.bf16 %v3957, %v4209
        %v4326 = vmax.bf16 %v3958, %v4106
        %v4327 = vmax.bf16 %v3959, %v4210
        %v4328 = vmax.bf16 %v3960, %v4211
        %v4329 = vmax.bf16 %v3961, %v4212
        %v4330 = vmax.bf16 %v3962, %v4114
        %v4331 = vmax.bf16 %v3963, %v4213
        %v4332 = vmax.bf16 %v3964, %v4214
        %v4333 = vmax.bf16 %v3965, %v4215
        %v4334 = vmax.bf16 %v3966, %v4122
        %v4335 = vmax.bf16 %v3967, %v4216
        %v4336 = vmax.bf16 %v3968, %v4217
        %v4337 = vmax.bf16 %v3969, %v4218
        %v4338 = vmax.bf16 %v3970, %v4130
        %v4339 = vmax.bf16 %v3971, %v4219
        %v4340 = vmax.bf16 %v3972, %v4220
        %v4341 = vmax.bf16 %v3973, %v4221
        %v4342 = vmax.bf16 %v3974, %v4138
        %v4343 = vmax.bf16 %v3975, %v4222
        %v4344 = vmax.bf16 %v3976, %v4223
        %v4345 = vmax.bf16 %v3977, %v4224
        %v4346 = vmax.bf16 %v3978, %v4146
        %v4347 = vmax.bf16 %v3979, %v4225
        %v4348 = vmax.bf16 %v3980, %v4226
        %v4349 = vmax.bf16 %v3981, %v4227
        %v4350 = vmax.bf16 %v3982, %v4154
        %v4351 = vmax.bf16 %v3983, %v4228
        %v4352 = vmax.bf16 %v3984, %v4229
        %v4353 = vmax.bf16 %v3985, %v4230
        %v4354 = vmax.bf16 %v3986, %v4162
        %v4355 = vmax.bf16 %v3987, %v4231
        %v4356 = vmax.bf16 %v3988, %v4232
        %v4357 = vmax.bf16 %v3989, %v4233
        %v4358 = vmax.bf16 %v3990, %v4170
        %v4359 = vmax.bf16 %v3991, %v4234
        %v4360 = vmax.bf16 %v3992, %v4235
        %v4361 = vmax.bf16 %v3993, %v4236
        %v4362 = vmax.bf16 %v3994, %v4178
        %v4363 = vmax.bf16 %v3995, %v4237
        %v4364 = vmax.bf16 %v3996, %v4238
        %v4365 = vmax.bf16 %v3997, %v4239
        %v4366 = vmax.bf16 %v3998, %v4186
        %v4367 = vmax.bf16 %v3999, %v4240
        %v4368 = vmax.bf16 %v4000, %v4241
        %v4369 = vmax.bf16 %v4001, %v4242
        %v4370 = vmax.bf16 %v4002, %v4194
        %4435 = vrot.lane.b32.xlu0 %v4307, 127
        %v4436 = vpop.permute.xlu0 %4435
        %4437 = vrot.lane.b32.xlu0 %v4308, 127
        %v4438 = vpop.permute.xlu0 %4437
        %4439 = vrot.lane.b32.xlu0 %v4309, 127
        %v4440 = vpop.permute.xlu0 %4439
        %4441 = vrot.lane.b32.xlu0 %v4310, 127
        %v4442 = vpop.permute.xlu0 %4441
        %4443 = vrot.lane.b32.xlu0 %v4311, 127
        %v4444 = vpop.permute.xlu0 %4443
        %4445 = vrot.lane.b32.xlu0 %v4312, 127
        %v4446 = vpop.permute.xlu0 %4445
        %4447 = vrot.lane.b32.xlu0 %v4313, 127
        %v4448 = vpop.permute.xlu0 %4447
        %4449 = vrot.lane.b32.xlu0 %v4314, 127
        %v4450 = vpop.permute.xlu0 %4449
        %4451 = vrot.lane.b32.xlu0 %v4315, 127
        %v4452 = vpop.permute.xlu0 %4451
        %4453 = vrot.lane.b32.xlu0 %v4316, 127
        %v4454 = vpop.permute.xlu0 %4453
        %4455 = vrot.lane.b32.xlu0 %v4317, 127
        %v4456 = vpop.permute.xlu0 %4455
        %4457 = vrot.lane.b32.xlu0 %v4318, 127
        %v4458 = vpop.permute.xlu0 %4457
        %4459 = vrot.lane.b32.xlu0 %v4319, 127
        %v4460 = vpop.permute.xlu0 %4459
        %4461 = vrot.lane.b32.xlu0 %v4320, 127
        %v4462 = vpop.permute.xlu0 %4461
        %4463 = vrot.lane.b32.xlu0 %v4321, 127
        %v4464 = vpop.permute.xlu0 %4463
        %4465 = vrot.lane.b32.xlu0 %v4322, 127
        %v4466 = vpop.permute.xlu0 %4465
        %4467 = vrot.lane.b32.xlu0 %v4323, 127
        %v4468 = vpop.permute.xlu0 %4467
        %4469 = vrot.lane.b32.xlu0 %v4324, 127
        %v4470 = vpop.permute.xlu0 %4469
        %4471 = vrot.lane.b32.xlu0 %v4325, 127
        %v4472 = vpop.permute.xlu0 %4471
        %4473 = vrot.lane.b32.xlu0 %v4326, 127
        %v4474 = vpop.permute.xlu0 %4473
        %4475 = vrot.lane.b32.xlu0 %v4327, 127
        %v4476 = vpop.permute.xlu0 %4475
        %4477 = vrot.lane.b32.xlu0 %v4328, 127
        %v4478 = vpop.permute.xlu0 %4477
        %4479 = vrot.lane.b32.xlu0 %v4329, 127
        %v4480 = vpop.permute.xlu0 %4479
        %4481 = vrot.lane.b32.xlu0 %v4330, 127
        %v4482 = vpop.permute.xlu0 %4481
        %4483 = vrot.lane.b32.xlu0 %v4331, 127
        %v4484 = vpop.permute.xlu0 %4483
        %4485 = vrot.lane.b32.xlu0 %v4332, 127
        %v4486 = vpop.permute.xlu0 %4485
        %4487 = vrot.lane.b32.xlu0 %v4333, 127
        %v4488 = vpop.permute.xlu0 %4487
        %4489 = vrot.lane.b32.xlu0 %v4334, 127
        %v4490 = vpop.permute.xlu0 %4489
        %4491 = vrot.lane.b32.xlu0 %v4335, 127
        %v4492 = vpop.permute.xlu0 %4491
        %4493 = vrot.lane.b32.xlu0 %v4336, 127
        %v4494 = vpop.permute.xlu0 %4493
        %4495 = vrot.lane.b32.xlu0 %v4337, 127
        %v4496 = vpop.permute.xlu0 %4495
        %4497 = vrot.lane.b32.xlu0 %v4338, 127
        %v4498 = vpop.permute.xlu0 %4497
        %4499 = vrot.lane.b32.xlu0 %v4339, 127
        %v4500 = vpop.permute.xlu0 %4499
        %4501 = vrot.lane.b32.xlu0 %v4340, 127
        %v4502 = vpop.permute.xlu0 %4501
        %4503 = vrot.lane.b32.xlu0 %v4341, 127
        %v4504 = vpop.permute.xlu0 %4503
        %4505 = vrot.lane.b32.xlu0 %v4342, 127
        %v4506 = vpop.permute.xlu0 %4505
        %4507 = vrot.lane.b32.xlu0 %v4343, 127
        %v4508 = vpop.permute.xlu0 %4507
        %4509 = vrot.lane.b32.xlu0 %v4344, 127
        %v4510 = vpop.permute.xlu0 %4509
        %4511 = vrot.lane.b32.xlu0 %v4345, 127
        %v4512 = vpop.permute.xlu0 %4511
        %4513 = vrot.lane.b32.xlu0 %v4346, 127
        %v4514 = vpop.permute.xlu0 %4513
        %4515 = vrot.lane.b32.xlu0 %v4347, 127
        %v4516 = vpop.permute.xlu0 %4515
        %4517 = vrot.lane.b32.xlu0 %v4348, 127
        %v4518 = vpop.permute.xlu0 %4517
        %4519 = vrot.lane.b32.xlu0 %v4349, 127
        %v4520 = vpop.permute.xlu0 %4519
        %4521 = vrot.lane.b32.xlu0 %v4350, 127
        %v4522 = vpop.permute.xlu0 %4521
        %4523 = vrot.lane.b32.xlu0 %v4351, 127
        %v4524 = vpop.permute.xlu0 %4523
        %4525 = vrot.lane.b32.xlu0 %v4352, 127
        %v4526 = vpop.permute.xlu0 %4525
        %4527 = vrot.lane.b32.xlu0 %v4353, 127
        %v4528 = vpop.permute.xlu0 %4527
        %4529 = vrot.lane.b32.xlu0 %v4354, 127
        %v4530 = vpop.permute.xlu0 %4529
        %4531 = vrot.lane.b32.xlu0 %v4355, 127
        %v4532 = vpop.permute.xlu0 %4531
        %4533 = vrot.lane.b32.xlu0 %v4356, 127
        %v4534 = vpop.permute.xlu0 %4533
        %4535 = vrot.lane.b32.xlu0 %v4357, 127
        %v4536 = vpop.permute.xlu0 %4535
        %4537 = vrot.lane.b32.xlu0 %v4358, 127
        %v4538 = vpop.permute.xlu0 %4537
        %4539 = vrot.lane.b32.xlu0 %v4359, 127
        %v4540 = vpop.permute.xlu0 %4539
        %4541 = vrot.lane.b32.xlu0 %v4360, 127
        %v4542 = vpop.permute.xlu0 %4541
        %4543 = vrot.lane.b32.xlu0 %v4361, 127
        %v4544 = vpop.permute.xlu0 %4543
        %4545 = vrot.lane.b32.xlu0 %v4362, 127
        %v4546 = vpop.permute.xlu0 %4545
        %4547 = vrot.lane.b32.xlu0 %v4363, 127
        %v4548 = vpop.permute.xlu0 %4547
        %4549 = vrot.lane.b32.xlu0 %v4364, 127
        %v4550 = vpop.permute.xlu0 %4549
        %4551 = vrot.lane.b32.xlu0 %v4365, 127
        %v4552 = vpop.permute.xlu0 %4551
        %4553 = vrot.lane.b32.xlu0 %v4366, 127
        %v4554 = vpop.permute.xlu0 %4553
        %4555 = vrot.lane.b32.xlu0 %v4367, 127
        %v4556 = vpop.permute.xlu0 %4555
        %4557 = vrot.lane.b32.xlu0 %v4368, 127
        %v4558 = vpop.permute.xlu0 %4557
        %4559 = vrot.lane.b32.xlu0 %v4369, 127
        %v4560 = vpop.permute.xlu0 %4559
        %4561 = vrot.lane.b32.xlu0 %v4370, 127
        %v4562 = vpop.permute.xlu0 %4561
        %v4563 = vsel %vm445, %v4436, %v4438
        %v4564 = vsel %vm445, %v4438, %v4440
        %v4565 = vsel %vm445, %v4440, %v4442
        %v4566 = vsel %vm445, %v4444, %v4446
        %v4567 = vsel %vm445, %v4446, %v4448
        %v4568 = vsel %vm445, %v4448, %v4450
        %v4569 = vsel %vm445, %v4452, %v4454
        %v4570 = vsel %vm445, %v4454, %v4456
        %v4571 = vsel %vm445, %v4456, %v4458
        %v4572 = vsel %vm445, %v4460, %v4462
        %v4573 = vsel %vm445, %v4462, %v4464
        %v4574 = vsel %vm445, %v4464, %v4466
        %v4575 = vsel %vm445, %v4468, %v4470
        %v4576 = vsel %vm445, %v4470, %v4472
        %v4577 = vsel %vm445, %v4472, %v4474
        %v4578 = vsel %vm445, %v4476, %v4478
        %v4579 = vsel %vm445, %v4478, %v4480
        %v4580 = vsel %vm445, %v4480, %v4482
        %v4581 = vsel %vm445, %v4484, %v4486
        %v4582 = vsel %vm445, %v4486, %v4488
        %v4583 = vsel %vm445, %v4488, %v4490
        %v4584 = vsel %vm445, %v4492, %v4494
        %v4585 = vsel %vm445, %v4494, %v4496
        %v4586 = vsel %vm445, %v4496, %v4498
        %v4587 = vsel %vm445, %v4500, %v4502
        %v4588 = vsel %vm445, %v4502, %v4504
        %v4589 = vsel %vm445, %v4504, %v4506
        %v4590 = vsel %vm445, %v4508, %v4510
        %v4591 = vsel %vm445, %v4510, %v4512
        %v4592 = vsel %vm445, %v4512, %v4514
        %v4593 = vsel %vm445, %v4516, %v4518
        %v4594 = vsel %vm445, %v4518, %v4520
        %v4595 = vsel %vm445, %v4520, %v4522
        %v4596 = vsel %vm445, %v4524, %v4526
        %v4597 = vsel %vm445, %v4526, %v4528
        %v4598 = vsel %vm445, %v4528, %v4530
        %v4599 = vsel %vm445, %v4532, %v4534
        %v4600 = vsel %vm445, %v4534, %v4536
        %v4601 = vsel %vm445, %v4536, %v4538
        %v4602 = vsel %vm445, %v4540, %v4542
        %v4603 = vsel %vm445, %v4542, %v4544
        %v4604 = vsel %vm445, %v4544, %v4546
        %v4605 = vsel %vm445, %v4548, %v4550
        %v4606 = vsel %vm445, %v4550, %v4552
        %v4607 = vsel %vm445, %v4552, %v4554
        %v4608 = vsel %vm445, %v4556, %v4558
        %v4609 = vsel %vm445, %v4558, %v4560
        %v4610 = vsel %vm445, %v4560, %v4562
        %4675 = vrot.lane.b32.xlu0 %v4307, 126
        %v4676 = vpop.permute.xlu0 %4675
        %4677 = vrot.lane.b32.xlu0 %v4308, 126
        %v4678 = vpop.permute.xlu0 %4677
        %4679 = vrot.lane.b32.xlu0 %v4309, 126
        %v4680 = vpop.permute.xlu0 %4679
        %4681 = vrot.lane.b32.xlu0 %v4310, 126
        %v4682 = vpop.permute.xlu0 %4681
        %4683 = vrot.lane.b32.xlu0 %v4311, 126
        %v4684 = vpop.permute.xlu0 %4683
        %4685 = vrot.lane.b32.xlu0 %v4312, 126
        %v4686 = vpop.permute.xlu0 %4685
        %4687 = vrot.lane.b32.xlu0 %v4313, 126
        %v4688 = vpop.permute.xlu0 %4687
        %4689 = vrot.lane.b32.xlu0 %v4314, 126
        %v4690 = vpop.permute.xlu0 %4689
        %4691 = vrot.lane.b32.xlu0 %v4315, 126
        %v4692 = vpop.permute.xlu0 %4691
        %4693 = vrot.lane.b32.xlu0 %v4316, 126
        %v4694 = vpop.permute.xlu0 %4693
        %4695 = vrot.lane.b32.xlu0 %v4317, 126
        %v4696 = vpop.permute.xlu0 %4695
        %4697 = vrot.lane.b32.xlu0 %v4318, 126
        %v4698 = vpop.permute.xlu0 %4697
        %4699 = vrot.lane.b32.xlu0 %v4319, 126
        %v4700 = vpop.permute.xlu0 %4699
        %4701 = vrot.lane.b32.xlu0 %v4320, 126
        %v4702 = vpop.permute.xlu0 %4701
        %4703 = vrot.lane.b32.xlu0 %v4321, 126
        %v4704 = vpop.permute.xlu0 %4703
        %4705 = vrot.lane.b32.xlu0 %v4322, 126
        %v4706 = vpop.permute.xlu0 %4705
        %4707 = vrot.lane.b32.xlu0 %v4323, 126
        %v4708 = vpop.permute.xlu0 %4707
        %4709 = vrot.lane.b32.xlu0 %v4324, 126
        %v4710 = vpop.permute.xlu0 %4709
        %4711 = vrot.lane.b32.xlu0 %v4325, 126
        %v4712 = vpop.permute.xlu0 %4711
        %4713 = vrot.lane.b32.xlu0 %v4326, 126
        %v4714 = vpop.permute.xlu0 %4713
        %4715 = vrot.lane.b32.xlu0 %v4327, 126
        %v4716 = vpop.permute.xlu0 %4715
        %4717 = vrot.lane.b32.xlu0 %v4328, 126
        %v4718 = vpop.permute.xlu0 %4717
        %4719 = vrot.lane.b32.xlu0 %v4329, 126
        %v4720 = vpop.permute.xlu0 %4719
        %4721 = vrot.lane.b32.xlu0 %v4330, 126
        %v4722 = vpop.permute.xlu0 %4721
        %4723 = vrot.lane.b32.xlu0 %v4331, 126
        %v4724 = vpop.permute.xlu0 %4723
        %4725 = vrot.lane.b32.xlu0 %v4332, 126
        %v4726 = vpop.permute.xlu0 %4725
        %4727 = vrot.lane.b32.xlu0 %v4333, 126
        %v4728 = vpop.permute.xlu0 %4727
        %4729 = vrot.lane.b32.xlu0 %v4334, 126
        %v4730 = vpop.permute.xlu0 %4729
        %4731 = vrot.lane.b32.xlu0 %v4335, 126
        %v4732 = vpop.permute.xlu0 %4731
        %4733 = vrot.lane.b32.xlu0 %v4336, 126
        %v4734 = vpop.permute.xlu0 %4733
        %4735 = vrot.lane.b32.xlu0 %v4337, 126
        %v4736 = vpop.permute.xlu0 %4735
        %4737 = vrot.lane.b32.xlu0 %v4338, 126
        %v4738 = vpop.permute.xlu0 %4737
        %4739 = vrot.lane.b32.xlu0 %v4339, 126
        %v4740 = vpop.permute.xlu0 %4739
        %4741 = vrot.lane.b32.xlu0 %v4340, 126
        %v4742 = vpop.permute.xlu0 %4741
        %4743 = vrot.lane.b32.xlu0 %v4341, 126
        %v4744 = vpop.permute.xlu0 %4743
        %4745 = vrot.lane.b32.xlu0 %v4342, 126
        %v4746 = vpop.permute.xlu0 %4745
        %4747 = vrot.lane.b32.xlu0 %v4343, 126
        %v4748 = vpop.permute.xlu0 %4747
        %4749 = vrot.lane.b32.xlu0 %v4344, 126
        %v4750 = vpop.permute.xlu0 %4749
        %4751 = vrot.lane.b32.xlu0 %v4345, 126
        %v4752 = vpop.permute.xlu0 %4751
        %4753 = vrot.lane.b32.xlu0 %v4346, 126
        %v4754 = vpop.permute.xlu0 %4753
        %4755 = vrot.lane.b32.xlu0 %v4347, 126
        %v4756 = vpop.permute.xlu0 %4755
        %4757 = vrot.lane.b32.xlu0 %v4348, 126
        %v4758 = vpop.permute.xlu0 %4757
        %4759 = vrot.lane.b32.xlu0 %v4349, 126
        %v4760 = vpop.permute.xlu0 %4759
        %4761 = vrot.lane.b32.xlu0 %v4350, 126
        %v4762 = vpop.permute.xlu0 %4761
        %4763 = vrot.lane.b32.xlu0 %v4351, 126
        %v4764 = vpop.permute.xlu0 %4763
        %4765 = vrot.lane.b32.xlu0 %v4352, 126
        %v4766 = vpop.permute.xlu0 %4765
        %4767 = vrot.lane.b32.xlu0 %v4353, 126
        %v4768 = vpop.permute.xlu0 %4767
        %4769 = vrot.lane.b32.xlu0 %v4354, 126
        %v4770 = vpop.permute.xlu0 %4769
        %4771 = vrot.lane.b32.xlu0 %v4355, 126
        %v4772 = vpop.permute.xlu0 %4771
        %4773 = vrot.lane.b32.xlu0 %v4356, 126
        %v4774 = vpop.permute.xlu0 %4773
        %4775 = vrot.lane.b32.xlu0 %v4357, 126
        %v4776 = vpop.permute.xlu0 %4775
        %4777 = vrot.lane.b32.xlu0 %v4358, 126
        %v4778 = vpop.permute.xlu0 %4777
        %4779 = vrot.lane.b32.xlu0 %v4359, 126
        %v4780 = vpop.permute.xlu0 %4779
        %4781 = vrot.lane.b32.xlu0 %v4360, 126
        %v4782 = vpop.permute.xlu0 %4781
        %4783 = vrot.lane.b32.xlu0 %v4361, 126
        %v4784 = vpop.permute.xlu0 %4783
        %4785 = vrot.lane.b32.xlu0 %v4362, 126
        %v4786 = vpop.permute.xlu0 %4785
        %4787 = vrot.lane.b32.xlu0 %v4363, 126
        %v4788 = vpop.permute.xlu0 %4787
        %4789 = vrot.lane.b32.xlu0 %v4364, 126
        %v4790 = vpop.permute.xlu0 %4789
        %4791 = vrot.lane.b32.xlu0 %v4365, 126
        %v4792 = vpop.permute.xlu0 %4791
        %4793 = vrot.lane.b32.xlu0 %v4366, 126
        %v4794 = vpop.permute.xlu0 %4793
        %4795 = vrot.lane.b32.xlu0 %v4367, 126
        %v4796 = vpop.permute.xlu0 %4795
        %4797 = vrot.lane.b32.xlu0 %v4368, 126
        %v4798 = vpop.permute.xlu0 %4797
        %4799 = vrot.lane.b32.xlu0 %v4369, 126
        %v4800 = vpop.permute.xlu0 %4799
        %4801 = vrot.lane.b32.xlu0 %v4370, 126
        %v4802 = vpop.permute.xlu0 %4801
        %v4803 = vsel %vm461, %v4676, %v4678
        %v4804 = vsel %vm461, %v4678, %v4680
        %v4805 = vsel %vm461, %v4680, %v4682
        %v4806 = vsel %vm461, %v4684, %v4686
        %v4807 = vsel %vm461, %v4686, %v4688
        %v4808 = vsel %vm461, %v4688, %v4690
        %v4809 = vsel %vm461, %v4692, %v4694
        %v4810 = vsel %vm461, %v4694, %v4696
        %v4811 = vsel %vm461, %v4696, %v4698
        %v4812 = vsel %vm461, %v4700, %v4702
        %v4813 = vsel %vm461, %v4702, %v4704
        %v4814 = vsel %vm461, %v4704, %v4706
        %v4815 = vsel %vm461, %v4708, %v4710
        %v4816 = vsel %vm461, %v4710, %v4712
        %v4817 = vsel %vm461, %v4712, %v4714
        %v4818 = vsel %vm461, %v4716, %v4718
        %v4819 = vsel %vm461, %v4718, %v4720
        %v4820 = vsel %vm461, %v4720, %v4722
        %v4821 = vsel %vm461, %v4724, %v4726
        %v4822 = vsel %vm461, %v4726, %v4728
        %v4823 = vsel %vm461, %v4728, %v4730
        %v4824 = vsel %vm461, %v4732, %v4734
        %v4825 = vsel %vm461, %v4734, %v4736
        %v4826 = vsel %vm461, %v4736, %v4738
        %v4827 = vsel %vm461, %v4740, %v4742
        %v4828 = vsel %vm461, %v4742, %v4744
        %v4829 = vsel %vm461, %v4744, %v4746
        %v4830 = vsel %vm461, %v4748, %v4750
        %v4831 = vsel %vm461, %v4750, %v4752
        %v4832 = vsel %vm461, %v4752, %v4754
        %v4833 = vsel %vm461, %v4756, %v4758
        %v4834 = vsel %vm461, %v4758, %v4760
        %v4835 = vsel %vm461, %v4760, %v4762
        %v4836 = vsel %vm461, %v4764, %v4766
        %v4837 = vsel %vm461, %v4766, %v4768
        %v4838 = vsel %vm461, %v4768, %v4770
        %v4839 = vsel %vm461, %v4772, %v4774
        %v4840 = vsel %vm461, %v4774, %v4776
        %v4841 = vsel %vm461, %v4776, %v4778
        %v4842 = vsel %vm461, %v4780, %v4782
        %v4843 = vsel %vm461, %v4782, %v4784
        %v4844 = vsel %vm461, %v4784, %v4786
        %v4845 = vsel %vm461, %v4788, %v4790
        %v4846 = vsel %vm461, %v4790, %v4792
        %v4847 = vsel %vm461, %v4792, %v4794
        %v4848 = vsel %vm461, %v4796, %v4798
        %v4849 = vsel %vm461, %v4798, %v4800
        %v4850 = vsel %vm461, %v4800, %v4802
        %v4915 = vld [vmem:[%s7] sm:$0xff]
        %v4916 = vld [vmem:[%s7 + $0x8] sm:$0xff]
        %v4917 = vld [vmem:[%s7 + $0x10] sm:$0xff]
        %v4918 = vld [vmem:[%s7 + $0x18] sm:$0xff]
        %v4919 = vld [vmem:[%s7 + $0x20] sm:$0xff]
        %v4920 = vld [vmem:[%s7 + $0x28] sm:$0xff]
        %v4921 = vld [vmem:[%s7 + $0x30] sm:$0xff]
        %v4922 = vld [vmem:[%s7 + $0x38] sm:$0xff]
        %v4923 = vld [vmem:[%s7 + $0x40] sm:$0xff]
        %v4924 = vld [vmem:[%s7 + $0x48] sm:$0xff]
        %v4925 = vld [vmem:[%s7 + $0x50] sm:$0xff]
        %v4926 = vld [vmem:[%s7 + $0x58] sm:$0xff]
        %v4927 = vld [vmem:[%s7 + $0x60] sm:$0xff]
        %v4928 = vld [vmem:[%s7 + $0x68] sm:$0xff]
        %v4929 = vld [vmem:[%s7 + $0x70] sm:$0xff]
        %v4930 = vld [vmem:[%s7 + $0x78] sm:$0xff]
        %v4931 = vld [vmem:[%s7 + $0x80] sm:$0xff]
        %v4932 = vld [vmem:[%s7 + $0x88] sm:$0xff]
        %v4933 = vld [vmem:[%s7 + $0x90] sm:$0xff]
        %v4934 = vld [vmem:[%s7 + $0x98] sm:$0xff]
        %v4935 = vld [vmem:[%s7 + $0xa0] sm:$0xff]
        %v4936 = vld [vmem:[%s7 + $0xa8] sm:$0xff]
        %v4937 = vld [vmem:[%s7 + $0xb0] sm:$0xff]
        %v4938 = vld [vmem:[%s7 + $0xb8] sm:$0xff]
        %v4939 = vld [vmem:[%s7 + $0xc0] sm:$0xff]
        %v4940 = vld [vmem:[%s7 + $0xc8] sm:$0xff]
        %v4941 = vld [vmem:[%s7 + $0xd0] sm:$0xff]
        %v4942 = vld [vmem:[%s7 + $0xd8] sm:$0xff]
        %v4943 = vld [vmem:[%s7 + $0xe0] sm:$0xff]
        %v4944 = vld [vmem:[%s7 + $0xe8] sm:$0xff]
        %v4945 = vld [vmem:[%s7 + $0xf0] sm:$0xff]
        %v4946 = vld [vmem:[%s7 + $0xf8] sm:$0xff]
        %v4947 = vld [vmem:[%s7 + $0x100] sm:$0xff]
        %v4948 = vld [vmem:[%s7 + $0x108] sm:$0xff]
        %v4949 = vld [vmem:[%s7 + $0x110] sm:$0xff]
        %v4950 = vld [vmem:[%s7 + $0x118] sm:$0xff]
        %v4951 = vld [vmem:[%s7 + $0x120] sm:$0xff]
        %v4952 = vld [vmem:[%s7 + $0x128] sm:$0xff]
        %v4953 = vld [vmem:[%s7 + $0x130] sm:$0xff]
        %v4954 = vld [vmem:[%s7 + $0x138] sm:$0xff]
        %v4955 = vld [vmem:[%s7 + $0x140] sm:$0xff]
        %v4956 = vld [vmem:[%s7 + $0x148] sm:$0xff]
        %v4957 = vld [vmem:[%s7 + $0x150] sm:$0xff]
        %v4958 = vld [vmem:[%s7 + $0x158] sm:$0xff]
        %v4959 = vld [vmem:[%s7 + $0x160] sm:$0xff]
        %v4960 = vld [vmem:[%s7 + $0x168] sm:$0xff]
        %v4961 = vld [vmem:[%s7 + $0x170] sm:$0xff]
        %v4962 = vld [vmem:[%s7 + $0x178] sm:$0xff]
        %v5011 = vunpack.c.l.b16 %v4915
        %v5012 = vunpack.c.h.b16 %v4915
        %v5013 = vunpack.c.l.b16 %v4916
        %v5014 = vunpack.c.h.b16 %v4916
        %v5015 = vunpack.c.l.b16 %v4917
        %v5016 = vunpack.c.h.b16 %v4917
        %v5017 = vunpack.c.l.b16 %v4918
        %v5018 = vunpack.c.h.b16 %v4918
        %v5019 = vunpack.c.l.b16 %v4919
        %v5020 = vunpack.c.h.b16 %v4919
        %v5021 = vunpack.c.l.b16 %v4920
        %v5022 = vunpack.c.h.b16 %v4920
        %v5023 = vunpack.c.l.b16 %v4921
        %v5024 = vunpack.c.h.b16 %v4921
        %v5025 = vunpack.c.l.b16 %v4922
        %v5026 = vunpack.c.h.b16 %v4922
        %v5027 = vunpack.c.l.b16 %v4923
        %v5028 = vunpack.c.h.b16 %v4923
        %v5029 = vunpack.c.l.b16 %v4924
        %v5030 = vunpack.c.h.b16 %v4924
        %v5031 = vunpack.c.l.b16 %v4925
        %v5032 = vunpack.c.h.b16 %v4925
        %v5033 = vunpack.c.l.b16 %v4926
        %v5034 = vunpack.c.h.b16 %v4926
        %v5035 = vunpack.c.l.b16 %v4927
        %v5036 = vunpack.c.h.b16 %v4927
        %v5037 = vunpack.c.l.b16 %v4928
        %v5038 = vunpack.c.h.b16 %v4928
        %v5039 = vunpack.c.l.b16 %v4929
        %v5040 = vunpack.c.h.b16 %v4929
        %v5041 = vunpack.c.l.b16 %v4930
        %v5042 = vunpack.c.h.b16 %v4930
        %v5043 = vunpack.c.l.b16 %v4931
        %v5044 = vunpack.c.h.b16 %v4931
        %v5045 = vunpack.c.l.b16 %v4932
        %v5046 = vunpack.c.h.b16 %v4932
        %v5047 = vunpack.c.l.b16 %v4933
        %v5048 = vunpack.c.h.b16 %v4933
        %v5049 = vunpack.c.l.b16 %v4934
        %v5050 = vunpack.c.h.b16 %v4934
        %v5051 = vunpack.c.l.b16 %v4935
        %v5052 = vunpack.c.h.b16 %v4935
        %v5053 = vunpack.c.l.b16 %v4936
        %v5054 = vunpack.c.h.b16 %v4936
        %v5055 = vunpack.c.l.b16 %v4937
        %v5056 = vunpack.c.h.b16 %v4937
        %v5057 = vunpack.c.l.b16 %v4938
        %v5058 = vunpack.c.h.b16 %v4938
        %v5059 = vunpack.c.l.b16 %v4939
        %v5060 = vunpack.c.h.b16 %v4939
        %v5061 = vunpack.c.l.b16 %v4940
        %v5062 = vunpack.c.h.b16 %v4940
        %v5063 = vunpack.c.l.b16 %v4941
        %v5064 = vunpack.c.h.b16 %v4941
        %v5065 = vunpack.c.l.b16 %v4942
        %v5066 = vunpack.c.h.b16 %v4942
        %v5067 = vunpack.c.l.b16 %v4943
        %v5068 = vunpack.c.h.b16 %v4943
        %v5069 = vunpack.c.l.b16 %v4944
        %v5070 = vunpack.c.h.b16 %v4944
        %v5071 = vunpack.c.l.b16 %v4945
        %v5072 = vunpack.c.h.b16 %v4945
        %v5073 = vunpack.c.l.b16 %v4946
        %v5074 = vunpack.c.h.b16 %v4946
        %v5075 = vunpack.c.l.b16 %v4947
        %v5076 = vunpack.c.h.b16 %v4947
        %v5077 = vunpack.c.l.b16 %v4948
        %v5078 = vunpack.c.h.b16 %v4948
        %v5079 = vunpack.c.l.b16 %v4949
        %v5080 = vunpack.c.h.b16 %v4949
        %v5081 = vunpack.c.l.b16 %v4950
        %v5082 = vunpack.c.h.b16 %v4950
        %v5083 = vunpack.c.l.b16 %v4951
        %v5084 = vunpack.c.h.b16 %v4951
        %v5085 = vunpack.c.l.b16 %v4952
        %v5086 = vunpack.c.h.b16 %v4952
        %v5087 = vunpack.c.l.b16 %v4953
        %v5088 = vunpack.c.h.b16 %v4953
        %v5089 = vunpack.c.l.b16 %v4954
        %v5090 = vunpack.c.h.b16 %v4954
        %v5091 = vunpack.c.l.b16 %v4955
        %v5092 = vunpack.c.h.b16 %v4955
        %v5093 = vunpack.c.l.b16 %v4956
        %v5094 = vunpack.c.h.b16 %v4956
        %v5095 = vunpack.c.l.b16 %v4957
        %v5096 = vunpack.c.h.b16 %v4957
        %v5097 = vunpack.c.l.b16 %v4958
        %v5098 = vunpack.c.h.b16 %v4958
        %v5099 = vunpack.c.l.b16 %v4959
        %v5100 = vunpack.c.h.b16 %v4959
        %v5101 = vunpack.c.l.b16 %v4960
        %v5102 = vunpack.c.h.b16 %v4960
        %v5103 = vunpack.c.l.b16 %v4961
        %v5104 = vunpack.c.h.b16 %v4961
        %v5105 = vunpack.c.l.b16 %v4962
        %v5106 = vunpack.c.h.b16 %v4962
        %v5107 = vpack.c.b16 %v5017, %v5011
        %v5108 = vpack.c.b16 %v5018, %v5012
        %v5109 = vpack.c.b16 %v5019, %v5013
        %v5110 = vpack.c.b16 %v5020, %v5014
        %v5111 = vpack.c.b16 %v5021, %v5015
        %v5112 = vpack.c.b16 %v5022, %v5016
        %v5113 = vpack.c.b16 %v5029, %v5023
        %v5114 = vpack.c.b16 %v5030, %v5024
        %v5115 = vpack.c.b16 %v5031, %v5025
        %v5116 = vpack.c.b16 %v5032, %v5026
        %v5117 = vpack.c.b16 %v5033, %v5027
        %v5118 = vpack.c.b16 %v5034, %v5028
        %v5119 = vpack.c.b16 %v5041, %v5035
        %v5120 = vpack.c.b16 %v5042, %v5036
        %v5121 = vpack.c.b16 %v5043, %v5037
        %v5122 = vpack.c.b16 %v5044, %v5038
        %v5123 = vpack.c.b16 %v5045, %v5039
        %v5124 = vpack.c.b16 %v5046, %v5040
        %v5125 = vpack.c.b16 %v5053, %v5047
        %v5126 = vpack.c.b16 %v5054, %v5048
        %v5127 = vpack.c.b16 %v5055, %v5049
        %v5128 = vpack.c.b16 %v5056, %v5050
        %v5129 = vpack.c.b16 %v5057, %v5051
        %v5130 = vpack.c.b16 %v5058, %v5052
        %v5131 = vpack.c.b16 %v5065, %v5059
        %v5132 = vpack.c.b16 %v5066, %v5060
        %v5133 = vpack.c.b16 %v5067, %v5061
        %v5134 = vpack.c.b16 %v5068, %v5062
        %v5135 = vpack.c.b16 %v5069, %v5063
        %v5136 = vpack.c.b16 %v5070, %v5064
        %v5137 = vpack.c.b16 %v5077, %v5071
        %v5138 = vpack.c.b16 %v5078, %v5072
        %v5139 = vpack.c.b16 %v5079, %v5073
        %v5140 = vpack.c.b16 %v5080, %v5074
        %v5141 = vpack.c.b16 %v5081, %v5075
        %v5142 = vpack.c.b16 %v5082, %v5076
        %v5143 = vpack.c.b16 %v5089, %v5083
        %v5144 = vpack.c.b16 %v5090, %v5084
        %v5145 = vpack.c.b16 %v5091, %v5085
        %v5146 = vpack.c.b16 %v5092, %v5086
        %v5147 = vpack.c.b16 %v5093, %v5087
        %v5148 = vpack.c.b16 %v5094, %v5088
        %v5149 = vpack.c.b16 %v5101, %v5095
        %v5150 = vpack.c.b16 %v5102, %v5096
        %v5151 = vpack.c.b16 %v5103, %v5097
        %v5152 = vpack.c.b16 %v5104, %v5098
        %v5153 = vpack.c.b16 %v5105, %v5099
        %v5154 = vpack.c.b16 %v5106, %v5100
        %5203 = vmatprep.subr.bf16.mxu0 %v4308
        %5204 = vmatpush1.bf16.msra.mxu0 %v4307
        %5205 = vmatprep.subr.bf16.mxu0 %v4312
        %5206 = vmatpush1.bf16.msra.mxu0 %v4311
        %5207 = vmatprep.subr.bf16.mxu0 %v4316
        %5208 = vmatpush1.bf16.msra.mxu0 %v4315
        %5209 = vmatprep.subr.bf16.mxu0 %v4320
        %5210 = vmatpush1.bf16.msra.mxu0 %v4319
        %5211 = vmatprep.subr.bf16.mxu0 %v4324
        %5212 = vmatpush1.bf16.msra.mxu0 %v4323
        %5213 = vmatprep.subr.bf16.mxu0 %v4328
        %5214 = vmatpush1.bf16.msra.mxu0 %v4327
        %5215 = vmatprep.subr.bf16.mxu0 %v4332
        %5216 = vmatpush1.bf16.msra.mxu0 %v4331
        %5217 = vmatprep.subr.bf16.mxu0 %v4336
        %5218 = vmatpush1.bf16.msra.mxu0 %v4335
        %5219 = vmatprep.subr.bf16.mxu0 %v4340
        %5220 = vmatpush1.bf16.msra.mxu0 %v4339
        %5221 = vmatprep.subr.bf16.mxu0 %v4344
        %5222 = vmatpush1.bf16.msra.mxu0 %v4343
        %5223 = vmatprep.subr.bf16.mxu0 %v4348
        %5224 = vmatpush1.bf16.msra.mxu0 %v4347
        %5225 = vmatprep.subr.bf16.mxu0 %v4352
        %5226 = vmatpush1.bf16.msra.mxu0 %v4351
        %5227 = vmatprep.subr.bf16.mxu0 %v4356
        %5228 = vmatpush1.bf16.msra.mxu0 %v4355
        %5229 = vmatprep.subr.bf16.mxu0 %v4360
        %5230 = vmatpush1.bf16.msra.mxu0 %v4359
        %5231 = vmatprep.subr.bf16.mxu0 %v4364
        %5232 = vmatpush1.bf16.msra.mxu0 %v4363
        %5233 = vmatprep.subr.bf16.mxu0 %v4368
        %5234 = vmatpush1.bf16.msra.mxu0 %v4367
        %5235 = vmatprep.mubr.bf16.mxu0 %v5108
        %5236 = vmatmul.mubr.bf16.gmra.mrb[0].mxu0 %v5107
        %v5237 = vpop.f32.mrb[0].mxu0
        %v5238 = vadd.f32 0.0, %v5237
        %v5239 = vpop.f32.mrb[0].mxu0
        %v5240 = vadd.f32 0.0, %v5239
        %v5241 = vpop.f32.mrb[0].mxu0
        %v5242 = vadd.f32 0.0, %v5241
        %v5243 = vpop.f32.mrb[0].mxu0
        %v5244 = vadd.f32 0.0, %v5243
        %5245 = vmatprep.mubr.bf16.mxu0 %v5114
        %5246 = vmatmul.mubr.bf16.gmra.mrb[0].mxu0 %v5113
        %v5247 = vpop.f32.mrb[0].mxu0
        %v5248 = vadd.f32 0.0, %v5247
        %v5249 = vpop.f32.mrb[0].mxu0
        %v5250 = vadd.f32 0.0, %v5249
        %v5251 = vpop.f32.mrb[0].mxu0
        %v5252 = vadd.f32 0.0, %v5251
        %v5253 = vpop.f32.mrb[0].mxu0
        %v5254 = vadd.f32 0.0, %v5253
        %5255 = vmatprep.mubr.bf16.mxu0 %v5120
        %5256 = vmatmul.mubr.bf16.gmra.mrb[0].mxu0 %v5119
        %v5257 = vpop.f32.mrb[0].mxu0
        %v5258 = vadd.f32 0.0, %v5257
        %v5259 = vpop.f32.mrb[0].mxu0
        %v5260 = vadd.f32 0.0, %v5259
        %v5261 = vpop.f32.mrb[0].mxu0
        %v5262 = vadd.f32 0.0, %v5261
        %v5263 = vpop.f32.mrb[0].mxu0
        %v5264 = vadd.f32 0.0, %v5263
        %5265 = vmatprep.mubr.bf16.mxu0 %v5126
        %5266 = vmatmul.mubr.bf16.gmra.mrb[0].mxu0 %v5125
        %v5267 = vpop.f32.mrb[0].mxu0
        %v5268 = vadd.f32 0.0, %v5267
        %v5269 = vpop.f32.mrb[0].mxu0
        %v5270 = vadd.f32 0.0, %v5269
        %v5271 = vpop.f32.mrb[0].mxu0
        %v5272 = vadd.f32 0.0, %v5271
        %v5273 = vpop.f32.mrb[0].mxu0
        %v5274 = vadd.f32 0.0, %v5273
        %5275 = vmatprep.mubr.bf16.mxu0 %v5132
        %5276 = vmatmul.mubr.bf16.gmra.mrb[0].mxu0 %v5131
        %v5277 = vpop.f32.mrb[0].mxu0
        %v5278 = vadd.f32 0.0, %v5277
        %v5279 = vpop.f32.mrb[0].mxu0
        %v5280 = vadd.f32 0.0, %v5279
        %v5281 = vpop.f32.mrb[0].mxu0
        %v5282 = vadd.f32 0.0, %v5281
        %v5283 = vpop.f32.mrb[0].mxu0
        %v5284 = vadd.f32 0.0, %v5283
        %5285 = vmatprep.mubr.bf16.mxu0 %v5138
        %5286 = vmatmul.mubr.bf16.gmra.mrb[0].mxu0 %v5137
        %v5287 = vpop.f32.mrb[0].mxu0
        %v5288 = vadd.f32 0.0, %v5287
        %v5289 = vpop.f32.mrb[0].mxu0
        %v5290 = vadd.f32 0.0, %v5289
        %v5291 = vpop.f32.mrb[0].mxu0
        %v5292 = vadd.f32 0.0, %v5291
        %v5293 = vpop.f32.mrb[0].mxu0
        %v5294 = vadd.f32 0.0, %v5293
        %5295 = vmatprep.mubr.bf16.mxu0 %v5144
        %5296 = vmatmul.mubr.bf16.gmra.mrb[0].mxu0 %v5143
        %v5297 = vpop.f32.mrb[0].mxu0
        %v5298 = vadd.f32 0.0, %v5297
        %v5299 = vpop.f32.mrb[0].mxu0
        %v5300 = vadd.f32 0.0, %v5299
        %v5301 = vpop.f32.mrb[0].mxu0
        %v5302 = vadd.f32 0.0, %v5301
        %v5303 = vpop.f32.mrb[0].mxu0
        %v5304 = vadd.f32 0.0, %v5303
        %5305 = vmatprep.mubr.bf16.mxu0 %v5150
        %5306 = vmatmul.mubr.bf16.gmra.mrb[0].mxu0 %v5149
        %v5307 = vpop.f32.mrb[0].mxu0
        %v5308 = vadd.f32 0.0, %v5307
        %v5309 = vpop.f32.mrb[0].mxu0
        %v5310 = vadd.f32 0.0, %v5309
        %v5311 = vpop.f32.mrb[0].mxu0
        %v5312 = vadd.f32 0.0, %v5311
        %v5313 = vpop.f32.mrb[0].mxu0
        %v5314 = vadd.f32 0.0, %v5313
        %5315 = vdwg.mxu0
        %5316 = vmatprep.subr.bf16.mxu0 %v4564
        %5317 = vmatpush1.bf16.msra.mxu0 %v4563
        %5318 = vmatprep.subr.bf16.mxu0 %v4567
        %5319 = vmatpush1.bf16.msra.mxu0 %v4566
        %5320 = vmatprep.subr.bf16.mxu0 %v4570
        %5321 = vmatpush1.bf16.msra.mxu0 %v4569
        %5322 = vmatprep.subr.bf16.mxu0 %v4573
        %5323 = vmatpush1.bf16.msra.mxu0 %v4572
        %5324 = vmatprep.subr.bf16.mxu0 %v4576
        %5325 = vmatpush1.bf16.msra.mxu0 %v4575
        %5326 = vmatprep.subr.bf16.mxu0 %v4579
        %5327 = vmatpush1.bf16.msra.mxu0 %v4578
        %5328 = vmatprep.subr.bf16.mxu0 %v4582
        %5329 = vmatpush1.bf16.msra.mxu0 %v4581
        %5330 = vmatprep.subr.bf16.mxu0 %v4585
        %5331 = vmatpush1.bf16.msra.mxu0 %v4584
        %5332 = vmatprep.subr.bf16.mxu0 %v4588
        %5333 = vmatpush1.bf16.msra.mxu0 %v4587
        %5334 = vmatprep.subr.bf16.mxu0 %v4591
        %5335 = vmatpush1.bf16.msra.mxu0 %v4590
        %5336 = vmatprep.subr.bf16.mxu0 %v4594
        %5337 = vmatpush1.bf16.msra.mxu0 %v4593
        %5338 = vmatprep.subr.bf16.mxu0 %v4597
        %5339 = vmatpush1.bf16.msra.mxu0 %v4596
        %5340 = vmatprep.subr.bf16.mxu0 %v4600
        %5341 = vmatpush1.bf16.msra.mxu0 %v4599
        %5342 = vmatprep.subr.bf16.mxu0 %v4603
        %5343 = vmatpush1.bf16.msra.mxu0 %v4602
        %5344 = vmatprep.subr.bf16.mxu0 %v4606
        %5345 = vmatpush1.bf16.msra.mxu0 %v4605
        %5346 = vmatprep.subr.bf16.mxu0 %v4609
        %5347 = vmatpush1.bf16.msra.mxu0 %v4608
        %5348 = vmatprep.mubr.bf16.mxu0 %v5110
        %5349 = vmatmul.mubr.bf16.gmra.mrb[0].mxu0 %v5109
        %v5350 = vpop.f32.mrb[0].mxu0
        %v5351 = vadd.f32 %v5238, %v5350
        %v5352 = vpop.f32.mrb[0].mxu0
        %v5353 = vadd.f32 %v5240, %v5352
        %v5354 = vpop.f32.mrb[0].mxu0
        %v5355 = vadd.f32 %v5242, %v5354
        %v5356 = vpop.f32.mrb[0].mxu0
        %v5357 = vadd.f32 %v5244, %v5356
        %5358 = vmatprep.mubr.bf16.mxu0 %v5116
        %5359 = vmatmul.mubr.bf16.gmra.mrb[0].mxu0 %v5115
        %v5360 = vpop.f32.mrb[0].mxu0
        %v5361 = vadd.f32 %v5248, %v5360
        %v5362 = vpop.f32.mrb[0].mxu0
        %v5363 = vadd.f32 %v5250, %v5362
        %v5364 = vpop.f32.mrb[0].mxu0
        %v5365 = vadd.f32 %v5252, %v5364
        %v5366 = vpop.f32.mrb[0].mxu0
        %v5367 = vadd.f32 %v5254, %v5366
        %5368 = vmatprep.mubr.bf16.mxu0 %v5122
        %5369 = vmatmul.mubr.bf16.gmra.mrb[0].mxu0 %v5121
        %v5370 = vpop.f32.mrb[0].mxu0
        %v5371 = vadd.f32 %v5258, %v5370
        %v5372 = vpop.f32.mrb[0].mxu0
        %v5373 = vadd.f32 %v5260, %v5372
        %v5374 = vpop.f32.mrb[0].mxu0
        %v5375 = vadd.f32 %v5262, %v5374
        %v5376 = vpop.f32.mrb[0].mxu0
        %v5377 = vadd.f32 %v5264, %v5376
        %5378 = vmatprep.mubr.bf16.mxu0 %v5128
        %5379 = vmatmul.mubr.bf16.gmra.mrb[0].mxu0 %v5127
        %v5380 = vpop.f32.mrb[0].mxu0
        %v5381 = vadd.f32 %v5268, %v5380
        %v5382 = vpop.f32.mrb[0].mxu0
        %v5383 = vadd.f32 %v5270, %v5382
        %v5384 = vpop.f32.mrb[0].mxu0
        %v5385 = vadd.f32 %v5272, %v5384
        %v5386 = vpop.f32.mrb[0].mxu0
        %v5387 = vadd.f32 %v5274, %v5386
        %5388 = vmatprep.mubr.bf16.mxu0 %v5134
        %5389 = vmatmul.mubr.bf16.gmra.mrb[0].mxu0 %v5133
        %v5390 = vpop.f32.mrb[0].mxu0
        %v5391 = vadd.f32 %v5278, %v5390
        %v5392 = vpop.f32.mrb[0].mxu0
        %v5393 = vadd.f32 %v5280, %v5392
        %v5394 = vpop.f32.mrb[0].mxu0
        %v5395 = vadd.f32 %v5282, %v5394
        %v5396 = vpop.f32.mrb[0].mxu0
        %v5397 = vadd.f32 %v5284, %v5396
        %5398 = vmatprep.mubr.bf16.mxu0 %v5140
        %5399 = vmatmul.mubr.bf16.gmra.mrb[0].mxu0 %v5139
        %v5400 = vpop.f32.mrb[0].mxu0
        %v5401 = vadd.f32 %v5288, %v5400
        %v5402 = vpop.f32.mrb[0].mxu0
        %v5403 = vadd.f32 %v5290, %v5402
        %v5404 = vpop.f32.mrb[0].mxu0
        %v5405 = vadd.f32 %v5292, %v5404
        %v5406 = vpop.f32.mrb[0].mxu0
        %v5407 = vadd.f32 %v5294, %v5406
        %5408 = vmatprep.mubr.bf16.mxu0 %v5146
        %5409 = vmatmul.mubr.bf16.gmra.mrb[0].mxu0 %v5145
        %v5410 = vpop.f32.mrb[0].mxu0
        %v5411 = vadd.f32 %v5298, %v5410
        %v5412 = vpop.f32.mrb[0].mxu0
        %v5413 = vadd.f32 %v5300, %v5412
        %v5414 = vpop.f32.mrb[0].mxu0
        %v5415 = vadd.f32 %v5302, %v5414
        %v5416 = vpop.f32.mrb[0].mxu0
        %v5417 = vadd.f32 %v5304, %v5416
        %5418 = vmatprep.mubr.bf16.mxu0 %v5152
        %5419 = vmatmul.mubr.bf16.gmra.mrb[0].mxu0 %v5151
        %v5420 = vpop.f32.mrb[0].mxu0
        %v5421 = vadd.f32 %v5308, %v5420
        %v5422 = vpop.f32.mrb[0].mxu0
        %v5423 = vadd.f32 %v5310, %v5422
        %v5424 = vpop.f32.mrb[0].mxu0
        %v5425 = vadd.f32 %v5312, %v5424
        %v5426 = vpop.f32.mrb[0].mxu0
        %v5427 = vadd.f32 %v5314, %v5426
        %5428 = vdwg.mxu0
        %5429 = vmatprep.subr.bf16.mxu0 %v4804
        %5430 = vmatpush1.bf16.msra.mxu0 %v4803
        %5431 = vmatprep.subr.bf16.mxu0 %v4807
        %5432 = vmatpush1.bf16.msra.mxu0 %v4806
        %5433 = vmatprep.subr.bf16.mxu0 %v4810
        %5434 = vmatpush1.bf16.msra.mxu0 %v4809
        %5435 = vmatprep.subr.bf16.mxu0 %v4813
        %5436 = vmatpush1.bf16.msra.mxu0 %v4812
        %5437 = vmatprep.subr.bf16.mxu0 %v4816
        %5438 = vmatpush1.bf16.msra.mxu0 %v4815
        %5439 = vmatprep.subr.bf16.mxu0 %v4819
        %5440 = vmatpush1.bf16.msra.mxu0 %v4818
        %5441 = vmatprep.subr.bf16.mxu0 %v4822
        %5442 = vmatpush1.bf16.msra.mxu0 %v4821
        %5443 = vmatprep.subr.bf16.mxu0 %v4825
        %5444 = vmatpush1.bf16.msra.mxu0 %v4824
        %5445 = vmatprep.subr.bf16.mxu0 %v4828
        %5446 = vmatpush1.bf16.msra.mxu0 %v4827
        %5447 = vmatprep.subr.bf16.mxu0 %v4831
        %5448 = vmatpush1.bf16.msra.mxu0 %v4830
        %5449 = vmatprep.subr.bf16.mxu0 %v4834
        %5450 = vmatpush1.bf16.msra.mxu0 %v4833
        %5451 = vmatprep.subr.bf16.mxu0 %v4837
        %5452 = vmatpush1.bf16.msra.mxu0 %v4836
        %5453 = vmatprep.subr.bf16.mxu0 %v4840
        %5454 = vmatpush1.bf16.msra.mxu0 %v4839
        %5455 = vmatprep.subr.bf16.mxu0 %v4843
        %5456 = vmatpush1.bf16.msra.mxu0 %v4842
        %5457 = vmatprep.subr.bf16.mxu0 %v4846
        %5458 = vmatpush1.bf16.msra.mxu0 %v4845
        %5459 = vmatprep.subr.bf16.mxu0 %v4849
        %5460 = vmatpush1.bf16.msra.mxu0 %v4848
        %5461 = vmatprep.mubr.bf16.mxu0 %v5112
        %5462 = vmatmul.mubr.bf16.gmra.mrb[0].mxu0 %v5111
        %v5463 = vpop.f32.mrb[0].mxu0
        %v5464 = vadd.f32 %v5351, %v5463
        %v5465 = vpop.f32.mrb[0].mxu0
        %v5466 = vadd.f32 %v5353, %v5465
        %v5467 = vpop.f32.mrb[0].mxu0
        %v5468 = vadd.f32 %v5355, %v5467
        %v5469 = vpop.f32.mrb[0].mxu0
        %v5470 = vadd.f32 %v5357, %v5469
        %5471 = vmatprep.mubr.bf16.mxu0 %v5118
        %5472 = vmatmul.mubr.bf16.gmra.mrb[0].mxu0 %v5117
        %v5473 = vpop.f32.mrb[0].mxu0
        %v5474 = vadd.f32 %v5361, %v5473
        %v5475 = vpop.f32.mrb[0].mxu0
        %v5476 = vadd.f32 %v5363, %v5475
        %v5477 = vpop.f32.mrb[0].mxu0
        %v5478 = vadd.f32 %v5365, %v5477
        %v5479 = vpop.f32.mrb[0].mxu0
        %v5480 = vadd.f32 %v5367, %v5479
        %5481 = vmatprep.mubr.bf16.mxu0 %v5124
        %5482 = vmatmul.mubr.bf16.gmra.mrb[0].mxu0 %v5123
        %v5483 = vpop.f32.mrb[0].mxu0
        %v5484 = vadd.f32 %v5371, %v5483
        %v5485 = vpop.f32.mrb[0].mxu0
        %v5486 = vadd.f32 %v5373, %v5485
        %v5487 = vpop.f32.mrb[0].mxu0
        %v5488 = vadd.f32 %v5375, %v5487
        %v5489 = vpop.f32.mrb[0].mxu0
        %v5490 = vadd.f32 %v5377, %v5489
        %5491 = vmatprep.mubr.bf16.mxu0 %v5130
        %5492 = vmatmul.mubr.bf16.gmra.mrb[0].mxu0 %v5129
        %v5493 = vpop.f32.mrb[0].mxu0
        %v5494 = vadd.f32 %v5381, %v5493
        %v5495 = vpop.f32.mrb[0].mxu0
        %v5496 = vadd.f32 %v5383, %v5495
        %v5497 = vpop.f32.mrb[0].mxu0
        %v5498 = vadd.f32 %v5385, %v5497
        %v5499 = vpop.f32.mrb[0].mxu0
        %v5500 = vadd.f32 %v5387, %v5499
        %5501 = vmatprep.mubr.bf16.mxu0 %v5136
        %5502 = vmatmul.mubr.bf16.gmra.mrb[0].mxu0 %v5135
        %v5503 = vpop.f32.mrb[0].mxu0
        %v5504 = vadd.f32 %v5391, %v5503
        %v5505 = vpop.f32.mrb[0].mxu0
        %v5506 = vadd.f32 %v5393, %v5505
        %v5507 = vpop.f32.mrb[0].mxu0
        %v5508 = vadd.f32 %v5395, %v5507
        %v5509 = vpop.f32.mrb[0].mxu0
        %v5510 = vadd.f32 %v5397, %v5509
        %5511 = vmatprep.mubr.bf16.mxu0 %v5142
        %5512 = vmatmul.mubr.bf16.gmra.mrb[0].mxu0 %v5141
        %v5513 = vpop.f32.mrb[0].mxu0
        %v5514 = vadd.f32 %v5401, %v5513
        %v5515 = vpop.f32.mrb[0].mxu0
        %v5516 = vadd.f32 %v5403, %v5515
        %v5517 = vpop.f32.mrb[0].mxu0
        %v5518 = vadd.f32 %v5405, %v5517
        %v5519 = vpop.f32.mrb[0].mxu0
        %v5520 = vadd.f32 %v5407, %v5519
        %5521 = vmatprep.mubr.bf16.mxu0 %v5148
        %5522 = vmatmul.mubr.bf16.gmra.mrb[0].mxu0 %v5147
        %v5523 = vpop.f32.mrb[0].mxu0
        %v5524 = vadd.f32 %v5411, %v5523
        %v5525 = vpop.f32.mrb[0].mxu0
        %v5526 = vadd.f32 %v5413, %v5525
        %v5527 = vpop.f32.mrb[0].mxu0
        %v5528 = vadd.f32 %v5415, %v5527
        %v5529 = vpop.f32.mrb[0].mxu0
        %v5530 = vadd.f32 %v5417, %v5529
        %5531 = vmatprep.mubr.bf16.mxu0 %v5154
        %5532 = vmatmul.mubr.bf16.gmra.mrb[0].mxu0 %v5153
        %v5533 = vpop.f32.mrb[0].mxu0
        %v5534 = vadd.f32 %v5421, %v5533
        %v5535 = vpop.f32.mrb[0].mxu0
        %v5536 = vadd.f32 %v5423, %v5535
        %v5537 = vpop.f32.mrb[0].mxu0
        %v5538 = vadd.f32 %v5425, %v5537
        %v5539 = vpop.f32.mrb[0].mxu0
        %v5540 = vadd.f32 %v5427, %v5539
        %5541 = vdwg.mxu0
        %5542 = vmatprep.subr.bf16.mxu0 %v4310
        %5543 = vmatpush1.bf16.msra.mxu0 %v4309
        %5544 = vmatprep.subr.bf16.mxu0 %v4314
        %5545 = vmatpush1.bf16.msra.mxu0 %v4313
        %5546 = vmatprep.subr.bf16.mxu0 %v4318
        %5547 = vmatpush1.bf16.msra.mxu0 %v4317
        %5548 = vmatprep.subr.bf16.mxu0 %v4322
        %5549 = vmatpush1.bf16.msra.mxu0 %v4321
        %5550 = vmatprep.subr.bf16.mxu0 %v4326
        %5551 = vmatpush1.bf16.msra.mxu0 %v4325
        %5552 = vmatprep.subr.bf16.mxu0 %v4330
        %5553 = vmatpush1.bf16.msra.mxu0 %v4329
        %5554 = vmatprep.subr.bf16.mxu0 %v4334
        %5555 = vmatpush1.bf16.msra.mxu0 %v4333
        %5556 = vmatprep.subr.bf16.mxu0 %v4338
        %5557 = vmatpush1.bf16.msra.mxu0 %v4337
        %5558 = vmatprep.subr.bf16.mxu0 %v4342
        %5559 = vmatpush1.bf16.msra.mxu0 %v4341
        %5560 = vmatprep.subr.bf16.mxu0 %v4346
        %5561 = vmatpush1.bf16.msra.mxu0 %v4345
        %5562 = vmatprep.subr.bf16.mxu0 %v4350
        %5563 = vmatpush1.bf16.msra.mxu0 %v4349
        %5564 = vmatprep.subr.bf16.mxu0 %v4354
        %5565 = vmatpush1.bf16.msra.mxu0 %v4353
        %5566 = vmatprep.subr.bf16.mxu0 %v4358
        %5567 = vmatpush1.bf16.msra.mxu0 %v4357
        %5568 = vmatprep.subr.bf16.mxu0 %v4362
        %5569 = vmatpush1.bf16.msra.mxu0 %v4361
        %5570 = vmatprep.subr.bf16.mxu0 %v4366
        %5571 = vmatpush1.bf16.msra.mxu0 %v4365
        %5572 = vmatprep.subr.bf16.mxu0 %v4370
        %5573 = vmatpush1.bf16.msra.mxu0 %v4369
        %5574 = vmatprep.mubr.bf16.mxu0 %v5108
        %5575 = vmatmul.mubr.bf16.gmra.mrb[0].mxu0 %v5107
        %v5576 = vpop.f32.mrb[0].mxu0
        %v5577 = vadd.f32 0.0, %v5576
        %v5578 = vpop.f32.mrb[0].mxu0
        %v5579 = vadd.f32 0.0, %v5578
        %v5580 = vpop.f32.mrb[0].mxu0
        %v5581 = vadd.f32 0.0, %v5580
        %v5582 = vpop.f32.mrb[0].mxu0
        %v5583 = vadd.f32 0.0, %v5582
        %5584 = vmatprep.mubr.bf16.mxu0 %v5114
        %5585 = vmatmul.mubr.bf16.gmra.mrb[0].mxu0 %v5113
        %v5586 = vpop.f32.mrb[0].mxu0
        %v5587 = vadd.f32 0.0, %v5586
        %v5588 = vpop.f32.mrb[0].mxu0
        %v5589 = vadd.f32 0.0, %v5588
        %v5590 = vpop.f32.mrb[0].mxu0
        %v5591 = vadd.f32 0.0, %v5590
        %v5592 = vpop.f32.mrb[0].mxu0
        %v5593 = vadd.f32 0.0, %v5592
        %5594 = vmatprep.mubr.bf16.mxu0 %v5120
        %5595 = vmatmul.mubr.bf16.gmra.mrb[0].mxu0 %v5119
        %v5596 = vpop.f32.mrb[0].mxu0
        %v5597 = vadd.f32 0.0, %v5596
        %v5598 = vpop.f32.mrb[0].mxu0
        %v5599 = vadd.f32 0.0, %v5598
        %v5600 = vpop.f32.mrb[0].mxu0
        %v5601 = vadd.f32 0.0, %v5600
        %v5602 = vpop.f32.mrb[0].mxu0
        %v5603 = vadd.f32 0.0, %v5602
        %5604 = vmatprep.mubr.bf16.mxu0 %v5126
        %5605 = vmatmul.mubr.bf16.gmra.mrb[0].mxu0 %v5125
        %v5606 = vpop.f32.mrb[0].mxu0
        %v5607 = vadd.f32 0.0, %v5606
        %v5608 = vpop.f32.mrb[0].mxu0
        %v5609 = vadd.f32 0.0, %v5608
        %v5610 = vpop.f32.mrb[0].mxu0
        %v5611 = vadd.f32 0.0, %v5610
        %v5612 = vpop.f32.mrb[0].mxu0
        %v5613 = vadd.f32 0.0, %v5612
        %5614 = vmatprep.mubr.bf16.mxu0 %v5132
        %5615 = vmatmul.mubr.bf16.gmra.mrb[0].mxu0 %v5131
        %v5616 = vpop.f32.mrb[0].mxu0
        %v5617 = vadd.f32 0.0, %v5616
        %v5618 = vpop.f32.mrb[0].mxu0
        %v5619 = vadd.f32 0.0, %v5618
        %v5620 = vpop.f32.mrb[0].mxu0
        %v5621 = vadd.f32 0.0, %v5620
        %v5622 = vpop.f32.mrb[0].mxu0
        %v5623 = vadd.f32 0.0, %v5622
        %5624 = vmatprep.mubr.bf16.mxu0 %v5138
        %5625 = vmatmul.mubr.bf16.gmra.mrb[0].mxu0 %v5137
        %v5626 = vpop.f32.mrb[0].mxu0
        %v5627 = vadd.f32 0.0, %v5626
        %v5628 = vpop.f32.mrb[0].mxu0
        %v5629 = vadd.f32 0.0, %v5628
        %v5630 = vpop.f32.mrb[0].mxu0
        %v5631 = vadd.f32 0.0, %v5630
        %v5632 = vpop.f32.mrb[0].mxu0
        %v5633 = vadd.f32 0.0, %v5632
        %5634 = vmatprep.mubr.bf16.mxu0 %v5144
        %5635 = vmatmul.mubr.bf16.gmra.mrb[0].mxu0 %v5143
        %v5636 = vpop.f32.mrb[0].mxu0
        %v5637 = vadd.f32 0.0, %v5636
        %v5638 = vpop.f32.mrb[0].mxu0
        %v5639 = vadd.f32 0.0, %v5638
        %v5640 = vpop.f32.mrb[0].mxu0
        %v5641 = vadd.f32 0.0, %v5640
        %v5642 = vpop.f32.mrb[0].mxu0
        %v5643 = vadd.f32 0.0, %v5642
        %5644 = vmatprep.mubr.bf16.mxu0 %v5150
        %5645 = vmatmul.mubr.bf16.gmra.mrb[0].mxu0 %v5149
        %v5646 = vpop.f32.mrb[0].mxu0
        %v5647 = vadd.f32 0.0, %v5646
        %v5648 = vpop.f32.mrb[0].mxu0
        %v5649 = vadd.f32 0.0, %v5648
        %v5650 = vpop.f32.mrb[0].mxu0
        %v5651 = vadd.f32 0.0, %v5650
        %v5652 = vpop.f32.mrb[0].mxu0
        %v5653 = vadd.f32 0.0, %v5652
        %5654 = vdwg.mxu0
        %5655 = vmatprep.subr.bf16.mxu0 %v4442
        %5656 = vmatpush1.bf16.msra.mxu0 %v4565
        %5657 = vmatprep.subr.bf16.mxu0 %v4450
        %5658 = vmatpush1.bf16.msra.mxu0 %v4568
        %5659 = vmatprep.subr.bf16.mxu0 %v4458
        %5660 = vmatpush1.bf16.msra.mxu0 %v4571
        %5661 = vmatprep.subr.bf16.mxu0 %v4466
        %5662 = vmatpush1.bf16.msra.mxu0 %v4574
        %5663 = vmatprep.subr.bf16.mxu0 %v4474
        %5664 = vmatpush1.bf16.msra.mxu0 %v4577
        %5665 = vmatprep.subr.bf16.mxu0 %v4482
        %5666 = vmatpush1.bf16.msra.mxu0 %v4580
        %5667 = vmatprep.subr.bf16.mxu0 %v4490
        %5668 = vmatpush1.bf16.msra.mxu0 %v4583
        %5669 = vmatprep.subr.bf16.mxu0 %v4498
        %5670 = vmatpush1.bf16.msra.mxu0 %v4586
        %5671 = vmatprep.subr.bf16.mxu0 %v4506
        %5672 = vmatpush1.bf16.msra.mxu0 %v4589
        %5673 = vmatprep.subr.bf16.mxu0 %v4514
        %5674 = vmatpush1.bf16.msra.mxu0 %v4592
        %5675 = vmatprep.subr.bf16.mxu0 %v4522
        %5676 = vmatpush1.bf16.msra.mxu0 %v4595
        %5677 = vmatprep.subr.bf16.mxu0 %v4530
        %5678 = vmatpush1.bf16.msra.mxu0 %v4598
        %5679 = vmatprep.subr.bf16.mxu0 %v4538
        %5680 = vmatpush1.bf16.msra.mxu0 %v4601
        %5681 = vmatprep.subr.bf16.mxu0 %v4546
        %5682 = vmatpush1.bf16.msra.mxu0 %v4604
        %5683 = vmatprep.subr.bf16.mxu0 %v4554
        %5684 = vmatpush1.bf16.msra.mxu0 %v4607
        %5685 = vmatprep.subr.bf16.mxu0 %v4562
        %5686 = vmatpush1.bf16.msra.mxu0 %v4610
        %5687 = vmatprep.mubr.bf16.mxu0 %v5110
        %5688 = vmatmul.mubr.bf16.gmra.mrb[0].mxu0 %v5109
        %v5689 = vpop.f32.mrb[0].mxu0
        %v5690 = vadd.f32 %v5577, %v5689
        %v5691 = vpop.f32.mrb[0].mxu0
        %v5692 = vadd.f32 %v5579, %v5691
        %v5693 = vpop.f32.mrb[0].mxu0
        %v5694 = vadd.f32 %v5581, %v5693
        %v5695 = vpop.f32.mrb[0].mxu0
        %v5696 = vadd.f32 %v5583, %v5695
        %5697 = vmatprep.mubr.bf16.mxu0 %v5116
        %5698 = vmatmul.mubr.bf16.gmra.mrb[0].mxu0 %v5115
        %v5699 = vpop.f32.mrb[0].mxu0
        %v5700 = vadd.f32 %v5587, %v5699
        %v5701 = vpop.f32.mrb[0].mxu0
        %v5702 = vadd.f32 %v5589, %v5701
        %v5703 = vpop.f32.mrb[0].mxu0
        %v5704 = vadd.f32 %v5591, %v5703
        %v5705 = vpop.f32.mrb[0].mxu0
        %v5706 = vadd.f32 %v5593, %v5705
        %5707 = vmatprep.mubr.bf16.mxu0 %v5122
        %5708 = vmatmul.mubr.bf16.gmra.mrb[0].mxu0 %v5121
        %v5709 = vpop.f32.mrb[0].mxu0
        %v5710 = vadd.f32 %v5597, %v5709
        %v5711 = vpop.f32.mrb[0].mxu0
        %v5712 = vadd.f32 %v5599, %v5711
        %v5713 = vpop.f32.mrb[0].mxu0
        %v5714 = vadd.f32 %v5601, %v5713
        %v5715 = vpop.f32.mrb[0].mxu0
        %v5716 = vadd.f32 %v5603, %v5715
        %5717 = vmatprep.mubr.bf16.mxu0 %v5128
        %5718 = vmatmul.mubr.bf16.gmra.mrb[0].mxu0 %v5127
        %v5719 = vpop.f32.mrb[0].mxu0
        %v5720 = vadd.f32 %v5607, %v5719
        %v5721 = vpop.f32.mrb[0].mxu0
        %v5722 = vadd.f32 %v5609, %v5721
        %v5723 = vpop.f32.mrb[0].mxu0
        %v5724 = vadd.f32 %v5611, %v5723
        %v5725 = vpop.f32.mrb[0].mxu0
        %v5726 = vadd.f32 %v5613, %v5725
        %5727 = vmatprep.mubr.bf16.mxu0 %v5134
        %5728 = vmatmul.mubr.bf16.gmra.mrb[0].mxu0 %v5133
        %v5729 = vpop.f32.mrb[0].mxu0
        %v5730 = vadd.f32 %v5617, %v5729
        %v5731 = vpop.f32.mrb[0].mxu0
        %v5732 = vadd.f32 %v5619, %v5731
        %v5733 = vpop.f32.mrb[0].mxu0
        %v5734 = vadd.f32 %v5621, %v5733
        %v5735 = vpop.f32.mrb[0].mxu0
        %v5736 = vadd.f32 %v5623, %v5735
        %5737 = vmatprep.mubr.bf16.mxu0 %v5140
        %5738 = vmatmul.mubr.bf16.gmra.mrb[0].mxu0 %v5139
        %v5739 = vpop.f32.mrb[0].mxu0
        %v5740 = vadd.f32 %v5627, %v5739
        %v5741 = vpop.f32.mrb[0].mxu0
        %v5742 = vadd.f32 %v5629, %v5741
        %v5743 = vpop.f32.mrb[0].mxu0
        %v5744 = vadd.f32 %v5631, %v5743
        %v5745 = vpop.f32.mrb[0].mxu0
        %v5746 = vadd.f32 %v5633, %v5745
        %5747 = vmatprep.mubr.bf16.mxu0 %v5146
        %5748 = vmatmul.mubr.bf16.gmra.mrb[0].mxu0 %v5145
        %v5749 = vpop.f32.mrb[0].mxu0
        %v5750 = vadd.f32 %v5637, %v5749
        %v5751 = vpop.f32.mrb[0].mxu0
        %v5752 = vadd.f32 %v5639, %v5751
        %v5753 = vpop.f32.mrb[0].mxu0
        %v5754 = vadd.f32 %v5641, %v5753
        %v5755 = vpop.f32.mrb[0].mxu0
        %v5756 = vadd.f32 %v5643, %v5755
        %5757 = vmatprep.mubr.bf16.mxu0 %v5152
        %5758 = vmatmul.mubr.bf16.gmra.mrb[0].mxu0 %v5151
        %v5759 = vpop.f32.mrb[0].mxu0
        %v5760 = vadd.f32 %v5647, %v5759
        %v5761 = vpop.f32.mrb[0].mxu0
        %v5762 = vadd.f32 %v5649, %v5761
        %v5763 = vpop.f32.mrb[0].mxu0
        %v5764 = vadd.f32 %v5651, %v5763
        %v5765 = vpop.f32.mrb[0].mxu0
        %v5766 = vadd.f32 %v5653, %v5765
        %5767 = vdwg.mxu0
        %5768 = vmatprep.subr.bf16.mxu0 %v4682
        %5769 = vmatpush1.bf16.msra.mxu0 %v4805
        %5770 = vmatprep.subr.bf16.mxu0 %v4690
        %5771 = vmatpush1.bf16.msra.mxu0 %v4808
        %5772 = vmatprep.subr.bf16.mxu0 %v4698
        %5773 = vmatpush1.bf16.msra.mxu0 %v4811
        %5774 = vmatprep.subr.bf16.mxu0 %v4706
        %5775 = vmatpush1.bf16.msra.mxu0 %v4814
        %5776 = vmatprep.subr.bf16.mxu0 %v4714
        %5777 = vmatpush1.bf16.msra.mxu0 %v4817
        %5778 = vmatprep.subr.bf16.mxu0 %v4722
        %5779 = vmatpush1.bf16.msra.mxu0 %v4820
        %5780 = vmatprep.subr.bf16.mxu0 %v4730
        %5781 = vmatpush1.bf16.msra.mxu0 %v4823
        %5782 = vmatprep.subr.bf16.mxu0 %v4738
        %5783 = vmatpush1.bf16.msra.mxu0 %v4826
        %5784 = vmatprep.subr.bf16.mxu0 %v4746
        %5785 = vmatpush1.bf16.msra.mxu0 %v4829
        %5786 = vmatprep.subr.bf16.mxu0 %v4754
        %5787 = vmatpush1.bf16.msra.mxu0 %v4832
        %5788 = vmatprep.subr.bf16.mxu0 %v4762
        %5789 = vmatpush1.bf16.msra.mxu0 %v4835
        %5790 = vmatprep.subr.bf16.mxu0 %v4770
        %5791 = vmatpush1.bf16.msra.mxu0 %v4838
        %5792 = vmatprep.subr.bf16.mxu0 %v4778
        %5793 = vmatpush1.bf16.msra.mxu0 %v4841
        %5794 = vmatprep.subr.bf16.mxu0 %v4786
        %5795 = vmatpush1.bf16.msra.mxu0 %v4844
        %5796 = vmatprep.subr.bf16.mxu0 %v4794
        %5797 = vmatpush1.bf16.msra.mxu0 %v4847
        %5798 = vmatprep.subr.bf16.mxu0 %v4802
        %5799 = vmatpush1.bf16.msra.mxu0 %v4850
        %5800 = vmatprep.mubr.bf16.mxu0 %v5112
        %5801 = vmatmul.mubr.bf16.gmra.mrb[0].mxu0 %v5111
        %v5802 = vpop.f32.mrb[0].mxu0
        %v5803 = vadd.f32 %v5690, %v5802
        %v5804 = vpop.f32.mrb[0].mxu0
        %v5805 = vadd.f32 %v5692, %v5804
        %v5806 = vpop.f32.mrb[0].mxu0
        %v5807 = vadd.f32 %v5694, %v5806
        %v5808 = vpop.f32.mrb[0].mxu0
        %v5809 = vadd.f32 %v5696, %v5808
        %5810 = vmatprep.mubr.bf16.mxu0 %v5118
        %5811 = vmatmul.mubr.bf16.gmra.mrb[0].mxu0 %v5117
        %v5812 = vpop.f32.mrb[0].mxu0
        %v5813 = vadd.f32 %v5700, %v5812
        %v5814 = vpop.f32.mrb[0].mxu0
        %v5815 = vadd.f32 %v5702, %v5814
        %v5816 = vpop.f32.mrb[0].mxu0
        %v5817 = vadd.f32 %v5704, %v5816
        %v5818 = vpop.f32.mrb[0].mxu0
        %v5819 = vadd.f32 %v5706, %v5818
        %5820 = vmatprep.mubr.bf16.mxu0 %v5124
        %5821 = vmatmul.mubr.bf16.gmra.mrb[0].mxu0 %v5123
        %v5822 = vpop.f32.mrb[0].mxu0
        %v5823 = vadd.f32 %v5710, %v5822
        %v5824 = vpop.f32.mrb[0].mxu0
        %v5825 = vadd.f32 %v5712, %v5824
        %v5826 = vpop.f32.mrb[0].mxu0
        %v5827 = vadd.f32 %v5714, %v5826
        %v5828 = vpop.f32.mrb[0].mxu0
        %v5829 = vadd.f32 %v5716, %v5828
        %5830 = vmatprep.mubr.bf16.mxu0 %v5130
        %5831 = vmatmul.mubr.bf16.gmra.mrb[0].mxu0 %v5129
        %v5832 = vpop.f32.mrb[0].mxu0
        %v5833 = vadd.f32 %v5720, %v5832
        %v5834 = vpop.f32.mrb[0].mxu0
        %v5835 = vadd.f32 %v5722, %v5834
        %v5836 = vpop.f32.mrb[0].mxu0
        %v5837 = vadd.f32 %v5724, %v5836
        %v5838 = vpop.f32.mrb[0].mxu0
        %v5839 = vadd.f32 %v5726, %v5838
        %5840 = vmatprep.mubr.bf16.mxu0 %v5136
        %5841 = vmatmul.mubr.bf16.gmra.mrb[0].mxu0 %v5135
        %v5842 = vpop.f32.mrb[0].mxu0
        %v5843 = vadd.f32 %v5730, %v5842
        %v5844 = vpop.f32.mrb[0].mxu0
        %v5845 = vadd.f32 %v5732, %v5844
        %v5846 = vpop.f32.mrb[0].mxu0
        %v5847 = vadd.f32 %v5734, %v5846
        %v5848 = vpop.f32.mrb[0].mxu0
        %v5849 = vadd.f32 %v5736, %v5848
        %5850 = vmatprep.mubr.bf16.mxu0 %v5142
        %5851 = vmatmul.mubr.bf16.gmra.mrb[0].mxu0 %v5141
        %v5852 = vpop.f32.mrb[0].mxu0
        %v5853 = vadd.f32 %v5740, %v5852
        %v5854 = vpop.f32.mrb[0].mxu0
        %v5855 = vadd.f32 %v5742, %v5854
        %v5856 = vpop.f32.mrb[0].mxu0
        %v5857 = vadd.f32 %v5744, %v5856
        %v5858 = vpop.f32.mrb[0].mxu0
        %v5859 = vadd.f32 %v5746, %v5858
        %5860 = vmatprep.mubr.bf16.mxu0 %v5148
        %5861 = vmatmul.mubr.bf16.gmra.mrb[0].mxu0 %v5147
        %v5862 = vpop.f32.mrb[0].mxu0
        %v5863 = vadd.f32 %v5750, %v5862
        %v5864 = vpop.f32.mrb[0].mxu0
        %v5865 = vadd.f32 %v5752, %v5864
        %v5866 = vpop.f32.mrb[0].mxu0
        %v5867 = vadd.f32 %v5754, %v5866
        %v5868 = vpop.f32.mrb[0].mxu0
        %v5869 = vadd.f32 %v5756, %v5868
        %5870 = vmatprep.mubr.bf16.mxu0 %v5154
        %5871 = vmatmul.mubr.bf16.gmra.mrb[0].mxu0 %v5153
        %v5872 = vpop.f32.mrb[0].mxu0
        %v5873 = vadd.f32 %v5760, %v5872
        %v5874 = vpop.f32.mrb[0].mxu0
        %v5875 = vadd.f32 %v5762, %v5874
        %v5876 = vpop.f32.mrb[0].mxu0
        %v5877 = vadd.f32 %v5764, %v5876
        %v5878 = vpop.f32.mrb[0].mxu0
        %v5879 = vadd.f32 %v5766, %v5878
        %5880 = vdwg.mxu0
        %v5881 = vpack.c.bf16 %v5468, %v5464
        %v5882 = vpack.c.bf16 %v5470, %v5466
        %v5883 = vpack.c.bf16 %v5807, %v5803
        %v5884 = vpack.c.bf16 %v5809, %v5805
        %v5885 = vpack.c.bf16 %v5478, %v5474
        %v5886 = vpack.c.bf16 %v5480, %v5476
        %v5887 = vpack.c.bf16 %v5817, %v5813
        %v5888 = vpack.c.bf16 %v5819, %v5815
        %v5889 = vpack.c.bf16 %v5488, %v5484
        %v5890 = vpack.c.bf16 %v5490, %v5486
        %v5891 = vpack.c.bf16 %v5827, %v5823
        %v5892 = vpack.c.bf16 %v5829, %v5825
        %v5893 = vpack.c.bf16 %v5498, %v5494
        %v5894 = vpack.c.bf16 %v5500, %v5496
        %v5895 = vpack.c.bf16 %v5837, %v5833
        %v5896 = vpack.c.bf16 %v5839, %v5835
        %v5897 = vpack.c.bf16 %v5508, %v5504
        %v5898 = vpack.c.bf16 %v5510, %v5506
        %v5899 = vpack.c.bf16 %v5847, %v5843
        %v5900 = vpack.c.bf16 %v5849, %v5845
        %v5901 = vpack.c.bf16 %v5518, %v5514
        %v5902 = vpack.c.bf16 %v5520, %v5516
        %v5903 = vpack.c.bf16 %v5857, %v5853
        %v5904 = vpack.c.bf16 %v5859, %v5855
        %v5905 = vpack.c.bf16 %v5528, %v5524
        %v5906 = vpack.c.bf16 %v5530, %v5526
        %v5907 = vpack.c.bf16 %v5867, %v5863
        %v5908 = vpack.c.bf16 %v5869, %v5865
        %v5909 = vpack.c.bf16 %v5538, %v5534
        %v5910 = vpack.c.bf16 %v5540, %v5536
        %v5911 = vpack.c.bf16 %v5877, %v5873
        %v5912 = vpack.c.bf16 %v5879, %v5875
        %v5913 = vld [vmem:[%s8] sm:$0xf]
        %v5914 = vld [vmem:[%s8 + $0x4] sm:$0xf]
        %v5915 = vld [vmem:[%s8 + $0x8] sm:$0xf]
        %v5916 = vld [vmem:[%s8 + $0xc] sm:$0xf]
        %v5917 = vld [vmem:[%s8 + $0x10] sm:$0xf]
        %v5918 = vld [vmem:[%s8 + $0x14] sm:$0xf]
        %v5919 = vld [vmem:[%s8 + $0x18] sm:$0xf]
        %v5920 = vld [vmem:[%s8 + $0x1c] sm:$0xf]
        %v5921 = vld [vmem:[%s8 + $0x20] sm:$0xf]
        %v5922 = vld [vmem:[%s8 + $0x24] sm:$0xf]
        %v5923 = vld [vmem:[%s8 + $0x28] sm:$0xf]
        %v5924 = vld [vmem:[%s8 + $0x2c] sm:$0xf]
        %v5925 = vld [vmem:[%s8 + $0x30] sm:$0xf]
        %v5926 = vld [vmem:[%s8 + $0x34] sm:$0xf]
        %v5927 = vld [vmem:[%s8 + $0x38] sm:$0xf]
        %v5928 = vld [vmem:[%s8 + $0x3c] sm:$0xf]
        %5930 = vset.pattern.permute.xlu0 0
        %5931 = vperm.xlu0 %5930, %v5913
        %v5932 = vpop.permute.xlu0 %5931
        %v5935 = vunpack.c.l.s4 839922192
        %v5936 = vunpack.c.0.s8 %v5935
        %v5937 = vlaneseq
        %v5938 = vshrl.u32 %v5937, 7
        %v5939 = vsub.s32 %v5936, %v5938
        %v5940 = vrot.slane %v5932, %v5939
        %5942 = vset.pattern.permute.xlu0 0
        %5943 = vperm.xlu0 %5942, %v5914
        %v5944 = vpop.permute.xlu0 %5943
        %v5947 = vunpack.c.l.s4 839922192
        %v5948 = vunpack.c.0.s8 %v5947
        %v5949 = vlaneseq
        %v5950 = vshrl.u32 %v5949, 7
        %v5951 = vsub.s32 %v5948, %v5950
        %v5952 = vrot.slane %v5944, %v5951
        %5954 = vset.pattern.permute.xlu0 0
        %5955 = vperm.xlu0 %5954, %v5915
        %v5956 = vpop.permute.xlu0 %5955
        %v5959 = vunpack.c.l.s4 839922192
        %v5960 = vunpack.c.0.s8 %v5959
        %v5961 = vlaneseq
        %v5962 = vshrl.u32 %v5961, 7
        %v5963 = vsub.s32 %v5960, %v5962
        %v5964 = vrot.slane %v5956, %v5963
        %5966 = vset.pattern.permute.xlu0 0
        %5967 = vperm.xlu0 %5966, %v5916
        %v5968 = vpop.permute.xlu0 %5967
        %v5971 = vunpack.c.l.s4 839922192
        %v5972 = vunpack.c.0.s8 %v5971
        %v5973 = vlaneseq
        %v5974 = vshrl.u32 %v5973, 7
        %v5975 = vsub.s32 %v5972, %v5974
        %v5976 = vrot.slane %v5968, %v5975
        %5978 = vset.pattern.permute.xlu0 0
        %5979 = vperm.xlu0 %5978, %v5917
        %v5980 = vpop.permute.xlu0 %5979
        %v5983 = vunpack.c.l.s4 839922192
        %v5984 = vunpack.c.0.s8 %v5983
        %v5985 = vlaneseq
        %v5986 = vshrl.u32 %v5985, 7
        %v5987 = vsub.s32 %v5984, %v5986
        %v5988 = vrot.slane %v5980, %v5987
        %5990 = vset.pattern.permute.xlu0 0
        %5991 = vperm.xlu0 %5990, %v5918
        %v5992 = vpop.permute.xlu0 %5991
        %v5995 = vunpack.c.l.s4 839922192
        %v5996 = vunpack.c.0.s8 %v5995
        %v5997 = vlaneseq
        %v5998 = vshrl.u32 %v5997, 7
        %v5999 = vsub.s32 %v5996, %v5998
        %v6000 = vrot.slane %v5992, %v5999
        %6002 = vset.pattern.permute.xlu0 0
        %6003 = vperm.xlu0 %6002, %v5919
        %v6004 = vpop.permute.xlu0 %6003
        %v6007 = vunpack.c.l.s4 839922192
        %v6008 = vunpack.c.0.s8 %v6007
        %v6009 = vlaneseq
        %v6010 = vshrl.u32 %v6009, 7
        %v6011 = vsub.s32 %v6008, %v6010
        %v6012 = vrot.slane %v6004, %v6011
        %6014 = vset.pattern.permute.xlu0 0
        %6015 = vperm.xlu0 %6014, %v5920
        %v6016 = vpop.permute.xlu0 %6015
        %v6019 = vunpack.c.l.s4 839922192
        %v6020 = vunpack.c.0.s8 %v6019
        %v6021 = vlaneseq
        %v6022 = vshrl.u32 %v6021, 7
        %v6023 = vsub.s32 %v6020, %v6022
        %v6024 = vrot.slane %v6016, %v6023
        %6026 = vset.pattern.permute.xlu0 0
        %6027 = vperm.xlu0 %6026, %v5921
        %v6028 = vpop.permute.xlu0 %6027
        %v6031 = vunpack.c.l.s4 839922192
        %v6032 = vunpack.c.0.s8 %v6031
        %v6033 = vlaneseq
        %v6034 = vshrl.u32 %v6033, 7
        %v6035 = vsub.s32 %v6032, %v6034
        %v6036 = vrot.slane %v6028, %v6035
        %6038 = vset.pattern.permute.xlu0 0
        %6039 = vperm.xlu0 %6038, %v5922
        %v6040 = vpop.permute.xlu0 %6039
        %v6043 = vunpack.c.l.s4 839922192
        %v6044 = vunpack.c.0.s8 %v6043
        %v6045 = vlaneseq
        %v6046 = vshrl.u32 %v6045, 7
        %v6047 = vsub.s32 %v6044, %v6046
        %v6048 = vrot.slane %v6040, %v6047
        %6050 = vset.pattern.permute.xlu0 0
        %6051 = vperm.xlu0 %6050, %v5923
        %v6052 = vpop.permute.xlu0 %6051
        %v6055 = vunpack.c.l.s4 839922192
        %v6056 = vunpack.c.0.s8 %v6055
        %v6057 = vlaneseq
        %v6058 = vshrl.u32 %v6057, 7
        %v6059 = vsub.s32 %v6056, %v6058
        %v6060 = vrot.slane %v6052, %v6059
        %6062 = vset.pattern.permute.xlu0 0
        %6063 = vperm.xlu0 %6062, %v5924
        %v6064 = vpop.permute.xlu0 %6063
        %v6067 = vunpack.c.l.s4 839922192
        %v6068 = vunpack.c.0.s8 %v6067
        %v6069 = vlaneseq
        %v6070 = vshrl.u32 %v6069, 7
        %v6071 = vsub.s32 %v6068, %v6070
        %v6072 = vrot.slane %v6064, %v6071
        %6074 = vset.pattern.permute.xlu0 0
        %6075 = vperm.xlu0 %6074, %v5925
        %v6076 = vpop.permute.xlu0 %6075
        %v6079 = vunpack.c.l.s4 839922192
        %v6080 = vunpack.c.0.s8 %v6079
        %v6081 = vlaneseq
        %v6082 = vshrl.u32 %v6081, 7
        %v6083 = vsub.s32 %v6080, %v6082
        %v6084 = vrot.slane %v6076, %v6083
        %6086 = vset.pattern.permute.xlu0 0
        %6087 = vperm.xlu0 %6086, %v5926
        %v6088 = vpop.permute.xlu0 %6087
        %v6091 = vunpack.c.l.s4 839922192
        %v6092 = vunpack.c.0.s8 %v6091
        %v6093 = vlaneseq
        %v6094 = vshrl.u32 %v6093, 7
        %v6095 = vsub.s32 %v6092, %v6094
        %v6096 = vrot.slane %v6088, %v6095
        %6098 = vset.pattern.permute.xlu0 0
        %6099 = vperm.xlu0 %6098, %v5927
        %v6100 = vpop.permute.xlu0 %6099
        %v6103 = vunpack.c.l.s4 839922192
        %v6104 = vunpack.c.0.s8 %v6103
        %v6105 = vlaneseq
        %v6106 = vshrl.u32 %v6105, 7
        %v6107 = vsub.s32 %v6104, %v6106
        %v6108 = vrot.slane %v6100, %v6107
        %6110 = vset.pattern.permute.xlu0 0
        %6111 = vperm.xlu0 %6110, %v5928
        %v6112 = vpop.permute.xlu0 %6111
        %v6115 = vunpack.c.l.s4 839922192
        %v6116 = vunpack.c.0.s8 %v6115
        %v6117 = vlaneseq
        %v6118 = vshrl.u32 %v6117, 7
        %v6119 = vsub.s32 %v6116, %v6118
        %v6120 = vrot.slane %v6112, %v6119
        %v6137 = vunpack.c.l.b16 %v5940
        %v6138 = vunpack.c.l.b16 %v5952
        %v6139 = vunpack.c.l.b16 %v5964
        %v6140 = vunpack.c.l.b16 %v5976
        %v6141 = vunpack.c.l.b16 %v5988
        %v6142 = vunpack.c.l.b16 %v6000
        %v6143 = vunpack.c.l.b16 %v6012
        %v6144 = vunpack.c.l.b16 %v6024
        %v6145 = vunpack.c.l.b16 %v6036
        %v6146 = vunpack.c.l.b16 %v6048
        %v6147 = vunpack.c.l.b16 %v6060
        %v6148 = vunpack.c.l.b16 %v6072
        %v6149 = vunpack.c.l.b16 %v6084
        %v6150 = vunpack.c.l.b16 %v6096
        %v6151 = vunpack.c.l.b16 %v6108
        %v6152 = vunpack.c.l.b16 %v6120
        %v6153 = vpack.c.b16 %v6138, %v6137
        %v6154 = vpack.c.b16 %v6140, %v6139
        %v6155 = vpack.c.b16 %v6142, %v6141
        %v6156 = vpack.c.b16 %v6144, %v6143
        %v6157 = vpack.c.b16 %v6146, %v6145
        %v6158 = vpack.c.b16 %v6148, %v6147
        %v6159 = vpack.c.b16 %v6150, %v6149
        %v6160 = vpack.c.b16 %v6152, %v6151
        %v6169 = vadd.bf16 %v5881, %v6153
        %v6170 = vadd.bf16 %v5882, %v6153
        %v6171 = vadd.bf16 %v5883, %v6153
        %v6172 = vadd.bf16 %v5884, %v6153
        %v6173 = vadd.bf16 %v5885, %v6154
        %v6174 = vadd.bf16 %v5886, %v6154
        %v6175 = vadd.bf16 %v5887, %v6154
        %v6176 = vadd.bf16 %v5888, %v6154
        %v6177 = vadd.bf16 %v5889, %v6155
        %v6178 = vadd.bf16 %v5890, %v6155
        %v6179 = vadd.bf16 %v5891, %v6155
        %v6180 = vadd.bf16 %v5892, %v6155
        %v6181 = vadd.bf16 %v5893, %v6156
        %v6182 = vadd.bf16 %v5894, %v6156
        %v6183 = vadd.bf16 %v5895, %v6156
        %v6184 = vadd.bf16 %v5896, %v6156
        %v6185 = vadd.bf16 %v5897, %v6157
        %v6186 = vadd.bf16 %v5898, %v6157
        %v6187 = vadd.bf16 %v5899, %v6157
        %v6188 = vadd.bf16 %v5900, %v6157
        %v6189 = vadd.bf16 %v5901, %v6158
        %v6190 = vadd.bf16 %v5902, %v6158
        %v6191 = vadd.bf16 %v5903, %v6158
        %v6192 = vadd.bf16 %v5904, %v6158
        %v6193 = vadd.bf16 %v5905, %v6159
        %v6194 = vadd.bf16 %v5906, %v6159
        %v6195 = vadd.bf16 %v5907, %v6159
        %v6196 = vadd.bf16 %v5908, %v6159
        %v6197 = vadd.bf16 %v5909, %v6160
        %v6198 = vadd.bf16 %v5910, %v6160
        %v6199 = vadd.bf16 %v5911, %v6160
        %v6200 = vadd.bf16 %v5912, %v6160
        %v6201 = vmax.bf16 %v6169, 0
        %v6202 = vmax.bf16 %v6170, 0
        %v6203 = vmax.bf16 %v6171, 0
        %v6204 = vmax.bf16 %v6172, 0
        %v6205 = vmax.bf16 %v6173, 0
        %v6206 = vmax.bf16 %v6174, 0
        %v6207 = vmax.bf16 %v6175, 0
        %v6208 = vmax.bf16 %v6176, 0
        %v6209 = vmax.bf16 %v6177, 0
        %v6210 = vmax.bf16 %v6178, 0
        %v6211 = vmax.bf16 %v6179, 0
        %v6212 = vmax.bf16 %v6180, 0
        %v6213 = vmax.bf16 %v6181, 0
        %v6214 = vmax.bf16 %v6182, 0
        %v6215 = vmax.bf16 %v6183, 0
        %v6216 = vmax.bf16 %v6184, 0
        %v6217 = vmax.bf16 %v6185, 0
        %v6218 = vmax.bf16 %v6186, 0
        %v6219 = vmax.bf16 %v6187, 0
        %v6220 = vmax.bf16 %v6188, 0
        %v6221 = vmax.bf16 %v6189, 0
        %v6222 = vmax.bf16 %v6190, 0
        %v6223 = vmax.bf16 %v6191, 0
        %v6224 = vmax.bf16 %v6192, 0
        %v6225 = vmax.bf16 %v6193, 0
        %v6226 = vmax.bf16 %v6194, 0
        %v6227 = vmax.bf16 %v6195, 0
        %v6228 = vmax.bf16 %v6196, 0
        %v6229 = vmax.bf16 %v6197, 0
        %v6230 = vmax.bf16 %v6198, 0
        %v6231 = vmax.bf16 %v6199, 0
        %v6232 = vmax.bf16 %v6200, 0
        %6265 = vrot.lane.b32.xlu0 %v6201, 127
        %v6266 = vpop.permute.xlu0 %6265
        %6267 = vrot.lane.b32.xlu0 %v6202, 127
        %v6268 = vpop.permute.xlu0 %6267
        %6269 = vrot.lane.b32.xlu0 %v6203, 127
        %v6270 = vpop.permute.xlu0 %6269
        %6271 = vrot.lane.b32.xlu0 %v6204, 127
        %v6272 = vpop.permute.xlu0 %6271
        %6273 = vrot.lane.b32.xlu0 %v6205, 127
        %v6274 = vpop.permute.xlu0 %6273
        %6275 = vrot.lane.b32.xlu0 %v6206, 127
        %v6276 = vpop.permute.xlu0 %6275
        %6277 = vrot.lane.b32.xlu0 %v6207, 127
        %v6278 = vpop.permute.xlu0 %6277
        %6279 = vrot.lane.b32.xlu0 %v6208, 127
        %v6280 = vpop.permute.xlu0 %6279
        %6281 = vrot.lane.b32.xlu0 %v6209, 127
        %v6282 = vpop.permute.xlu0 %6281
        %6283 = vrot.lane.b32.xlu0 %v6210, 127
        %v6284 = vpop.permute.xlu0 %6283
        %6285 = vrot.lane.b32.xlu0 %v6211, 127
        %v6286 = vpop.permute.xlu0 %6285
        %6287 = vrot.lane.b32.xlu0 %v6212, 127
        %v6288 = vpop.permute.xlu0 %6287
        %6289 = vrot.lane.b32.xlu0 %v6213, 127
        %v6290 = vpop.permute.xlu0 %6289
        %6291 = vrot.lane.b32.xlu0 %v6214, 127
        %v6292 = vpop.permute.xlu0 %6291
        %6293 = vrot.lane.b32.xlu0 %v6215, 127
        %v6294 = vpop.permute.xlu0 %6293
        %6295 = vrot.lane.b32.xlu0 %v6216, 127
        %v6296 = vpop.permute.xlu0 %6295
        %6297 = vrot.lane.b32.xlu0 %v6217, 127
        %v6298 = vpop.permute.xlu0 %6297
        %6299 = vrot.lane.b32.xlu0 %v6218, 127
        %v6300 = vpop.permute.xlu0 %6299
        %6301 = vrot.lane.b32.xlu0 %v6219, 127
        %v6302 = vpop.permute.xlu0 %6301
        %6303 = vrot.lane.b32.xlu0 %v6220, 127
        %v6304 = vpop.permute.xlu0 %6303
        %6305 = vrot.lane.b32.xlu0 %v6221, 127
        %v6306 = vpop.permute.xlu0 %6305
        %6307 = vrot.lane.b32.xlu0 %v6222, 127
        %v6308 = vpop.permute.xlu0 %6307
        %6309 = vrot.lane.b32.xlu0 %v6223, 127
        %v6310 = vpop.permute.xlu0 %6309
        %6311 = vrot.lane.b32.xlu0 %v6224, 127
        %v6312 = vpop.permute.xlu0 %6311
        %6313 = vrot.lane.b32.xlu0 %v6225, 127
        %v6314 = vpop.permute.xlu0 %6313
        %6315 = vrot.lane.b32.xlu0 %v6226, 127
        %v6316 = vpop.permute.xlu0 %6315
        %6317 = vrot.lane.b32.xlu0 %v6227, 127
        %v6318 = vpop.permute.xlu0 %6317
        %6319 = vrot.lane.b32.xlu0 %v6228, 127
        %v6320 = vpop.permute.xlu0 %6319
        %6321 = vrot.lane.b32.xlu0 %v6229, 127
        %v6322 = vpop.permute.xlu0 %6321
        %6323 = vrot.lane.b32.xlu0 %v6230, 127
        %v6324 = vpop.permute.xlu0 %6323
        %6325 = vrot.lane.b32.xlu0 %v6231, 127
        %v6326 = vpop.permute.xlu0 %6325
        %6327 = vrot.lane.b32.xlu0 %v6232, 127
        %v6328 = vpop.permute.xlu0 %6327
        %v6329 = vsel %vm445, %v6266, %v6268
        %v6330 = vsel %vm445, %v6268, %v6270
        %v6331 = vsel %vm445, %v6270, %v6272
        %v6332 = vsel %vm445, %v6274, %v6276
        %v6333 = vsel %vm445, %v6276, %v6278
        %v6334 = vsel %vm445, %v6278, %v6280
        %v6335 = vsel %vm445, %v6282, %v6284
        %v6336 = vsel %vm445, %v6284, %v6286
        %v6337 = vsel %vm445, %v6286, %v6288
        %v6338 = vsel %vm445, %v6290, %v6292
        %v6339 = vsel %vm445, %v6292, %v6294
        %v6340 = vsel %vm445, %v6294, %v6296
        %v6341 = vsel %vm445, %v6298, %v6300
        %v6342 = vsel %vm445, %v6300, %v6302
        %v6343 = vsel %vm445, %v6302, %v6304
        %v6344 = vsel %vm445, %v6306, %v6308
        %v6345 = vsel %vm445, %v6308, %v6310
        %v6346 = vsel %vm445, %v6310, %v6312
        %v6347 = vsel %vm445, %v6314, %v6316
        %v6348 = vsel %vm445, %v6316, %v6318
        %v6349 = vsel %vm445, %v6318, %v6320
        %v6350 = vsel %vm445, %v6322, %v6324
        %v6351 = vsel %vm445, %v6324, %v6326
        %v6352 = vsel %vm445, %v6326, %v6328
        %v6385 = vmax.bf16 %v6201, %v6329
        %v6386 = vmax.bf16 %v6202, %v6330
        %v6387 = vmax.bf16 %v6203, %v6331
        %v6388 = vmax.bf16 %v6204, %v6272
        %v6389 = vmax.bf16 %v6205, %v6332
        %v6390 = vmax.bf16 %v6206, %v6333
        %v6391 = vmax.bf16 %v6207, %v6334
        %v6392 = vmax.bf16 %v6208, %v6280
        %v6393 = vmax.bf16 %v6209, %v6335
        %v6394 = vmax.bf16 %v6210, %v6336
        %v6395 = vmax.bf16 %v6211, %v6337
        %v6396 = vmax.bf16 %v6212, %v6288
        %v6397 = vmax.bf16 %v6213, %v6338
        %v6398 = vmax.bf16 %v6214, %v6339
        %v6399 = vmax.bf16 %v6215, %v6340
        %v6400 = vmax.bf16 %v6216, %v6296
        %v6401 = vmax.bf16 %v6217, %v6341
        %v6402 = vmax.bf16 %v6218, %v6342
        %v6403 = vmax.bf16 %v6219, %v6343
        %v6404 = vmax.bf16 %v6220, %v6304
        %v6405 = vmax.bf16 %v6221, %v6344
        %v6406 = vmax.bf16 %v6222, %v6345
        %v6407 = vmax.bf16 %v6223, %v6346
        %v6408 = vmax.bf16 %v6224, %v6312
        %v6409 = vmax.bf16 %v6225, %v6347
        %v6410 = vmax.bf16 %v6226, %v6348
        %v6411 = vmax.bf16 %v6227, %v6349
        %v6412 = vmax.bf16 %v6228, %v6320
        %v6413 = vmax.bf16 %v6229, %v6350
        %v6414 = vmax.bf16 %v6230, %v6351
        %v6415 = vmax.bf16 %v6231, %v6352
        %v6416 = vmax.bf16 %v6232, %v6328
        %v6417 = vlaneseq
        %v6418 = vshrl.u32 %v6417, 7
        %v6419 = vadd.s32 %v6418, 8
        %v6420 = vadd.s32 %v6418, 16
        %v6421 = vadd.s32 %v6418, 24
        %v6422 = vadd.s32 %v6418, 32
        %v6423 = vadd.s32 %v6418, 40
        %v6424 = vadd.s32 %v6418, 48
        %v6425 = vadd.s32 %v6418, 56
        %v6426 = vadd.s32 %v6418, 64
        %v6427 = vadd.s32 %v6418, 72
        %v6428 = vadd.s32 %v6418, 80
        %v6429 = vadd.s32 %v6418, 88
        %v6430 = vadd.s32 %v6418, 96
        %v6431 = vadd.s32 %v6418, 104
        %v6432 = vadd.s32 %v6418, 112
        %v6433 = vadd.s32 %v6418, 120
        %v6434 = vadd.s32 %v6418, 128
        %v6435 = vadd.s32 %v6418, 136
        %v6436 = vadd.s32 %v6418, 144
        %v6437 = vadd.s32 %v6418, 152
        %v6438 = vadd.s32 %v6418, 160
        %v6439 = vadd.s32 %v6418, 168
        %v6440 = vadd.s32 %v6418, 176
        %v6441 = vadd.s32 %v6418, 184
        %v6442 = vadd.s32 %v6418, 192
        %v6443 = vadd.s32 %v6418, 200
        %v6444 = vadd.s32 %v6418, 208
        %v6445 = vadd.s32 %v6418, 216
        %v6446 = vadd.s32 %v6418, 224
        %v6447 = vadd.s32 %v6418, 232
        %v6448 = vadd.s32 %v6418, 240
        %v6449 = vadd.s32 %v6418, 248
        %v6450 = vadd.s32 %v6418, 256
        %v6451 = vadd.s32 %v6418, 264
        %v6452 = vadd.s32 %v6418, 272
        %v6453 = vadd.s32 %v6418, 280
        %v6454 = vadd.s32 %v6418, 288
        %v6455 = vadd.s32 %v6418, 296
        %v6456 = vadd.s32 %v6418, 304
        %v6457 = vadd.s32 %v6418, 312
        %v6458 = vadd.s32 %v6418, 320
        %v6459 = vadd.s32 %v6418, 328
        %v6460 = vadd.s32 %v6418, 336
        %v6461 = vadd.s32 %v6418, 344
        %v6462 = vadd.s32 %v6418, 352
        %v6463 = vadd.s32 %v6418, 360
        %v6464 = vadd.s32 %v6418, 368
        %v6465 = vadd.s32 %v6418, 376
        %v6466 = vadd.s32 %v6418, 384
        %v6467 = vadd.s32 %v6418, 392
        %v6468 = vadd.s32 %v6418, 400
        %v6469 = vadd.s32 %v6418, 408
        %v6470 = vadd.s32 %v6418, 416
        %v6471 = vadd.s32 %v6418, 424
        %v6472 = vadd.s32 %v6418, 432
        %v6473 = vadd.s32 %v6418, 440
        %v6474 = vadd.s32 %v6418, 448
        %v6475 = vadd.s32 %v6418, 456
        %v6476 = vadd.s32 %v6418, 464
        %v6477 = vadd.s32 %v6418, 472
        %v6478 = vadd.s32 %v6418, 480
        %v6479 = vadd.s32 %v6418, 488
        %v6480 = vadd.s32 %v6418, 496
        %v6481 = vlaneseq
        %v6482 = vand.u32 %v6481, 127
        %v6483 = vmul.u32 %v6482, 64
        %v6484 = vsub.s32 %v6418, %v6483
        %v6485 = vsub.s32 %v6419, %v6483
        %v6486 = vsub.s32 %v6420, %v6483
        %v6487 = vsub.s32 %v6421, %v6483
        %v6488 = vsub.s32 %v6422, %v6483
        %v6489 = vsub.s32 %v6423, %v6483
        %v6490 = vsub.s32 %v6424, %v6483
        %v6491 = vsub.s32 %v6425, %v6483
        %v6492 = vsub.s32 %v6426, %v6483
        %v6493 = vsub.s32 %v6427, %v6483
        %v6494 = vsub.s32 %v6428, %v6483
        %v6495 = vsub.s32 %v6429, %v6483
        %v6496 = vsub.s32 %v6430, %v6483
        %v6497 = vsub.s32 %v6431, %v6483
        %v6498 = vsub.s32 %v6432, %v6483
        %v6499 = vsub.s32 %v6433, %v6483
        %v6500 = vsub.s32 %v6434, %v6483
        %v6501 = vsub.s32 %v6435, %v6483
        %v6502 = vsub.s32 %v6436, %v6483
        %v6503 = vsub.s32 %v6437, %v6483
        %v6504 = vsub.s32 %v6438, %v6483
        %v6505 = vsub.s32 %v6439, %v6483
        %v6506 = vsub.s32 %v6440, %v6483
        %v6507 = vsub.s32 %v6441, %v6483
        %v6508 = vsub.s32 %v6442, %v6483
        %v6509 = vsub.s32 %v6443, %v6483
        %v6510 = vsub.s32 %v6444, %v6483
        %v6511 = vsub.s32 %v6445, %v6483
        %v6512 = vsub.s32 %v6446, %v6483
        %v6513 = vsub.s32 %v6447, %v6483
        %v6514 = vsub.s32 %v6448, %v6483
        %v6515 = vsub.s32 %v6449, %v6483
        %v6516 = vsub.s32 %v6450, %v6483
        %v6517 = vsub.s32 %v6451, %v6483
        %v6518 = vsub.s32 %v6452, %v6483
        %v6519 = vsub.s32 %v6453, %v6483
        %v6520 = vsub.s32 %v6454, %v6483
        %v6521 = vsub.s32 %v6455, %v6483
        %v6522 = vsub.s32 %v6456, %v6483
        %v6523 = vsub.s32 %v6457, %v6483
        %v6524 = vsub.s32 %v6458, %v6483
        %v6525 = vsub.s32 %v6459, %v6483
        %v6526 = vsub.s32 %v6460, %v6483
        %v6527 = vsub.s32 %v6461, %v6483
        %v6528 = vsub.s32 %v6462, %v6483
        %v6529 = vsub.s32 %v6463, %v6483
        %v6530 = vsub.s32 %v6464, %v6483
        %v6531 = vsub.s32 %v6465, %v6483
        %v6532 = vsub.s32 %v6466, %v6483
        %v6533 = vsub.s32 %v6467, %v6483
        %v6534 = vsub.s32 %v6468, %v6483
        %v6535 = vsub.s32 %v6469, %v6483
        %v6536 = vsub.s32 %v6470, %v6483
        %v6537 = vsub.s32 %v6471, %v6483
        %v6538 = vsub.s32 %v6472, %v6483
        %v6539 = vsub.s32 %v6473, %v6483
        %v6540 = vsub.s32 %v6474, %v6483
        %v6541 = vsub.s32 %v6475, %v6483
        %v6542 = vsub.s32 %v6476, %v6483
        %v6543 = vsub.s32 %v6477, %v6483
        %v6544 = vsub.s32 %v6478, %v6483
        %v6545 = vsub.s32 %v6479, %v6483
        %v6546 = vsub.s32 %v6480, %v6483
        %vm6547 = vcmp.ge.s32.totalorder %v6484, 0
        %vm6548 = vcmp.ge.s32.totalorder %v6485, 0
        %vm6549 = vcmp.ge.s32.totalorder %v6486, 0
        %vm6550 = vcmp.ge.s32.totalorder %v6487, 0
        %vm6551 = vcmp.ge.s32.totalorder %v6488, 0
        %vm6552 = vcmp.ge.s32.totalorder %v6489, 0
        %vm6553 = vcmp.ge.s32.totalorder %v6490, 0
        %vm6554 = vcmp.ge.s32.totalorder %v6491, 0
        %vm6555 = vcmp.ge.s32.totalorder %v6492, 0
        %vm6556 = vcmp.ge.s32.totalorder %v6493, 0
        %vm6557 = vcmp.ge.s32.totalorder %v6494, 0
        %vm6558 = vcmp.ge.s32.totalorder %v6495, 0
        %vm6559 = vcmp.ge.s32.totalorder %v6496, 0
        %vm6560 = vcmp.ge.s32.totalorder %v6497, 0
        %vm6561 = vcmp.ge.s32.totalorder %v6498, 0
        %vm6562 = vcmp.ge.s32.totalorder %v6499, 0
        %vm6563 = vcmp.ge.s32.totalorder %v6500, 0
        %vm6564 = vcmp.ge.s32.totalorder %v6501, 0
        %vm6565 = vcmp.ge.s32.totalorder %v6502, 0
        %vm6566 = vcmp.ge.s32.totalorder %v6503, 0
        %vm6567 = vcmp.ge.s32.totalorder %v6504, 0
        %vm6568 = vcmp.ge.s32.totalorder %v6505, 0
        %vm6569 = vcmp.ge.s32.totalorder %v6506, 0
        %vm6570 = vcmp.ge.s32.totalorder %v6507, 0
        %vm6571 = vcmp.ge.s32.totalorder %v6508, 0
        %vm6572 = vcmp.ge.s32.totalorder %v6509, 0
        %vm6573 = vcmp.ge.s32.totalorder %v6510, 0
        %vm6574 = vcmp.ge.s32.totalorder %v6511, 0
        %vm6575 = vcmp.ge.s32.totalorder %v6512, 0
        %vm6576 = vcmp.ge.s32.totalorder %v6513, 0
        %vm6577 = vcmp.ge.s32.totalorder %v6514, 0
        %vm6578 = vcmp.ge.s32.totalorder %v6515, 0
        %vm6579 = vcmp.ge.s32.totalorder %v6516, 0
        %vm6580 = vcmp.ge.s32.totalorder %v6517, 0
        %vm6581 = vcmp.ge.s32.totalorder %v6518, 0
        %vm6582 = vcmp.ge.s32.totalorder %v6519, 0
        %vm6583 = vcmp.ge.s32.totalorder %v6520, 0
        %vm6584 = vcmp.ge.s32.totalorder %v6521, 0
        %vm6585 = vcmp.ge.s32.totalorder %v6522, 0
        %vm6586 = vcmp.ge.s32.totalorder %v6523, 0
        %vm6587 = vcmp.ge.s32.totalorder %v6524, 0
        %vm6588 = vcmp.ge.s32.totalorder %v6525, 0
        %vm6589 = vcmp.ge.s32.totalorder %v6526, 0
        %vm6590 = vcmp.ge.s32.totalorder %v6527, 0
        %vm6591 = vcmp.ge.s32.totalorder %v6528, 0
        %vm6592 = vcmp.ge.s32.totalorder %v6529, 0
        %vm6593 = vcmp.ge.s32.totalorder %v6530, 0
        %vm6594 = vcmp.ge.s32.totalorder %v6531, 0
        %vm6595 = vcmp.ge.s32.totalorder %v6532, 0
        %vm6596 = vcmp.ge.s32.totalorder %v6533, 0
        %vm6597 = vcmp.ge.s32.totalorder %v6534, 0
        %vm6598 = vcmp.ge.s32.totalorder %v6535, 0
        %vm6599 = vcmp.ge.s32.totalorder %v6536, 0
        %vm6600 = vcmp.ge.s32.totalorder %v6537, 0
        %vm6601 = vcmp.ge.s32.totalorder %v6538, 0
        %vm6602 = vcmp.ge.s32.totalorder %v6539, 0
        %vm6603 = vcmp.ge.s32.totalorder %v6540, 0
        %vm6604 = vcmp.ge.s32.totalorder %v6541, 0
        %vm6605 = vcmp.ge.s32.totalorder %v6542, 0
        %vm6606 = vcmp.ge.s32.totalorder %v6543, 0
        %vm6607 = vcmp.ge.s32.totalorder %v6544, 0
        %vm6608 = vcmp.ge.s32.totalorder %v6545, 0
        %vm6609 = vcmp.ge.s32.totalorder %v6546, 0
        %vm6610 = vcmp.lt.s32.totalorder %v6484, 52
        %vm6611 = vcmp.lt.s32.totalorder %v6485, 52
        %vm6612 = vcmp.lt.s32.totalorder %v6486, 52
        %vm6613 = vcmp.lt.s32.totalorder %v6487, 52
        %vm6614 = vcmp.lt.s32.totalorder %v6488, 52
        %vm6615 = vcmp.lt.s32.totalorder %v6489, 52
        %vm6616 = vcmp.lt.s32.totalorder %v6490, 52
        %vm6617 = vcmp.lt.s32.totalorder %v6491, 52
        %vm6618 = vcmp.lt.s32.totalorder %v6492, 52
        %vm6619 = vcmp.lt.s32.totalorder %v6493, 52
        %vm6620 = vcmp.lt.s32.totalorder %v6494, 52
        %vm6621 = vcmp.lt.s32.totalorder %v6495, 52
        %vm6622 = vcmp.lt.s32.totalorder %v6496, 52
        %vm6623 = vcmp.lt.s32.totalorder %v6497, 52
        %vm6624 = vcmp.lt.s32.totalorder %v6498, 52
        %vm6625 = vcmp.lt.s32.totalorder %v6499, 52
        %vm6626 = vcmp.lt.s32.totalorder %v6500, 52
        %vm6627 = vcmp.lt.s32.totalorder %v6501, 52
        %vm6628 = vcmp.lt.s32.totalorder %v6502, 52
        %vm6629 = vcmp.lt.s32.totalorder %v6503, 52
        %vm6630 = vcmp.lt.s32.totalorder %v6504, 52
        %vm6631 = vcmp.lt.s32.totalorder %v6505, 52
        %vm6632 = vcmp.lt.s32.totalorder %v6506, 52
        %vm6633 = vcmp.lt.s32.totalorder %v6507, 52
        %vm6634 = vcmp.lt.s32.totalorder %v6508, 52
        %vm6635 = vcmp.lt.s32.totalorder %v6509, 52
        %vm6636 = vcmp.lt.s32.totalorder %v6510, 52
        %vm6637 = vcmp.lt.s32.totalorder %v6511, 52
        %vm6638 = vcmp.lt.s32.totalorder %v6512, 52
        %vm6639 = vcmp.lt.s32.totalorder %v6513, 52
        %vm6640 = vcmp.lt.s32.totalorder %v6514, 52
        %vm6641 = vcmp.lt.s32.totalorder %v6515, 52
        %vm6642 = vcmp.lt.s32.totalorder %v6516, 52
        %vm6643 = vcmp.lt.s32.totalorder %v6517, 52
        %vm6644 = vcmp.lt.s32.totalorder %v6518, 52
        %vm6645 = vcmp.lt.s32.totalorder %v6519, 52
        %vm6646 = vcmp.lt.s32.totalorder %v6520, 52
        %vm6647 = vcmp.lt.s32.totalorder %v6521, 52
        %vm6648 = vcmp.lt.s32.totalorder %v6522, 52
        %vm6649 = vcmp.lt.s32.totalorder %v6523, 52
        %vm6650 = vcmp.lt.s32.totalorder %v6524, 52
        %vm6651 = vcmp.lt.s32.totalorder %v6525, 52
        %vm6652 = vcmp.lt.s32.totalorder %v6526, 52
        %vm6653 = vcmp.lt.s32.totalorder %v6527, 52
        %vm6654 = vcmp.lt.s32.totalorder %v6528, 52
        %vm6655 = vcmp.lt.s32.totalorder %v6529, 52
        %vm6656 = vcmp.lt.s32.totalorder %v6530, 52
        %vm6657 = vcmp.lt.s32.totalorder %v6531, 52
        %vm6658 = vcmp.lt.s32.totalorder %v6532, 52
        %vm6659 = vcmp.lt.s32.totalorder %v6533, 52
        %vm6660 = vcmp.lt.s32.totalorder %v6534, 52
        %vm6661 = vcmp.lt.s32.totalorder %v6535, 52
        %vm6662 = vcmp.lt.s32.totalorder %v6536, 52
        %vm6663 = vcmp.lt.s32.totalorder %v6537, 52
        %vm6664 = vcmp.lt.s32.totalorder %v6538, 52
        %vm6665 = vcmp.lt.s32.totalorder %v6539, 52
        %vm6666 = vcmp.lt.s32.totalorder %v6540, 52
        %vm6667 = vcmp.lt.s32.totalorder %v6541, 52
        %vm6668 = vcmp.lt.s32.totalorder %v6542, 52
        %vm6669 = vcmp.lt.s32.totalorder %v6543, 52
        %vm6670 = vcmp.lt.s32.totalorder %v6544, 52
        %vm6671 = vcmp.lt.s32.totalorder %v6545, 52
        %vm6672 = vcmp.lt.s32.totalorder %v6546, 52
        %vm6673 = vmand %vm6547, %vm6610
        %vm6674 = vmand %vm6548, %vm6611
        %vm6675 = vmand %vm6549, %vm6612
        %vm6676 = vmand %vm6550, %vm6613
        %vm6677 = vmand %vm6551, %vm6614
        %vm6678 = vmand %vm6552, %vm6615
        %vm6679 = vmand %vm6553, %vm6616
        %vm6680 = vmand %vm6554, %vm6617
        %vm6681 = vmand %vm6555, %vm6618
        %vm6682 = vmand %vm6556, %vm6619
        %vm6683 = vmand %vm6557, %vm6620
        %vm6684 = vmand %vm6558, %vm6621
        %vm6685 = vmand %vm6559, %vm6622
        %vm6686 = vmand %vm6560, %vm6623
        %vm6687 = vmand %vm6561, %vm6624
        %vm6688 = vmand %vm6562, %vm6625
        %vm6689 = vmand %vm6563, %vm6626
        %vm6690 = vmand %vm6564, %vm6627
        %vm6691 = vmand %vm6565, %vm6628
        %vm6692 = vmand %vm6566, %vm6629
        %vm6693 = vmand %vm6567, %vm6630
        %vm6694 = vmand %vm6568, %vm6631
        %vm6695 = vmand %vm6569, %vm6632
        %vm6696 = vmand %vm6570, %vm6633
        %vm6697 = vmand %vm6571, %vm6634
        %vm6698 = vmand %vm6572, %vm6635
        %vm6699 = vmand %vm6573, %vm6636
        %vm6700 = vmand %vm6574, %vm6637
        %vm6701 = vmand %vm6575, %vm6638
        %vm6702 = vmand %vm6576, %vm6639
        %vm6703 = vmand %vm6577, %vm6640
        %vm6704 = vmand %vm6578, %vm6641
        %vm6705 = vmand %vm6579, %vm6642
        %vm6706 = vmand %vm6580, %vm6643
        %vm6707 = vmand %vm6581, %vm6644
        %vm6708 = vmand %vm6582, %vm6645
        %vm6709 = vmand %vm6583, %vm6646
        %vm6710 = vmand %vm6584, %vm6647
        %vm6711 = vmand %vm6585, %vm6648
        %vm6712 = vmand %vm6586, %vm6649
        %vm6713 = vmand %vm6587, %vm6650
        %vm6714 = vmand %vm6588, %vm6651
        %vm6715 = vmand %vm6589, %vm6652
        %vm6716 = vmand %vm6590, %vm6653
        %vm6717 = vmand %vm6591, %vm6654
        %vm6718 = vmand %vm6592, %vm6655
        %vm6719 = vmand %vm6593, %vm6656
        %vm6720 = vmand %vm6594, %vm6657
        %vm6721 = vmand %vm6595, %vm6658
        %vm6722 = vmand %vm6596, %vm6659
        %vm6723 = vmand %vm6597, %vm6660
        %vm6724 = vmand %vm6598, %vm6661
        %vm6725 = vmand %vm6599, %vm6662
        %vm6726 = vmand %vm6600, %vm6663
        %vm6727 = vmand %vm6601, %vm6664
        %vm6728 = vmand %vm6602, %vm6665
        %vm6729 = vmand %vm6603, %vm6666
        %vm6730 = vmand %vm6604, %vm6667
        %vm6731 = vmand %vm6605, %vm6668
        %vm6732 = vmand %vm6606, %vm6669
        %vm6733 = vmand %vm6607, %vm6670
        %vm6734 = vmand %vm6608, %vm6671
        %vm6735 = vmand %vm6609, %vm6672
        %v6736 = vsel %vm6673, 1.0, 0.0
        %v6737 = vsel %vm6674, 1.0, 0.0
        %v6738 = vsel %vm6675, 1.0, 0.0
        %v6739 = vsel %vm6676, 1.0, 0.0
        %v6740 = vsel %vm6677, 1.0, 0.0
        %v6741 = vsel %vm6678, 1.0, 0.0
        %v6742 = vsel %vm6679, 1.0, 0.0
        %v6743 = vsel %vm6680, 1.0, 0.0
        %v6744 = vsel %vm6681, 1.0, 0.0
        %v6745 = vsel %vm6682, 1.0, 0.0
        %v6746 = vsel %vm6683, 1.0, 0.0
        %v6747 = vsel %vm6684, 1.0, 0.0
        %v6748 = vsel %vm6685, 1.0, 0.0
        %v6749 = vsel %vm6686, 1.0, 0.0
        %v6750 = vsel %vm6687, 1.0, 0.0
        %v6751 = vsel %vm6688, 1.0, 0.0
        %v6752 = vsel %vm6689, 1.0, 0.0
        %v6753 = vsel %vm6690, 1.0, 0.0
        %v6754 = vsel %vm6691, 1.0, 0.0
        %v6755 = vsel %vm6692, 1.0, 0.0
        %v6756 = vsel %vm6693, 1.0, 0.0
        %v6757 = vsel %vm6694, 1.0, 0.0
        %v6758 = vsel %vm6695, 1.0, 0.0
        %v6759 = vsel %vm6696, 1.0, 0.0
        %v6760 = vsel %vm6697, 1.0, 0.0
        %v6761 = vsel %vm6698, 1.0, 0.0
        %v6762 = vsel %vm6699, 1.0, 0.0
        %v6763 = vsel %vm6700, 1.0, 0.0
        %v6764 = vsel %vm6701, 1.0, 0.0
        %v6765 = vsel %vm6702, 1.0, 0.0
        %v6766 = vsel %vm6703, 1.0, 0.0
        %v6767 = vsel %vm6704, 1.0, 0.0
        %v6768 = vsel %vm6705, 1.0, 0.0
        %v6769 = vsel %vm6706, 1.0, 0.0
        %v6770 = vsel %vm6707, 1.0, 0.0
        %v6771 = vsel %vm6708, 1.0, 0.0
        %v6772 = vsel %vm6709, 1.0, 0.0
        %v6773 = vsel %vm6710, 1.0, 0.0
        %v6774 = vsel %vm6711, 1.0, 0.0
        %v6775 = vsel %vm6712, 1.0, 0.0
        %v6776 = vsel %vm6713, 1.0, 0.0
        %v6777 = vsel %vm6714, 1.0, 0.0
        %v6778 = vsel %vm6715, 1.0, 0.0
        %v6779 = vsel %vm6716, 1.0, 0.0
        %v6780 = vsel %vm6717, 1.0, 0.0
        %v6781 = vsel %vm6718, 1.0, 0.0
        %v6782 = vsel %vm6719, 1.0, 0.0
        %v6783 = vsel %vm6720, 1.0, 0.0
        %v6784 = vsel %vm6721, 1.0, 0.0
        %v6785 = vsel %vm6722, 1.0, 0.0
        %v6786 = vsel %vm6723, 1.0, 0.0
        %v6787 = vsel %vm6724, 1.0, 0.0
        %v6788 = vsel %vm6725, 1.0, 0.0
        %v6789 = vsel %vm6726, 1.0, 0.0
        %v6790 = vsel %vm6727, 1.0, 0.0
        %v6791 = vsel %vm6728, 1.0, 0.0
        %v6792 = vsel %vm6729, 1.0, 0.0
        %v6793 = vsel %vm6730, 1.0, 0.0
        %v6794 = vsel %vm6731, 1.0, 0.0
        %v6795 = vsel %vm6732, 1.0, 0.0
        %v6796 = vsel %vm6733, 1.0, 0.0
        %v6797 = vsel %vm6734, 1.0, 0.0
        %v6798 = vsel %vm6735, 1.0, 0.0
        %v6799 = vpack.c.bf16 %v6737, %v6736
        %v6800 = vpack.c.bf16 %v6739, %v6738
        %v6801 = vpack.c.bf16 %v6741, %v6740
        %v6802 = vpack.c.bf16 %v6743, %v6742
        %v6803 = vpack.c.bf16 %v6745, %v6744
        %v6804 = vpack.c.bf16 %v6747, %v6746
        %v6805 = vpack.c.bf16 %v6749, %v6748
        %v6806 = vpack.c.bf16 %v6751, %v6750
        %v6807 = vpack.c.bf16 %v6753, %v6752
        %v6808 = vpack.c.bf16 %v6755, %v6754
        %v6809 = vpack.c.bf16 %v6757, %v6756
        %v6810 = vpack.c.bf16 %v6759, %v6758
        %v6811 = vpack.c.bf16 %v6761, %v6760
        %v6812 = vpack.c.bf16 %v6763, %v6762
        %v6813 = vpack.c.bf16 %v6765, %v6764
        %v6814 = vpack.c.bf16 %v6767, %v6766
        %v6815 = vpack.c.bf16 %v6769, %v6768
        %v6816 = vpack.c.bf16 %v6771, %v6770
        %v6817 = vpack.c.bf16 %v6773, %v6772
        %v6818 = vpack.c.bf16 %v6775, %v6774
        %v6819 = vpack.c.bf16 %v6777, %v6776
        %v6820 = vpack.c.bf16 %v6779, %v6778
        %v6821 = vpack.c.bf16 %v6781, %v6780
        %v6822 = vpack.c.bf16 %v6783, %v6782
        %v6823 = vpack.c.bf16 %v6785, %v6784
        %v6824 = vpack.c.bf16 %v6787, %v6786
        %v6825 = vpack.c.bf16 %v6789, %v6788
        %v6826 = vpack.c.bf16 %v6791, %v6790
        %v6827 = vpack.c.bf16 %v6793, %v6792
        %v6828 = vpack.c.bf16 %v6795, %v6794
        %v6829 = vpack.c.bf16 %v6797, %v6796
        %v6830 = vpack.c.bf16 %v6798, %v6798
        %vm6831 = vcmask 949248
        %v6833 = vsel %vm6831, %v6388, 0
        %v6836 = vsel %vm6831, %v6392, 0
        %v6839 = vsel %vm6831, %v6396, 0
        %v6842 = vsel %vm6831, %v6400, 0
        %v6845 = vsel %vm6831, %v6404, 0
        %v6848 = vsel %vm6831, %v6408, 0
        %v6851 = vsel %vm6831, %v6412, 0
        %v6854 = vsel %vm6831, %v6416, 0
        %vm6856 = vcmask 1041408
        %v6858 = vsel %vm6856, %v6830, 0
        %6860 = vmatprep.subr.bf16.mxu0 0
        %6861 = vmatpush1.bf16.msra.mxu0 %v6799
        %6862 = vmatprep.subr.bf16.mxu0 0
        %6863 = vmatpush1.bf16.msra.mxu0 %v6800
        %6864 = vmatprep.subr.bf16.mxu0 0
        %6865 = vmatpush1.bf16.msra.mxu0 %v6801
        %6866 = vmatprep.subr.bf16.mxu0 0
        %6867 = vmatpush1.bf16.msra.mxu0 %v6802
        %6868 = vmatprep.subr.bf16.mxu0 0
        %6869 = vmatpush1.bf16.msra.mxu0 %v6803
        %6870 = vmatprep.subr.bf16.mxu0 0
        %6871 = vmatpush1.bf16.msra.mxu0 %v6804
        %6872 = vmatprep.subr.bf16.mxu0 0
        %6873 = vmatpush1.bf16.msra.mxu0 %v6805
        %6874 = vmatprep.subr.bf16.mxu0 0
        %6875 = vmatpush1.bf16.msra.mxu0 %v6806
        %6876 = vmatprep.subr.bf16.mxu0 0
        %6877 = vmatpush1.bf16.msra.mxu0 %v6807
        %6878 = vmatprep.subr.bf16.mxu0 0
        %6879 = vmatpush1.bf16.msra.mxu0 %v6808
        %6880 = vmatprep.subr.bf16.mxu0 0
        %6881 = vmatpush1.bf16.msra.mxu0 %v6809
        %6882 = vmatprep.subr.bf16.mxu0 0
        %6883 = vmatpush1.bf16.msra.mxu0 %v6810
        %6884 = vmatprep.subr.bf16.mxu0 0
        %6885 = vmatpush1.bf16.msra.mxu0 %v6811
        %6886 = vmatprep.subr.bf16.mxu0 0
        %6887 = vmatpush1.bf16.msra.mxu0 %v6812
        %6888 = vmatprep.subr.bf16.mxu0 0
        %6889 = vmatpush1.bf16.msra.mxu0 %v6813
        %6890 = vmatprep.subr.bf16.mxu0 0
        %6891 = vmatpush1.bf16.msra.mxu0 %v6814
        %6892 = vmatprep.mubr.bf16.mxu0 %v6386
        %6893 = vmatmul.mubr.bf16.gmra.mrb[0].mxu0 %v6385
        %v6894 = vpop.f32.mrb[0].mxu0
        %v6895 = vadd.f32 0.0, %v6894
        %v6896 = vpop.f32.mrb[0].mxu0
        %v6897 = vpop.f32.mrb[0].mxu0
        %v6898 = vadd.f32 0.0, %v6897
        %v6899 = vpop.f32.mrb[0].mxu0
        %6900 = vmatprep.mubr.bf16.mxu0 %v6390
        %6901 = vmatmul.mubr.bf16.gmra.mrb[0].mxu0 %v6389
        %v6902 = vpop.f32.mrb[0].mxu0
        %v6903 = vadd.f32 0.0, %v6902
        %v6904 = vpop.f32.mrb[0].mxu0
        %v6905 = vpop.f32.mrb[0].mxu0
        %v6906 = vadd.f32 0.0, %v6905
        %v6907 = vpop.f32.mrb[0].mxu0
        %6908 = vmatprep.mubr.bf16.mxu0 %v6394
        %6909 = vmatmul.mubr.bf16.gmra.mrb[0].mxu0 %v6393
        %v6910 = vpop.f32.mrb[0].mxu0
        %v6911 = vadd.f32 0.0, %v6910
        %v6912 = vpop.f32.mrb[0].mxu0
        %v6913 = vpop.f32.mrb[0].mxu0
        %v6914 = vadd.f32 0.0, %v6913
        %v6915 = vpop.f32.mrb[0].mxu0
        %6916 = vmatprep.mubr.bf16.mxu0 %v6398
        %6917 = vmatmul.mubr.bf16.gmra.mrb[0].mxu0 %v6397
        %v6918 = vpop.f32.mrb[0].mxu0
        %v6919 = vadd.f32 0.0, %v6918
        %v6920 = vpop.f32.mrb[0].mxu0
        %v6921 = vpop.f32.mrb[0].mxu0
        %v6922 = vadd.f32 0.0, %v6921
        %v6923 = vpop.f32.mrb[0].mxu0
        %6924 = vmatprep.mubr.bf16.mxu0 %v6402
        %6925 = vmatmul.mubr.bf16.gmra.mrb[0].mxu0 %v6401
        %v6926 = vpop.f32.mrb[0].mxu0
        %v6927 = vadd.f32 0.0, %v6926
        %v6928 = vpop.f32.mrb[0].mxu0
        %v6929 = vpop.f32.mrb[0].mxu0
        %v6930 = vadd.f32 0.0, %v6929
        %v6931 = vpop.f32.mrb[0].mxu0
        %6932 = vmatprep.mubr.bf16.mxu0 %v6406
        %6933 = vmatmul.mubr.bf16.gmra.mrb[0].mxu0 %v6405
        %v6934 = vpop.f32.mrb[0].mxu0
        %v6935 = vadd.f32 0.0, %v6934
        %v6936 = vpop.f32.mrb[0].mxu0
        %v6937 = vpop.f32.mrb[0].mxu0
        %v6938 = vadd.f32 0.0, %v6937
        %v6939 = vpop.f32.mrb[0].mxu0
        %6940 = vmatprep.mubr.bf16.mxu0 %v6410
        %6941 = vmatmul.mubr.bf16.gmra.mrb[0].mxu0 %v6409
        %v6942 = vpop.f32.mrb[0].mxu0
        %v6943 = vadd.f32 0.0, %v6942
        %v6944 = vpop.f32.mrb[0].mxu0
        %v6945 = vpop.f32.mrb[0].mxu0
        %v6946 = vadd.f32 0.0, %v6945
        %v6947 = vpop.f32.mrb[0].mxu0
        %6948 = vmatprep.mubr.bf16.mxu0 %v6414
        %6949 = vmatmul.mubr.bf16.gmra.mrb[0].mxu0 %v6413
        %v6950 = vpop.f32.mrb[0].mxu0
        %v6951 = vadd.f32 0.0, %v6950
        %v6952 = vpop.f32.mrb[0].mxu0
        %v6953 = vpop.f32.mrb[0].mxu0
        %v6954 = vadd.f32 0.0, %v6953
        %v6955 = vpop.f32.mrb[0].mxu0
        %6956 = vdwg.mxu0
        %6957 = vmatprep.subr.bf16.mxu0 0
        %6958 = vmatpush1.bf16.msra.mxu0 %v6815
        %6959 = vmatprep.subr.bf16.mxu0 0
        %6960 = vmatpush1.bf16.msra.mxu0 %v6816
        %6961 = vmatprep.subr.bf16.mxu0 0
        %6962 = vmatpush1.bf16.msra.mxu0 %v6817
        %6963 = vmatprep.subr.bf16.mxu0 0
        %6964 = vmatpush1.bf16.msra.mxu0 %v6818
        %6965 = vmatprep.subr.bf16.mxu0 0
        %6966 = vmatpush1.bf16.msra.mxu0 %v6819
        %6967 = vmatprep.subr.bf16.mxu0 0
        %6968 = vmatpush1.bf16.msra.mxu0 %v6820
        %6969 = vmatprep.subr.bf16.mxu0 0
        %6970 = vmatpush1.bf16.msra.mxu0 %v6821
        %6971 = vmatprep.subr.bf16.mxu0 0
        %6972 = vmatpush1.bf16.msra.mxu0 %v6822
        %6973 = vmatprep.subr.bf16.mxu0 0
        %6974 = vmatpush1.bf16.msra.mxu0 %v6823
        %6975 = vmatprep.subr.bf16.mxu0 0
        %6976 = vmatpush1.bf16.msra.mxu0 %v6824
        %6977 = vmatprep.subr.bf16.mxu0 0
        %6978 = vmatpush1.bf16.msra.mxu0 %v6825
        %6979 = vmatprep.subr.bf16.mxu0 0
        %6980 = vmatpush1.bf16.msra.mxu0 %v6826
        %6981 = vmatprep.subr.bf16.mxu0 0
        %6982 = vmatpush1.bf16.msra.mxu0 %v6827
        %6983 = vmatprep.subr.bf16.mxu0 0
        %6984 = vmatpush1.bf16.msra.mxu0 %v6828
        %6985 = vmatprep.subr.bf16.mxu0 0
        %6986 = vmatpush1.bf16.msra.mxu0 %v6829
        %6987 = vmatprep.subr.bf16.mxu0 0
        %6988 = vmatpush1.bf16.msra.mxu0 %v6858
        %6989 = vmatprep.mubr.bf16.mxu0 %v6833
        %6990 = vmatmul.mubr.bf16.gmra.mrb[0].mxu0 %v6387
        %v6991 = vpop.f32.mrb[0].mxu0
        %v6992 = vadd.f32 %v6895, %v6991
        %v6993 = vpop.f32.mrb[0].mxu0
        %v6994 = vpop.f32.mrb[0].mxu0
        %v6995 = vadd.f32 %v6898, %v6994
        %v6996 = vpop.f32.mrb[0].mxu0
        %6997 = vmatprep.mubr.bf16.mxu0 %v6836
        %6998 = vmatmul.mubr.bf16.gmra.mrb[0].mxu0 %v6391
        %v6999 = vpop.f32.mrb[0].mxu0
        %v7000 = vadd.f32 %v6903, %v6999
        %v7001 = vpop.f32.mrb[0].mxu0
        %v7002 = vpop.f32.mrb[0].mxu0
        %v7003 = vadd.f32 %v6906, %v7002
        %v7004 = vpop.f32.mrb[0].mxu0
        %7005 = vmatprep.mubr.bf16.mxu0 %v6839
        %7006 = vmatmul.mubr.bf16.gmra.mrb[0].mxu0 %v6395
        %v7007 = vpop.f32.mrb[0].mxu0
        %v7008 = vadd.f32 %v6911, %v7007
        %v7009 = vpop.f32.mrb[0].mxu0
        %v7010 = vpop.f32.mrb[0].mxu0
        %v7011 = vadd.f32 %v6914, %v7010
        %v7012 = vpop.f32.mrb[0].mxu0
        %7013 = vmatprep.mubr.bf16.mxu0 %v6842
        %7014 = vmatmul.mubr.bf16.gmra.mrb[0].mxu0 %v6399
        %v7015 = vpop.f32.mrb[0].mxu0
        %v7016 = vadd.f32 %v6919, %v7015
        %v7017 = vpop.f32.mrb[0].mxu0
        %v7018 = vpop.f32.mrb[0].mxu0
        %v7019 = vadd.f32 %v6922, %v7018
        %v7020 = vpop.f32.mrb[0].mxu0
        %7021 = vmatprep.mubr.bf16.mxu0 %v6845
        %7022 = vmatmul.mubr.bf16.gmra.mrb[0].mxu0 %v6403
        %v7023 = vpop.f32.mrb[0].mxu0
        %v7024 = vadd.f32 %v6927, %v7023
        %v7025 = vpop.f32.mrb[0].mxu0
        %v7026 = vpop.f32.mrb[0].mxu0
        %v7027 = vadd.f32 %v6930, %v7026
        %v7028 = vpop.f32.mrb[0].mxu0
        %7029 = vmatprep.mubr.bf16.mxu0 %v6848
        %7030 = vmatmul.mubr.bf16.gmra.mrb[0].mxu0 %v6407
        %v7031 = vpop.f32.mrb[0].mxu0
        %v7032 = vadd.f32 %v6935, %v7031
        %v7033 = vpop.f32.mrb[0].mxu0
        %v7034 = vpop.f32.mrb[0].mxu0
        %v7035 = vadd.f32 %v6938, %v7034
        %v7036 = vpop.f32.mrb[0].mxu0
        %7037 = vmatprep.mubr.bf16.mxu0 %v6851
        %7038 = vmatmul.mubr.bf16.gmra.mrb[0].mxu0 %v6411
        %v7039 = vpop.f32.mrb[0].mxu0
        %v7040 = vadd.f32 %v6943, %v7039
        %v7041 = vpop.f32.mrb[0].mxu0
        %v7042 = vpop.f32.mrb[0].mxu0
        %v7043 = vadd.f32 %v6946, %v7042
        %v7044 = vpop.f32.mrb[0].mxu0
        %7045 = vmatprep.mubr.bf16.mxu0 %v6854
        %7046 = vmatmul.mubr.bf16.gmra.mrb[0].mxu0 %v6415
        %v7047 = vpop.f32.mrb[0].mxu0
        %v7048 = vadd.f32 %v6951, %v7047
        %v7049 = vpop.f32.mrb[0].mxu0
        %v7050 = vpop.f32.mrb[0].mxu0
        %v7051 = vadd.f32 %v6954, %v7050
        %v7052 = vpop.f32.mrb[0].mxu0
        %7053 = vdwg.mxu0
        %v7054 = vld [vmem:[%s9] sm:$0xff]
        %v7055 = vld [vmem:[%s10] sm:$0xff]
        %7057 = vset.pattern.permute.xlu0 0
        %7058 = vperm.xlu0 %7057, %v7055
        %v7059 = vpop.permute.xlu0 %7058
        %7061 = vmatprep.subr.mxu0 0.0
        %7062 = vmatpush1.msra.mxu0 %v6992
        %7063 = vmatprep.subr.mxu0 0.0
        %7064 = vmatpush1.msra.mxu0 %v6995
        %7065 = vmatprep.subr.mxu0 0.0
        %7066 = vmatpush1.msra.mxu0 %v7000
        %7067 = vmatprep.subr.mxu0 0.0
        %7068 = vmatpush1.msra.mxu0 %v7003
        %7069 = vmatprep.subr.mxu0 0.0
        %7070 = vmatpush1.msra.mxu0 %v7008
        %7071 = vmatprep.subr.mxu0 0.0
        %7072 = vmatpush1.msra.mxu0 %v7011
        %7073 = vmatprep.subr.mxu0 0.0
        %7074 = vmatpush1.msra.mxu0 %v7016
        %7075 = vmatprep.subr.mxu0 0.0
        %7076 = vmatpush1.msra.mxu0 %v7019
        %7077 = vmatprep.subr.mxu0 0.0
        %7078 = vmatpush1.msra.mxu0 %v7024
        %7079 = vmatprep.subr.mxu0 0.0
        %7080 = vmatpush1.msra.mxu0 %v7027
        %7081 = vmatprep.subr.mxu0 0.0
        %7082 = vmatpush1.msra.mxu0 %v7032
        %7083 = vmatprep.subr.mxu0 0.0
        %7084 = vmatpush1.msra.mxu0 %v7035
        %7085 = vmatprep.subr.mxu0 0.0
        %7086 = vmatpush1.msra.mxu0 %v7040
        %7087 = vmatprep.subr.mxu0 0.0
        %7088 = vmatpush1.msra.mxu0 %v7043
        %7089 = vmatprep.subr.mxu0 0.0
        %7090 = vmatpush1.msra.mxu0 %v7048
        %7091 = vmatprep.subr.mxu0 0.0
        %7092 = vmatpush1.msra.mxu0 %v7051
        %7093 = vmatprep.subr.mxu0 0.0
        %7094 = vmatpush1.msra.mxu0 0.0
        %7095 = vmatprep.subr.mxu0 0.0
        %7096 = vmatpush1.msra.mxu0 0.0
        %7097 = vmatprep.subr.mxu0 0.0
        %7098 = vmatpush1.msra.mxu0 0.0
        %7099 = vmatprep.subr.mxu0 0.0
        %7100 = vmatpush1.msra.mxu0 0.0
        %7101 = vmatprep.subr.mxu0 0.0
        %7102 = vmatpush1.msra.mxu0 0.0
        %7103 = vmatprep.subr.mxu0 0.0
        %7104 = vmatpush1.msra.mxu0 0.0
        %7105 = vmatprep.subr.mxu0 0.0
        %7106 = vmatpush1.msra.mxu0 0.0
        %7107 = vmatprep.subr.mxu0 0.0
        %7108 = vmatpush1.msra.mxu0 0.0
        %7109 = vmatprep.subr.mxu0 0.0
        %7110 = vmatpush1.msra.mxu0 0.0
        %7111 = vmatprep.subr.mxu0 0.0
        %7112 = vmatpush1.msra.mxu0 0.0
        %7113 = vmatprep.subr.mxu0 0.0
        %7114 = vmatpush1.msra.mxu0 0.0
        %7115 = vmatprep.subr.mxu0 0.0
        %7116 = vmatpush1.msra.mxu0 0.0
        %7117 = vmatprep.subr.mxu0 0.0
        %7118 = vmatpush1.msra.mxu0 0.0
        %7119 = vmatprep.subr.mxu0 0.0
        %7120 = vmatpush1.msra.mxu0 0.0
        %7121 = vmatprep.subr.mxu0 0.0
        %7122 = vmatpush1.msra.mxu0 0.0
        %7123 = vmatprep.subr.mxu0 0.0
        %7124 = vmatpush1.msra.mxu0 0.0
        %7125 = vmatprep.mubr.f32.mxu0 0.0
        %7126 = vmatmul.mubr.f32.gmra.mrb[0].mxu0 %v7054
        %v7127 = vpop.f32.mrb[0].mxu0
        %v7128 = vadd.f32 %v7059, %v7127
        %v7129 = vpop.f32.mrb[0].mxu0
        %7130 = vdwg.mxu0
        %vm7131 = vcmask 64512
        %7132 = vst.msk [vmem:[%s411] sm:$0xff] %vm7131, %v7128
        %p7133 = scmp.lt.s32.totalorder %s22, 1
        %s7134 = scalar_select %p7133, %s22, 1
        %s7135 = smul.addr %s7134, 8
        %s7136 = scalar_lea.vmem %s11, %s7135
        // Predicated region
        $region88: #{audio_cnn_pool.1} parent=82 // pred_check
          %p7137 = pneg %p276
        $region89: #{audio_cnn_pool.1} parent=82 // pred_check_branch
          %7139 = sbr.rel (%p7137) target = $region91
        $region90: #{audio_cnn_pool.1} parent=82 // pred_region
          _
        $region91: #{audio_cnn_pool.1} parent=82 // pred_fallthru
          _
      $region83: #{audio_cnn_pool.1} parent=5 // pred_fallthru
        _
      %p7140 = scmp.le.s32.totalorder 2, %s17
      // Predicated region
      $region92: #{audio_cnn_pool.1} parent=5 // pred_check
        %p7141 = pneg %p7140
      $region93: #{audio_cnn_pool.1} parent=5 // pred_check_branch
        %7143 = sbr.rel (%p7141) target = $region95
      $region94: #{audio_cnn_pool.1} parent=5 // pred_region
        %s7144 = ssub.s32 %s17, 2
        // Predicated region
        $region96: #{audio_cnn_pool.1} parent=94 // pred_check
          %p7145 = pneg %p282
        $region97: #{audio_cnn_pool.1} parent=94 // pred_check_branch
          %7147 = sbr.rel (%p7145) target = $region99
        $region98: #{audio_cnn_pool.1} parent=94 // pred_region
          %p7148 = scmp.lt.s32.totalorder %s23, 1
          %s7149 = scalar_select %p7148, %s23, 1
          %s7150 = smul.addr %s7149, 8
          %s7151 = scalar_lea.vmem %s11, %s7150
        $region99: #{audio_cnn_pool.1} parent=94 // pred_fallthru
          _
      $region95: #{audio_cnn_pool.1} parent=5 // pred_fallthru
        _
    $region6: #{audio_cnn_pool.1} parent=1 // loop_footer
      %s21 = sadd.s32 1, %s17
    $region7: #{audio_cnn_pool.1} parent=1 // loop_footer_branch
      %16 = sbr.rel target = $region3
    $region8: #{audio_cnn_pool.1} parent=1 // loop_exit
      _

</llo_original>
